<compile_context>
chip_gen: v5e
topology: v5e:2x2
jax: 0.10.0
libtpu: 0.0.40
codegen_flags: <defaults>
</compile_context>

<pallas_src>
import functools
import math

import numpy as np
import jax
import jax.numpy as jnp
from jax.experimental import pallas as pl
from jax.experimental.pallas import tpu as pltpu

LANE = 128
Q_CHUNK = 256          # query-row chunk for attention (bounds the (tq, T) scores)


# ---------------------------------------------------------------------------
# compiler params / feature probes
# ---------------------------------------------------------------------------
@functools.lru_cache(maxsize=None)
def _compiler_params():
    # Per-generation scoped-VMEM limit: ~32 MiB on v7x (64 MiB physical VMEM),
    # 48 MiB on v5e/v6e (128 MiB physical).
    try:
        cap = pltpu.get_tpu_info().vmem_capacity_bytes
        vmem_limit = min(cap // 2, 48 * 1024 * 1024)
    except Exception:
        vmem_limit = 48 * 1024 * 1024
    return pltpu.CompilerParams(
        dimension_semantics=("parallel",),
        vmem_limit_bytes=vmem_limit,
    )


@functools.lru_cache(maxsize=None)
def _buffered_params_supported():
    """Probe pl.Buffered(1) single-buffering for replicated parameter blocks.

    Replicated parameters (index_map constant across the grid) do not need
    double buffering; Buffered(1) halves their VMEM footprint.  Probed once so
    the script still runs cleanly on JAX versions where pipeline_mode /
    Buffered(1) is not supported by the TPU pipeliner.
    """
    try:
        with jax.ensure_compile_time_eval():
            def _probe(x_ref, w_ref, o_ref):
                o_ref[...] = x_ref[...] + w_ref[...]

            x = jnp.zeros((8, 128), jnp.float32)
            out = pl.pallas_call(
                _probe,
                out_shape=jax.ShapeDtypeStruct((8, 128), jnp.float32),
                grid=(2,),
                in_specs=[
                    pl.BlockSpec((8, 128), lambda i: (0, 0)),
                    pl.BlockSpec((8, 128), lambda i: (0, 0),
                                 pipeline_mode=pl.Buffered(1)),
                ],
                out_specs=pl.BlockSpec((8, 128), lambda i: (0, 0)),
            )(x, x)
            jax.block_until_ready(out)
        return True
    except Exception:
        return False


# ---------------------------------------------------------------------------
# in-kernel helpers
# ---------------------------------------------------------------------------
def _layer_norm(x, g, b, eps=1e-5):
    # Single-pass statistics: var = E[x^2] - mu^2 (halves the cross-lane reductions).
    mu = jnp.mean(x, axis=-1, keepdims=True)
    msq = jnp.mean(x * x, axis=-1, keepdims=True)
    var = msq - mu * mu
    return (x - mu) * jax.lax.rsqrt(var + eps) * g + b


def _add_layer_norm(res, y, g, b, eps=1e-5):
    # Residual add fused into the same (single) statistics pass.
    s = res + y
    mu = jnp.mean(s, axis=-1, keepdims=True)
    msq = jnp.mean(s * s, axis=-1, keepdims=True)
    var = msq - mu * mu
    return (s - mu) * jax.lax.rsqrt(var + eps) * g + b


def _shift_rows(x, direction):
    """Shift rows (time axis) by one with zero padding.
    direction=+1: row t <- x[t-1]; direction=-1: row t <- x[t+1]."""
    zero = jnp.zeros((1, x.shape[1]), x.dtype)
    if direction > 0:
        return jnp.concatenate([zero, x[:-1]], axis=0)
    return jnp.concatenate([x[1:], zero], axis=0)


def _conv1d_same(x_bf16, w, b):
    # x_bf16: (T, Cin) bf16.  w: (3*Cin, Cout) bf16 (fused tap-major).  b: (1, Cout) f32.
    # Kernel-size-3 'same' conv as a single K=3*Cin matmul; taps are built in bf16
    # (half the tap-buffer VMEM and vld/vst pressure vs building them in f32).
    xs = jnp.concatenate(
        [_shift_rows(x_bf16, +1), x_bf16, _shift_rows(x_bf16, -1)], axis=-1)
    return jnp.dot(xs, w, preferred_element_type=jnp.float32) + b


def _mha_into_scratch(x_bf16, wq, bq, wk, bk, wv, bv, wo, bo, n_head, q_chunk,
                      attn_ref):
    """Multi-head self attention.  Heads are written straight into the (T, D)
    f32 VMEM scratch `attn_ref` (no lane concat); query rows are processed in
    chunks of `q_chunk` so the per-head score matrix is (tq, T); the softmax
    normalization is applied after the PV matmul (a (tq, dh) multiply).
    1/sqrt(d_head) is folded into wq/bq at parameter prep."""
    # TODO(synk): pack 2-4 heads per score matmul to fill the 256-wide MXU K/N dims
    # on v6e/v7x, and switch to a flash-style KV grid axis for very long decoder
    # sequences (second "parallel" axis for v7x megacore when B is small).
    T, D = x_bf16.shape
    dh = D // n_head
    q = jnp.dot(x_bf16, wq, preferred_element_type=jnp.float32) + bq
    k = jnp.dot(x_bf16, wk, preferred_element_type=jnp.float32) + bk
    v = jnp.dot(x_bf16, wv, preferred_element_type=jnp.float32) + bv
    kb = k.astype(jnp.bfloat16)
    vb = v.astype(jnp.bfloat16)

    n_chunks = -(-T // q_chunk)                    # static Python int
    for c in range(n_chunks):
        s0 = c * q_chunk
        s1 = min(T, s0 + q_chunk)
        for h in range(n_head):                    # static unroll over heads
            sl = slice(h * dh, (h + 1) * dh)
            qh = q[s0:s1, sl].astype(jnp.bfloat16)
            # (tq, T) scores, f32 accumulation on the MXU.
            s = jnp.einsum('td,sd->ts', qh, kb[:, sl],
                           preferred_element_type=jnp.float32)
            s = s - jnp.max(s, axis=-1, keepdims=True)
            p = jnp.exp(s)                         # f32 exp; f32 row sums
            r = pl.reciprocal(jnp.sum(p, axis=-1, keepdims=True), approx=True)
            hv = jnp.dot(p.astype(jnp.bfloat16), vb[:, sl],
                         preferred_element_type=jnp.float32)
            attn_ref[s0:s1, sl] = hv * r           # normalize after PV (tq, dh)

    # Single fused output projection (contraction K = D) reading the scratch.
    ctx = attn_ref[...].astype(jnp.bfloat16)
    return jnp.dot(ctx, wo, preferred_element_type=jnp.float32) + bo


# ---------------------------------------------------------------------------
# Pallas kernels
# ---------------------------------------------------------------------------
def _fft_block_kernel(n_head, q_chunk, has_proj, x_ref, wq_ref, bq_ref, wk_ref,
                      bk_ref, wv_ref, bv_ref, wo_ref, bo_ref, g1_ref, be1_ref,
                      cw1_ref, cb1_ref, cw2_ref, cb2_ref, g2_ref, be2_ref, *rest):
    if has_proj:
        pw_ref, pb_ref, o_ref, attn_ref = rest
    else:
        o_ref, attn_ref = rest

    x = x_ref[0]                                   # (T, D) bf16 activation
    attn = _mha_into_scratch(x, wq_ref[...], bq_ref[...], wk_ref[...], bk_ref[...],
                             wv_ref[...], bv_ref[...], wo_ref[...], bo_ref[...],
                             n_head, q_chunk, attn_ref)
    # residual + LayerNorm in f32 (dropout == identity at inference)
    x1 = _add_layer_norm(x.astype(jnp.float32), attn, g1_ref[...], be1_ref[...])
    x1b = x1.astype(jnp.bfloat16)
    h1 = jnp.maximum(_conv1d_same(x1b, cw1_ref[...], cb1_ref[...]), 0.0)
    ff = _conv1d_same(h1.astype(jnp.bfloat16), cw2_ref[...], cb2_ref[...])
    y = _add_layer_norm(x1, ff, g2_ref[...], be2_ref[...])
    if has_proj:
        # fused (lane-padded) mel projection: one fewer HBM round-trip and a
        # full-width 128-lane store.
        o_ref[0] = (jnp.dot(y.astype(pw_ref.dtype), pw_ref[...],
                            preferred_element_type=jnp.float32)
                    + pb_ref[...]).astype(o_ref.dtype)
    else:
        o_ref[0] = y.astype(o_ref.dtype)           # bf16 inter-block activation


def _duration_kernel(x_ref, cw1_ref, cb1_ref, g1_ref, be1_ref,
                     cw2_ref, cb2_ref, g2_ref, be2_ref, lw_ref, lb_ref, o_ref):
    x = x_ref[0]                                   # (T, D) bf16
    h = jnp.maximum(_conv1d_same(x, cw1_ref[...], cb1_ref[...]), 0.0)
    h = _layer_norm(h, g1_ref[...], be1_ref[...])
    h = jnp.maximum(_conv1d_same(h.astype(jnp.bfloat16), cw2_ref[...], cb2_ref[...]), 0.0)
    h = _layer_norm(h, g2_ref[...], be2_ref[...])
    # lw is (D, 128) with the real weights in column 0 and zeros elsewhere, so the
    # output store is a full unmasked vst instead of a width-1 masked store.
    o_ref[0] = jnp.dot(h.astype(lw_ref.dtype), lw_ref[...],
                       preferred_element_type=jnp.float32) + lb_ref[...]


# ---------------------------------------------------------------------------
# pallas_call wrappers
# ---------------------------------------------------------------------------
def _param_spec(shape):
    # Replicated parameter block (same block for every grid step).  Request
    # single buffering when the runtime supports it (index never changes, so
    # double-buffering these only wastes VMEM).
    rank = len(shape)
    idx = lambda b, _r=rank: (0,) * _r
    if _buffered_params_supported():
        return pl.BlockSpec(shape, idx, pipeline_mode=pl.Buffered(1))
    return pl.BlockSpec(shape, idx)


def _seq_spec(T, D):
    return pl.BlockSpec((1, T, D), lambda b: (b, 0, 0))


def fft_block(x, p, n_head, proj=None):
    """One FeedForwardTransformer block.  x: (B, T, D) bf16.
    Returns bf16 (B, T, D), or f32 (B, T, d_proj) when the lane-padded mel
    projection `proj=(w, b)` is fused in."""
    B, T, D = x.shape
    q_chunk = min(T, Q_CHUNK)
    args = [p['wq'], p['bq'], p['wk'], p['bk'], p['wv'], p['bv'], p['wo'], p['bo'],
            p['ln1_g'], p['ln1_b'], p['conv1_w'], p['conv1_b'],
            p['conv2_w'], p['conv2_b'], p['ln2_g'], p['ln2_b']]
    if proj is not None:
        pw, pb = proj
        args += [pw, pb]
        d_out, out_dtype = pw.shape[1], jnp.float32
    else:
        d_out, out_dtype = D, jnp.bfloat16
    return pl.pallas_call(
        functools.partial(_fft_block_kernel, n_head, q_chunk, proj is not None),
        out_shape=jax.ShapeDtypeStruct((B, T, d_out), out_dtype),
        grid=(B,),
        in_specs=[_seq_spec(T, D)] + [_param_spec(a.shape) for a in args],
        out_specs=_seq_spec(T, d_out),
        scratch_shapes=[pltpu.VMEM((T, D), jnp.float32)],   # per-head attn scratch
        compiler_params=_compiler_params(),
    )(x, *args)


def duration_predictor(x, p):
    B, T, D = x.shape
    args = [p['conv1_w'], p['conv1_b'], p['ln1_g'], p['ln1_b'],
            p['conv2_w'], p['conv2_b'], p['ln2_g'], p['ln2_b'],
            p['lin_w'], p['lin_b']]
    out = pl.pallas_call(
        _duration_kernel,
        out_shape=jax.ShapeDtypeStruct((B, T, LANE), jnp.float32),
        grid=(B,),
        in_specs=[_seq_spec(T, D)] + [_param_spec(a.shape) for a in args],
        out_specs=_seq_spec(T, LANE),
        compiler_params=_compiler_params(),
    )(x, *args)
    return out[..., 0]                            # (B, T)


# ---------------------------------------------------------------------------
# model glue (plain JAX)
# ---------------------------------------------------------------------------
@functools.lru_cache(maxsize=None)
def _pos_encoding_np(T, D):
    pos = np.arange(T, dtype=np.float32)[:, None]
    den = np.exp(-np.arange(0, D, 2, dtype=np.float32) * math.log(10000.0) / D)
    pe = np.zeros((T, D), np.float32)
    pe[:, 0::2] = np.sin(pos * den)
    pe[:, 1::2] = np.cos(pos * den)
    return pe


def sinusoidal_pos_encoding(T, D):
    return jnp.asarray(_pos_encoding_np(T, D))


def init_params(key, d_model, n_tokens, hidden_size, duration_hidden,
                n_encoders, n_decoders, melspec_size, kernel_size, n_head):
    assert kernel_size == 3
    # NOTE: for real configs keep d_model / hidden_size multiples of 128 (lane width).

    def nxt():
        nonlocal key
        key, sub = jax.random.split(key)
        return sub

    def dense(din, dout, scale=1.0):
        w = jax.random.normal(nxt(), (din, dout), jnp.float32) * (0.05 * scale)
        return w.astype(jnp.bfloat16)             # bf16 weights for the MXU path
        # TODO(synk): fp8 weight storage on v7x if accuracy allows.

    def bias(d):
        return jnp.zeros((1, d), jnp.float32)

    def conv(cin, cout):
        # Fused tap-major Conv1d weight (3*cin, cout).  A torch weight of shape
        # (cout, cin, 3) converts via w.permute(2, 1, 0).reshape(3*cin, cout).
        w = jax.random.normal(nxt(), (kernel_size * cin, cout), jnp.float32) * 0.05
        return w.astype(jnp.bfloat16)

    def ones(d):
        return jnp.ones((1, d), jnp.float32)

    qk_scale = 1.0 / math.sqrt(d_model // n_head)

    def fft_layer():
        return dict(
            # 1/sqrt(d_head) folded into the query projection (also fold into b_q
            # when porting trained torch weights; here b_q is zero anyway).
            wq=dense(d_model, d_model, scale=qk_scale), bq=bias(d_model),
            wk=dense(d_model, d_model), bk=bias(d_model),
            wv=dense(d_model, d_model), bv=bias(d_model),
            wo=dense(d_model, d_model), bo=bias(d_model),
            ln1_g=ones(d_model), ln1_b=bias(d_model),
            conv1_w=conv(d_model, hidden_size), conv1_b=bias(hidden_size),
            conv2_w=conv(hidden_size, d_model), conv2_b=bias(d_model),
            ln2_g=ones(d_model), ln2_b=bias(d_model),
        )

    emb = jax.random.normal(nxt(), (n_tokens, d_model), jnp.float32) * 0.05
    emb = emb.at[0].set(0.0)                      # padding_idx = 0

    # Duration predictor Linear(duration_hidden -> 1), lane-padded to 128.
    lin_w = jax.random.normal(nxt(), (duration_hidden, 1), jnp.float32) * 0.05
    lin_w_pad = jnp.pad(lin_w, ((0, 0), (0, LANE - 1))).astype(jnp.bfloat16)
    lin_b_pad = jnp.zeros((1, LANE), jnp.float32)

    # Mel projection Linear(d_model -> melspec_size), lane-padded to a multiple of 128.
    mel_pad = (-melspec_size) % LANE
    mel_w = jax.random.normal(nxt(), (d_model, melspec_size), jnp.float32) * 0.05
    mel_w_pad = jnp.pad(mel_w, ((0, 0), (0, mel_pad))).astype(jnp.bfloat16)
    mel_b_pad = jnp.zeros((1, melspec_size + mel_pad), jnp.float32)

    return dict(
        embedding=emb,
        encoder_layers=[fft_layer() for _ in range(n_encoders)],
        decoder_layers=[fft_layer() for _ in range(n_decoders)],
        duration_predictor=dict(
            conv1_w=conv(d_model, duration_hidden), conv1_b=bias(duration_hidden),
            ln1_g=ones(duration_hidden), ln1_b=bias(duration_hidden),
            conv2_w=conv(duration_hidden, duration_hidden), conv2_b=bias(duration_hidden),
            ln2_g=ones(duration_hidden), ln2_b=bias(duration_hidden),
            lin_w=lin_w_pad, lin_b=lin_b_pad,
        ),
        mel_w_pad=mel_w_pad,
        mel_b_pad=mel_b_pad,
    )


def fastspeech_forward(params, tokens, tokens_lengths, durations, n_head,
                       alpha=1.0, melspec_size=80, max_mel_len=None):
    """FastSpeech forward.  With a static `max_mel_len` the whole function is
    jax.jit-able end-to-end (no device->host sync between encoder and decoder);
    mel rows beyond the true output lengths are padding."""
    B, T = tokens.shape
    D = params['embedding'].shape[1]

    x = jnp.take(params['embedding'], tokens, axis=0)
    x = (x + sinusoidal_pos_encoding(T, D)[None]).astype(jnp.bfloat16)
    for lp in params['encoder_layers']:
        x = fft_block(x, lp, n_head)
    encoder_states = x                             # (B, T, D) bf16

    log_dur = duration_predictor(encoder_states, params['duration_predictor'])  # (B, T) f32

    if durations is None:
        dur_pred = jnp.exp(log_dur) - 1.0
        dur = jnp.maximum(dur_pred * alpha, 1.0).astype(jnp.int32)
    else:
        dur = (durations.astype(jnp.float32) * alpha).astype(jnp.int32)
    valid = jnp.arange(T)[None, :] < tokens_lengths[:, None]
    dur = jnp.where(valid, dur, 0)                 # matches seq[:seq_len] / d[:seq_len]

    # Length regulator (repeat_interleave + pad_sequence) as an on-device
    # cumsum/searchsorted gather with a static padded length.
    cum = jnp.cumsum(dur, axis=1)                  # (B, T)
    out_lens = cum[:, -1]                          # (B,)
    if max_mel_len is None:
        # Fallback: reference-exact padded length via a host sync (not jittable).
        T_mel = max(int(jax.device_get(jnp.max(out_lens))), 1)
    else:
        T_mel = int(max_mel_len)
    # TODO(synk): drive the gather with a Pallas pl.Element row-gather via
    # PrefetchScalarGridSpec to avoid materializing `gathered` in HBM.
    pos = jnp.arange(T_mel)
    src = jax.vmap(lambda c: jnp.searchsorted(c, pos, side='right'))(cum)  # (B, T_mel)
    src = jnp.minimum(src, T - 1)
    gathered = jnp.take_along_axis(encoder_states, src[:, :, None], axis=1)
    mask3 = (pos[None, :] < out_lens[:, None])[:, :, None]
    y = jnp.where(mask3, gathered, jnp.zeros_like(gathered))

    y = (y.astype(jnp.float32) + sinusoidal_pos_encoding(T_mel, D)[None]).astype(jnp.bfloat16)
    dec = params['decoder_layers']
    for lp in dec[:-1]:
        y = fft_block(y, lp, n_head)
    # The mel projection (lane-padded to 128) is fused into the last decoder block.
    mel = fft_block(y, dec[-1], n_head,
                    proj=(params['mel_w_pad'], params['mel_b_pad']))
    mel = mel[..., :melspec_size]                  # drop lane padding
    return mel, log_dur


if __name__ == "__main__":
    d_model, n_head, n_tokens = 32, 2, 16
    hidden_size, duration_hidden = 64, 32
    n_encoders, n_decoders = 1, 1
    melspec_size, kernel_size = 80, 3
    B, T = 2, 8
    max_dur = 3
    max_mel_len = T * max_dur                      # static cap -> fully jittable

    key = jax.random.PRNGKey(0)
    pkey, tkey, dkey = jax.random.split(key, 3)

    params = init_params(pkey, d_model, n_tokens, hidden_size, duration_hidden,
                         n_encoders, n_decoders, melspec_size, kernel_size, n_head)

    tokens = jax.random.randint(tkey, (B, T), 1, n_tokens)
    tokens_lengths = jnp.array([T, T - 2], jnp.int32)
    mask = jnp.arange(T)[None, :] < tokens_lengths[:, None]
    tokens = jnp.where(mask, tokens, 0).astype(jnp.int32)
    durations = jax.random.randint(dkey, (B, T), 1, max_dur + 1).astype(jnp.int32)

    # Warm the Buffered(1) feature probe eagerly (outside of jit tracing).
    _buffered_params_supported()

    fwd = jax.jit(functools.partial(
        fastspeech_forward, n_head=n_head, alpha=1.0,
        melspec_size=melspec_size, max_mel_len=max_mel_len))

    mel, log_dur = fwd(params, tokens, tokens_lengths, durations)
    jax.block_until_ready(mel)
    jax.block_until_ready(log_dur)
    assert mel.ndim == 3 and mel.shape[0] == B and mel.shape[2] == melspec_size
    assert mel.shape[1] == max_mel_len
    assert log_dur.shape == (B, T)
    print("KERNEL_OK")
</pallas_src>

<mosaic_0001>
module attributes {stable_mosaic.version = 11 : i64} {
  func.func @_probe(%arg0: i32, %arg1: memref<8x128xf32, #tpu.memory_space<vmem>>, %arg2: memref<8x128xf32, #tpu.memory_space<vmem>>, %arg3: memref<8x128xf32, #tpu.memory_space<vmem>>) attributes {dimension_semantics = [#tpu.dimension_semantics<arbitrary>], iteration_bounds = array<i64: 2>, scalar_prefetch = 0 : i64, scratch_operands = 0 : i64, tpu.core_type = #tpu.core_type<tc>, window_params = [{pipeline_mode = #tpu.pipeline_mode<synchronous>, transform_indices = @transform_0, window_bounds = array<i64: 8, 128>}, {pipeline_mode = #tpu.pipeline_mode<synchronous>, transform_indices = @transform_1, window_bounds = array<i64: 8, 128>}, {pipeline_mode = #tpu.pipeline_mode<synchronous>, transform_indices = @transform_2, window_bounds = array<i64: 8, 128>}]} {
    %c0 = arith.constant 0 : index
    %c0_0 = arith.constant 0 : index
    %0 = vector.load %arg1[%c0, %c0_0] : memref<8x128xf32, #tpu.memory_space<vmem>>, vector<8x128xf32>
    %c0_1 = arith.constant 0 : index
    %c0_2 = arith.constant 0 : index
    %1 = vector.load %arg2[%c0_1, %c0_2] : memref<8x128xf32, #tpu.memory_space<vmem>>, vector<8x128xf32>
    %2 = arith.addf %0, %1 : vector<8x128xf32>
    %c0_3 = arith.constant 0 : index
    %c0_4 = arith.constant 0 : index
    %3 = vector.load %arg3[%c0_3, %c0_4] : memref<8x128xf32, #tpu.memory_space<vmem>>, vector<8x128xf32>
    tpu.vector_store %arg3[%c0_3, %c0_4], %2 {strides = array<i32>} : memref<8x128xf32, #tpu.memory_space<vmem>>, vector<8x128xf32>,
    return
  }
  func.func @transform_0(%arg0: i32) -> (i32, i32) {
    %c0_i32 = arith.constant 0 : i32
    %c0_i32_0 = arith.constant 0 : i32
    %c0_i32_1 = arith.constant 0 : i32
    return %c0_i32, %c0_i32_0 : i32, i32
  }
  func.func @transform_1(%arg0: i32) -> (i32, i32) {
    %c0_i32 = arith.constant 0 : i32
    %c0_i32_0 = arith.constant 0 : i32
    %c0_i32_1 = arith.constant 0 : i32
    return %c0_i32, %c0_i32_0 : i32, i32
  }
  func.func @transform_2(%arg0: i32) -> (i32, i32) {
    %c0_i32 = arith.constant 0 : i32
    %c0_i32_0 = arith.constant 0 : i32
    %c0_i32_1 = arith.constant 0 : i32
    return %c0_i32, %c0_i32_0 : i32, i32
  }
}

module attributes {stable_mosaic.version = 11 : i64} {
  func.func @_fft_block_kernel(%arg0: i32, %arg1: memref<1x8x32xbf16, #tpu.memory_space<vmem>>, %arg2: memref<32x32xbf16, #tpu.memory_space<vmem>>, %arg3: memref<1x32xf32, #tpu.memory_space<vmem>>, %arg4: memref<32x32xbf16, #tpu.memory_space<vmem>>, %arg5: memref<1x32xf32, #tpu.memory_space<vmem>>, %arg6: memref<32x32xbf16, #tpu.memory_space<vmem>>, %arg7: memref<1x32xf32, #tpu.memory_space<vmem>>, %arg8: memref<32x32xbf16, #tpu.memory_space<vmem>>, %arg9: memref<1x32xf32, #tpu.memory_space<vmem>>, %arg10: memref<1x32xf32, #tpu.memory_space<vmem>>, %arg11: memref<1x32xf32, #tpu.memory_space<vmem>>, %arg12: memref<96x64xbf16, #tpu.memory_space<vmem>>, %arg13: memref<1x64xf32, #tpu.memory_space<vmem>>, %arg14: memref<192x32xbf16, #tpu.memory_space<vmem>>, %arg15: memref<1x32xf32, #tpu.memory_space<vmem>>, %arg16: memref<1x32xf32, #tpu.memory_space<vmem>>, %arg17: memref<1x32xf32, #tpu.memory_space<vmem>>, %arg18: memref<1x8x32xbf16, #tpu.memory_space<vmem>>, %arg19: memref<8x32xf32, #tpu.memory_space<vmem>>) attributes {dimension_semantics = [#tpu.dimension_semantics<parallel>], iteration_bounds = array<i64: 2>, scalar_prefetch = 0 : i64, scratch_operands = 1 : i64, tpu.core_type = #tpu.core_type<tc>, window_params = [{transform_indices = @transform_0, window_bounds = array<i64: 1, 8, 32>}, {pipeline_mode = #tpu.pipeline_mode<synchronous>, transform_indices = @transform_1, window_bounds = array<i64: 32, 32>}, {pipeline_mode = #tpu.pipeline_mode<synchronous>, transform_indices = @transform_2, window_bounds = array<i64: 1, 32>}, {pipeline_mode = #tpu.pipeline_mode<synchronous>, transform_indices = @transform_3, window_bounds = array<i64: 32, 32>}, {pipeline_mode = #tpu.pipeline_mode<synchronous>, transform_indices = @transform_4, window_bounds = array<i64: 1, 32>}, {pipeline_mode = #tpu.pipeline_mode<synchronous>, transform_indices = @transform_5, window_bounds = array<i64: 32, 32>}, {pipeline_mode = #tpu.pipeline_mode<synchronous>, transform_indices = @transform_6, window_bounds = array<i64: 1, 32>}, {pipeline_mode = #tpu.pipeline_mode<synchronous>, transform_indices = @transform_7, window_bounds = array<i64: 32, 32>}, {pipeline_mode = #tpu.pipeline_mode<synchronous>, transform_indices = @transform_8, window_bounds = array<i64: 1, 32>}, {pipeline_mode = #tpu.pipeline_mode<synchronous>, transform_indices = @transform_9, window_bounds = array<i64: 1, 32>}, {pipeline_mode = #tpu.pipeline_mode<synchronous>, transform_indices = @transform_10, window_bounds = array<i64: 1, 32>}, {pipeline_mode = #tpu.pipeline_mode<synchronous>, transform_indices = @transform_11, window_bounds = array<i64: 96, 64>}, {pipeline_mode = #tpu.pipeline_mode<synchronous>, transform_indices = @transform_12, window_bounds = array<i64: 1, 64>}, {pipeline_mode = #tpu.pipeline_mode<synchronous>, transform_indices = @transform_13, window_bounds = array<i64: 192, 32>}, {pipeline_mode = #tpu.pipeline_mode<synchronous>, transform_indices = @transform_14, window_bounds = array<i64: 1, 32>}, {pipeline_mode = #tpu.pipeline_mode<synchronous>, transform_indices = @transform_15, window_bounds = array<i64: 1, 32>}, {pipeline_mode = #tpu.pipeline_mode<synchronous>, transform_indices = @transform_16, window_bounds = array<i64: 1, 32>}, {transform_indices = @transform_17, window_bounds = array<i64: 1, 8, 32>}]} {
    %c0 = arith.constant 0 : index
    %c0_0 = arith.constant 0 : index
    %c0_1 = arith.constant 0 : index
    %0 = vector.load %arg1[%c0, %c0_0, %c0_1] : memref<1x8x32xbf16, #tpu.memory_space<vmem>>, vector<1x8x32xbf16>
    %1 = vector.shape_cast %0 : vector<1x8x32xbf16> to vector<8x32xbf16>
    %c0_2 = arith.constant 0 : index
    %c0_3 = arith.constant 0 : index
    %2 = vector.load %arg2[%c0_2, %c0_3] : memref<32x32xbf16, #tpu.memory_space<vmem>>, vector<32x32xbf16>
    %c0_4 = arith.constant 0 : index
    %c0_5 = arith.constant 0 : index
    %3 = vector.load %arg3[%c0_4, %c0_5] : memref<1x32xf32, #tpu.memory_space<vmem>>, vector<1x32xf32>
    %c0_6 = arith.constant 0 : index
    %c0_7 = arith.constant 0 : index
    %4 = vector.load %arg4[%c0_6, %c0_7] : memref<32x32xbf16, #tpu.memory_space<vmem>>, vector<32x32xbf16>
    %c0_8 = arith.constant 0 : index
    %c0_9 = arith.constant 0 : index
    %5 = vector.load %arg5[%c0_8, %c0_9] : memref<1x32xf32, #tpu.memory_space<vmem>>, vector<1x32xf32>
    %c0_10 = arith.constant 0 : index
    %c0_11 = arith.constant 0 : index
    %6 = vector.load %arg6[%c0_10, %c0_11] : memref<32x32xbf16, #tpu.memory_space<vmem>>, vector<32x32xbf16>
    %c0_12 = arith.constant 0 : index
    %c0_13 = arith.constant 0 : index
    %7 = vector.load %arg7[%c0_12, %c0_13] : memref<1x32xf32, #tpu.memory_space<vmem>>, vector<1x32xf32>
    %c0_14 = arith.constant 0 : index
    %c0_15 = arith.constant 0 : index
    %8 = vector.load %arg8[%c0_14, %c0_15] : memref<32x32xbf16, #tpu.memory_space<vmem>>, vector<32x32xbf16>
    %c0_16 = arith.constant 0 : index
    %c0_17 = arith.constant 0 : index
    %9 = vector.load %arg9[%c0_16, %c0_17] : memref<1x32xf32, #tpu.memory_space<vmem>>, vector<1x32xf32>
    %cst = arith.constant dense<0.000000e+00> : vector<8x32xf32>
    %10 = tpu.matmul %1, %2, %cst {dimension_numbers = #tpu.dot_dimension_numbers<[1], [0], [0], [1], [0, 0, 1, 1], [], []>} : vector<8x32xbf16>, vector<32x32xbf16>, vector<8x32xf32> -> vector<8x32xf32>
    %11 = vector.broadcast %3 : vector<1x32xf32> to vector<8x32xf32>
    %12 = arith.addf %10, %11 : vector<8x32xf32>
    %cst_18 = arith.constant dense<0.000000e+00> : vector<8x32xf32>
    %13 = tpu.matmul %1, %4, %cst_18 {dimension_numbers = #tpu.dot_dimension_numbers<[1], [0], [0], [1], [0, 0, 1, 1], [], []>} : vector<8x32xbf16>, vector<32x32xbf16>, vector<8x32xf32> -> vector<8x32xf32>
    %14 = vector.broadcast %5 : vector<1x32xf32> to vector<8x32xf32>
    %15 = arith.addf %13, %14 : vector<8x32xf32>
    %cst_19 = arith.constant dense<0.000000e+00> : vector<8x32xf32>
    %16 = tpu.matmul %1, %6, %cst_19 {dimension_numbers = #tpu.dot_dimension_numbers<[1], [0], [0], [1], [0, 0, 1, 1], [], []>} : vector<8x32xbf16>, vector<32x32xbf16>, vector<8x32xf32> -> vector<8x32xf32>
    %17 = vector.broadcast %7 : vector<1x32xf32> to vector<8x32xf32>
    %18 = arith.addf %16, %17 : vector<8x32xf32>
    %19 = arith.truncf %15 : vector<8x32xf32> to vector<8x32xbf16>
    %20 = arith.truncf %18 : vector<8x32xf32> to vector<8x32xbf16>
    %21 = vector.extract_strided_slice %12 {offsets = [0, 0], sizes = [8, 16], strides = [1, 1]} : vector<8x32xf32> to vector<8x16xf32>
    %22 = arith.truncf %21 : vector<8x16xf32> to vector<8x16xbf16>
    %23 = vector.extract_strided_slice %19 {offsets = [0, 0], sizes = [8, 16], strides = [1, 1]} : vector<8x32xbf16> to vector<8x16xbf16>
    "tpu.trace_start"() <{level = 10 : i32, message = "td,sd->ts"}> : () -> ()
    %cst_20 = arith.constant dense<0.000000e+00> : vector<8x8xf32>
    %24 = tpu.matmul %22, %23, %cst_20 {dimension_numbers = #tpu.dot_dimension_numbers<[1], [1], [0], [0], [0, 0, 1, 0], [], []>} : vector<8x16xbf16>, vector<8x16xbf16>, vector<8x8xf32> -> vector<8x8xf32>
    "tpu.trace_stop"() : () -> ()
    %cst_21 = arith.constant dense<0xFF800000> : vector<8xf32>
    %25 = vector.multi_reduction <maximumf>, %24, %cst_21 [1] : vector<8x8xf32> to vector<8xf32>
    %26 = vector.shape_cast %25 : vector<8xf32> to vector<8x1xf32>
    %27 = vector.broadcast %26 : vector<8x1xf32> to vector<8x8xf32>
    %28 = arith.subf %24, %27 : vector<8x8xf32>
    %29 = math.exp %28 : vector<8x8xf32>
    %cst_22 = arith.constant dense<0.000000e+00> : vector<8xf32>
    %30 = vector.multi_reduction <add>, %29, %cst_22 [1] : vector<8x8xf32> to vector<8xf32>
    %31 = vector.shape_cast %30 : vector<8xf32> to vector<8x1xf32>
    %32 = tpu.reciprocal %31 {approx = true} : vector<8x1xf32> -> vector<8x1xf32>
    %33 = arith.truncf %29 : vector<8x8xf32> to vector<8x8xbf16>
    %34 = vector.extract_strided_slice %20 {offsets = [0, 0], sizes = [8, 16], strides = [1, 1]} : vector<8x32xbf16> to vector<8x16xbf16>
    %cst_23 = arith.constant dense<0.000000e+00> : vector<8x16xf32>
    %35 = tpu.matmul %33, %34, %cst_23 {dimension_numbers = #tpu.dot_dimension_numbers<[1], [0], [0], [1], [0, 0, 1, 1], [], []>} : vector<8x8xbf16>, vector<8x16xbf16>, vector<8x16xf32> -> vector<8x16xf32>
    %36 = vector.broadcast %32 : vector<8x1xf32> to vector<8x16xf32>
    %37 = arith.mulf %35, %36 : vector<8x16xf32>
    %c0_24 = arith.constant 0 : index
    %c0_25 = arith.constant 0 : index
    %38 = vector.load %arg19[%c0_24, %c0_25] : memref<8x32xf32, #tpu.memory_space<vmem>>, vector<8x16xf32>
    tpu.vector_store %arg19[%c0_24, %c0_25], %37 {strides = array<i32>} : memref<8x32xf32, #tpu.memory_space<vmem>>, vector<8x16xf32>,
    %39 = vector.extract_strided_slice %12 {offsets = [0, 16], sizes = [8, 16], strides = [1, 1]} : vector<8x32xf32> to vector<8x16xf32>
    %40 = arith.truncf %39 : vector<8x16xf32> to vector<8x16xbf16>
    %41 = vector.extract_strided_slice %19 {offsets = [0, 16], sizes = [8, 16], strides = [1, 1]} : vector<8x32xbf16> to vector<8x16xbf16>
    "tpu.trace_start"() <{level = 10 : i32, message = "td,sd->ts"}> : () -> ()
    %cst_26 = arith.constant dense<0.000000e+00> : vector<8x8xf32>
    %42 = tpu.matmul %40, %41, %cst_26 {dimension_numbers = #tpu.dot_dimension_numbers<[1], [1], [0], [0], [0, 0, 1, 0], [], []>} : vector<8x16xbf16>, vector<8x16xbf16>, vector<8x8xf32> -> vector<8x8xf32>
    "tpu.trace_stop"() : () -> ()
    %cst_27 = arith.constant dense<0xFF800000> : vector<8xf32>
    %43 = vector.multi_reduction <maximumf>, %42, %cst_27 [1] : vector<8x8xf32> to vector<8xf32>
    %44 = vector.shape_cast %43 : vector<8xf32> to vector<8x1xf32>
    %45 = vector.broadcast %44 : vector<8x1xf32> to vector<8x8xf32>
    %46 = arith.subf %42, %45 : vector<8x8xf32>
    %47 = math.exp %46 : vector<8x8xf32>
    %cst_28 = arith.constant dense<0.000000e+00> : vector<8xf32>
    %48 = vector.multi_reduction <add>, %47, %cst_28 [1] : vector<8x8xf32> to vector<8xf32>
    %49 = vector.shape_cast %48 : vector<8xf32> to vector<8x1xf32>
    %50 = tpu.reciprocal %49 {approx = true} : vector<8x1xf32> -> vector<8x1xf32>
    %51 = arith.truncf %47 : vector<8x8xf32> to vector<8x8xbf16>
    %52 = vector.extract_strided_slice %20 {offsets = [0, 16], sizes = [8, 16], strides = [1, 1]} : vector<8x32xbf16> to vector<8x16xbf16>
    %cst_29 = arith.constant dense<0.000000e+00> : vector<8x16xf32>
    %53 = tpu.matmul %51, %52, %cst_29 {dimension_numbers = #tpu.dot_dimension_numbers<[1], [0], [0], [1], [0, 0, 1, 1], [], []>} : vector<8x8xbf16>, vector<8x16xbf16>, vector<8x16xf32> -> vector<8x16xf32>
    %54 = vector.broadcast %50 : vector<8x1xf32> to vector<8x16xf32>
    %55 = arith.mulf %53, %54 : vector<8x16xf32>
    %c0_30 = arith.constant 0 : index
    %c16 = arith.constant 16 : index
    %56 = vector.load %arg19[%c0_30, %c16] : memref<8x32xf32, #tpu.memory_space<vmem>>, vector<8x16xf32>
    tpu.vector_store %arg19[%c0_30, %c16], %55 {strides = array<i32>} : memref<8x32xf32, #tpu.memory_space<vmem>>, vector<8x16xf32>,
    %c0_31 = arith.constant 0 : index
    %c0_32 = arith.constant 0 : index
    %57 = vector.load %arg19[%c0_31, %c0_32] : memref<8x32xf32, #tpu.memory_space<vmem>>, vector<8x32xf32>
    %58 = arith.truncf %57 : vector<8x32xf32> to vector<8x32xbf16>
    %cst_33 = arith.constant dense<0.000000e+00> : vector<8x32xf32>
    %59 = tpu.matmul %58, %8, %cst_33 {dimension_numbers = #tpu.dot_dimension_numbers<[1], [0], [0], [1], [0, 0, 1, 1], [], []>} : vector<8x32xbf16>, vector<32x32xbf16>, vector<8x32xf32> -> vector<8x32xf32>
    %60 = vector.broadcast %9 : vector<1x32xf32> to vector<8x32xf32>
    %61 = arith.addf %59, %60 : vector<8x32xf32>
    %62 = arith.extf %1 : vector<8x32xbf16> to vector<8x32xf32>
    %c0_34 = arith.constant 0 : index
    %c0_35 = arith.constant 0 : index
    %63 = vector.load %arg10[%c0_34, %c0_35] : memref<1x32xf32, #tpu.memory_space<vmem>>, vector<1x32xf32>
    %c0_36 = arith.constant 0 : index
    %c0_37 = arith.constant 0 : index
    %64 = vector.load %arg11[%c0_36, %c0_37] : memref<1x32xf32, #tpu.memory_space<vmem>>, vector<1x32xf32>
    %65 = arith.addf %62, %61 : vector<8x32xf32>
    %cst_38 = arith.constant dense<0.000000e+00> : vector<8xf32>
    %66 = vector.multi_reduction <add>, %65, %cst_38 [1] : vector<8x32xf32> to vector<8xf32>
    %67 = vector.shape_cast %66 : vector<8xf32> to vector<8x1xf32>
    %cst_39 = arith.constant 3.200000e+01 : f32
    %68 = vector.broadcast %cst_39 : f32 to vector<8x1xf32>
    %69 = arith.divf %67, %68 : vector<8x1xf32>
    %70 = arith.mulf %65, %65 : vector<8x32xf32>
    %cst_40 = arith.constant dense<0.000000e+00> : vector<8xf32>
    %71 = vector.multi_reduction <add>, %70, %cst_40 [1] : vector<8x32xf32> to vector<8xf32>
    %72 = vector.shape_cast %71 : vector<8xf32> to vector<8x1xf32>
    %cst_41 = arith.constant 3.200000e+01 : f32
    %73 = vector.broadcast %cst_41 : f32 to vector<8x1xf32>
    %74 = arith.divf %72, %73 : vector<8x1xf32>
    %75 = arith.mulf %69, %69 : vector<8x1xf32>
    %76 = arith.subf %74, %75 : vector<8x1xf32>
    %77 = vector.broadcast %69 : vector<8x1xf32> to vector<8x32xf32>
    %78 = arith.subf %65, %77 : vector<8x32xf32>
    %cst_42 = arith.constant 9.99999974E-6 : f32
    %79 = vector.broadcast %cst_42 : f32 to vector<8x1xf32>
    %80 = arith.addf %76, %79 : vector<8x1xf32>
    %81 = math.rsqrt %80 : vector<8x1xf32>
    %82 = vector.broadcast %81 : vector<8x1xf32> to vector<8x32xf32>
    %83 = arith.mulf %78, %82 : vector<8x32xf32>
    %84 = vector.broadcast %63 : vector<1x32xf32> to vector<8x32xf32>
    %85 = arith.mulf %83, %84 : vector<8x32xf32>
    %86 = vector.broadcast %64 : vector<1x32xf32> to vector<8x32xf32>
    %87 = arith.addf %85, %86 : vector<8x32xf32>
    %88 = arith.truncf %87 : vector<8x32xf32> to vector<8x32xbf16>
    %c0_43 = arith.constant 0 : index
    %c0_44 = arith.constant 0 : index
    %89 = vector.load %arg12[%c0_43, %c0_44] : memref<96x64xbf16, #tpu.memory_space<vmem>>, vector<96x64xbf16>
    %c0_45 = arith.constant 0 : index
    %c0_46 = arith.constant 0 : index
    %90 = vector.load %arg13[%c0_45, %c0_46] : memref<1x64xf32, #tpu.memory_space<vmem>>, vector<1x64xf32>
    %cst_47 = arith.constant 0.000000e+00 : bf16
    %91 = vector.broadcast %cst_47 : bf16 to vector<1x32xbf16>
    %92 = vector.extract_strided_slice %88 {offsets = [0, 0], sizes = [7, 32], strides = [1, 1]} : vector<8x32xbf16> to vector<7x32xbf16>
    %93 = tpu.concatenate %91, %92 in 0 : vector<1x32xbf16>, vector<7x32xbf16> -> vector<8x32xbf16>
    %cst_48 = arith.constant 0.000000e+00 : bf16
    %94 = vector.broadcast %cst_48 : bf16 to vector<1x32xbf16>
    %95 = vector.extract_strided_slice %88 {offsets = [1, 0], sizes = [7, 32], strides = [1, 1]} : vector<8x32xbf16> to vector<7x32xbf16>
    %96 = tpu.concatenate %95, %94 in 0 : vector<7x32xbf16>, vector<1x32xbf16> -> vector<8x32xbf16>
    %97 = tpu.concatenate %93, %88, %96 in 1 : vector<8x32xbf16>, vector<8x32xbf16>, vector<8x32xbf16> -> vector<8x96xbf16>
    %cst_49 = arith.constant dense<0.000000e+00> : vector<8x64xf32>
    %98 = tpu.matmul %97, %89, %cst_49 {dimension_numbers = #tpu.dot_dimension_numbers<[1], [0], [0], [1], [0, 0, 1, 1], [], []>} : vector<8x96xbf16>, vector<96x64xbf16>, vector<8x64xf32> -> vector<8x64xf32>
    %99 = vector.broadcast %90 : vector<1x64xf32> to vector<8x64xf32>
    %100 = arith.addf %98, %99 : vector<8x64xf32>
    %cst_50 = arith.constant 0.000000e+00 : f32
    %101 = vector.broadcast %cst_50 : f32 to vector<8x64xf32>
    %102 = arith.maximumf %100, %101 : vector<8x64xf32>
    %103 = arith.truncf %102 : vector<8x64xf32> to vector<8x64xbf16>
    %c0_51 = arith.constant 0 : index
    %c0_52 = arith.constant 0 : index
    %104 = vector.load %arg14[%c0_51, %c0_52] : memref<192x32xbf16, #tpu.memory_space<vmem>>, vector<192x32xbf16>
    %c0_53 = arith.constant 0 : index
    %c0_54 = arith.constant 0 : index
    %105 = vector.load %arg15[%c0_53, %c0_54] : memref<1x32xf32, #tpu.memory_space<vmem>>, vector<1x32xf32>
    %cst_55 = arith.constant 0.000000e+00 : bf16
    %106 = vector.broadcast %cst_55 : bf16 to vector<1x64xbf16>
    %107 = vector.extract_strided_slice %103 {offsets = [0, 0], sizes = [7, 64], strides = [1, 1]} : vector<8x64xbf16> to vector<7x64xbf16>
    %108 = tpu.concatenate %106, %107 in 0 : vector<1x64xbf16>, vector<7x64xbf16> -> vector<8x64xbf16>
    %cst_56 = arith.constant 0.000000e+00 : bf16
    %109 = vector.broadcast %cst_56 : bf16 to vector<1x64xbf16>
    %110 = vector.extract_strided_slice %103 {offsets = [1, 0], sizes = [7, 64], strides = [1, 1]} : vector<8x64xbf16> to vector<7x64xbf16>
    %111 = tpu.concatenate %110, %109 in 0 : vector<7x64xbf16>, vector<1x64xbf16> -> vector<8x64xbf16>
    %112 = tpu.concatenate %108, %103, %111 in 1 : vector<8x64xbf16>, vector<8x64xbf16>, vector<8x64xbf16> -> vector<8x192xbf16>
    %cst_57 = arith.constant dense<0.000000e+00> : vector<8x32xf32>
    %113 = tpu.matmul %112, %104, %cst_57 {dimension_numbers = #tpu.dot_dimension_numbers<[1], [0], [0], [1], [0, 0, 1, 1], [], []>} : vector<8x192xbf16>, vector<192x32xbf16>, vector<8x32xf32> -> vector<8x32xf32>
    %114 = vector.broadcast %105 : vector<1x32xf32> to vector<8x32xf32>
    %115 = arith.addf %113, %114 : vector<8x32xf32>
    %c0_58 = arith.constant 0 : index
    %c0_59 = arith.constant 0 : index
    %116 = vector.load %arg16[%c0_58, %c0_59] : memref<1x32xf32, #tpu.memory_space<vmem>>, vector<1x32xf32>
    %c0_60 = arith.constant 0 : index
    %c0_61 = arith.constant 0 : index
    %117 = vector.load %arg17[%c0_60, %c0_61] : memref<1x32xf32, #tpu.memory_space<vmem>>, vector<1x32xf32>
    %118 = arith.addf %87, %115 : vector<8x32xf32>
    %cst_62 = arith.constant dense<0.000000e+00> : vector<8xf32>
    %119 = vector.multi_reduction <add>, %118, %cst_62 [1] : vector<8x32xf32> to vector<8xf32>
    %120 = vector.shape_cast %119 : vector<8xf32> to vector<8x1xf32>
    %cst_63 = arith.constant 3.200000e+01 : f32
    %121 = vector.broadcast %cst_63 : f32 to vector<8x1xf32>
    %122 = arith.divf %120, %121 : vector<8x1xf32>
    %123 = arith.mulf %118, %118 : vector<8x32xf32>
    %cst_64 = arith.constant dense<0.000000e+00> : vector<8xf32>
    %124 = vector.multi_reduction <add>, %123, %cst_64 [1] : vector<8x32xf32> to vector<8xf32>
    %125 = vector.shape_cast %124 : vector<8xf32> to vector<8x1xf32>
    %cst_65 = arith.constant 3.200000e+01 : f32
    %126 = vector.broadcast %cst_65 : f32 to vector<8x1xf32>
    %127 = arith.divf %125, %126 : vector<8x1xf32>
    %128 = arith.mulf %122, %122 : vector<8x1xf32>
    %129 = arith.subf %127, %128 : vector<8x1xf32>
    %130 = vector.broadcast %122 : vector<8x1xf32> to vector<8x32xf32>
    %131 = arith.subf %118, %130 : vector<8x32xf32>
    %cst_66 = arith.constant 9.99999974E-6 : f32
    %132 = vector.broadcast %cst_66 : f32 to vector<8x1xf32>
    %133 = arith.addf %129, %132 : vector<8x1xf32>
    %134 = math.rsqrt %133 : vector<8x1xf32>
    %135 = vector.broadcast %134 : vector<8x1xf32> to vector<8x32xf32>
    %136 = arith.mulf %131, %135 : vector<8x32xf32>
    %137 = vector.broadcast %116 : vector<1x32xf32> to vector<8x32xf32>
    %138 = arith.mulf %136, %137 : vector<8x32xf32>
    %139 = vector.broadcast %117 : vector<1x32xf32> to vector<8x32xf32>
    %140 = arith.addf %138, %139 : vector<8x32xf32>
    %141 = arith.truncf %140 : vector<8x32xf32> to vector<8x32xbf16>
    %c0_67 = arith.constant 0 : index
    %c0_68 = arith.constant 0 : index
    %c0_69 = arith.constant 0 : index
    %142 = vector.load %arg18[%c0_67, %c0_68, %c0_69] : memref<1x8x32xbf16, #tpu.memory_space<vmem>>, vector<1x8x32xbf16>
    %143 = vector.shape_cast %142 : vector<1x8x32xbf16> to vector<8x32xbf16>
    %144 = vector.shape_cast %141 : vector<8x32xbf16> to vector<1x8x32xbf16>
    tpu.vector_store %arg18[%c0_67, %c0_68, %c0_69], %144 {strides = array<i32>} : memref<1x8x32xbf16, #tpu.memory_space<vmem>>, vector<1x8x32xbf16>,
    return
  }
  func.func @transform_0(%arg0: i32) -> (i32, i32, i32) {
    %c0_i32 = arith.constant 0 : i32
    %c0_i32_0 = arith.constant 0 : i32
    %c0_i32_1 = arith.constant 0 : i32
    return %arg0, %c0_i32, %c0_i32_0 : i32, i32, i32
  }
  func.func @transform_1(%arg0: i32) -> (i32, i32) {
    %c0_i32 = arith.constant 0 : i32
    %c0_i32_0 = arith.constant 0 : i32
    %c0_i32_1 = arith.constant 0 : i32
    return %c0_i32, %c0_i32_0 : i32, i32
  }
  func.func @transform_2(%arg0: i32) -> (i32, i32) {
    %c0_i32 = arith.constant 0 : i32
    %c0_i32_0 = arith.constant 0 : i32
    %c0_i32_1 = arith.constant 0 : i32
    return %c0_i32, %c0_i32_0 : i32, i32
  }
  func.func @transform_3(%arg0: i32) -> (i32, i32) {
    %c0_i32 = arith.constant 0 : i32
    %c0_i32_0 = arith.constant 0 : i32
    %c0_i32_1 = arith.constant 0 : i32
    return %c0_i32, %c0_i32_0 : i32, i32
  }
  func.func @transform_4(%arg0: i32) -> (i32, i32) {
    %c0_i32 = arith.constant 0 : i32
    %c0_i32_0 = arith.constant 0 : i32
    %c0_i32_1 = arith.constant 0 : i32
    return %c0_i32, %c0_i32_0 : i32, i32
  }
  func.func @transform_5(%arg0: i32) -> (i32, i32) {
    %c0_i32 = arith.constant 0 : i32
    %c0_i32_0 = arith.constant 0 : i32
    %c0_i32_1 = arith.constant 0 : i32
    return %c0_i32, %c0_i32_0 : i32, i32
  }
  func.func @transform_6(%arg0: i32) -> (i32, i32) {
    %c0_i32 = arith.constant 0 : i32
    %c0_i32_0 = arith.constant 0 : i32
    %c0_i32_1 = arith.constant 0 : i32
    return %c0_i32, %c0_i32_0 : i32, i32
  }
  func.func @transform_7(%arg0: i32) -> (i32, i32) {
    %c0_i32 = arith.constant 0 : i32
    %c0_i32_0 = arith.constant 0 : i32
    %c0_i32_1 = arith.constant 0 : i32
    return %c0_i32, %c0_i32_0 : i32, i32
  }
  func.func @transform_8(%arg0: i32) -> (i32, i32) {
    %c0_i32 = arith.constant 0 : i32
    %c0_i32_0 = arith.constant 0 : i32
    %c0_i32_1 = arith.constant 0 : i32
    return %c0_i32, %c0_i32_0 : i32, i32
  }
  func.func @transform_9(%arg0: i32) -> (i32, i32) {
    %c0_i32 = arith.constant 0 : i32
    %c0_i32_0 = arith.constant 0 : i32
    %c0_i32_1 = arith.constant 0 : i32
    return %c0_i32, %c0_i32_0 : i32, i32
  }
  func.func @transform_10(%arg0: i32) -> (i32, i32) {
    %c0_i32 = arith.constant 0 : i32
    %c0_i32_0 = arith.constant 0 : i32
    %c0_i32_1 = arith.constant 0 : i32
    return %c0_i32, %c0_i32_0 : i32, i32
  }
  func.func @transform_11(%arg0: i32) -> (i32, i32) {
    %c0_i32 = arith.constant 0 : i32
    %c0_i32_0 = arith.constant 0 : i32
    %c0_i32_1 = arith.constant 0 : i32
    return %c0_i32, %c0_i32_0 : i32, i32
  }
  func.func @transform_12(%arg0: i32) -> (i32, i32) {
    %c0_i32 = arith.constant 0 : i32
    %c0_i32_0 = arith.constant 0 : i32
    %c0_i32_1 = arith.constant 0 : i32
    return %c0_i32, %c0_i32_0 : i32, i32
  }
  func.func @transform_13(%arg0: i32) -> (i32, i32) {
    %c0_i32 = arith.constant 0 : i32
    %c0_i32_0 = arith.constant 0 : i32
    %c0_i32_1 = arith.constant 0 : i32
    return %c0_i32, %c0_i32_0 : i32, i32
  }
  func.func @transform_14(%arg0: i32) -> (i32, i32) {
    %c0_i32 = arith.constant 0 : i32
    %c0_i32_0 = arith.constant 0 : i32
    %c0_i32_1 = arith.constant 0 : i32
    return %c0_i32, %c0_i32_0 : i32, i32
  }
  func.func @transform_15(%arg0: i32) -> (i32, i32) {
    %c0_i32 = arith.constant 0 : i32
    %c0_i32_0 = arith.constant 0 : i32
    %c0_i32_1 = arith.constant 0 : i32
    return %c0_i32, %c0_i32_0 : i32, i32
  }
  func.func @transform_16(%arg0: i32) -> (i32, i32) {
    %c0_i32 = arith.constant 0 : i32
    %c0_i32_0 = arith.constant 0 : i32
    %c0_i32_1 = arith.constant 0 : i32
    return %c0_i32, %c0_i32_0 : i32, i32
  }
  func.func @transform_17(%arg0: i32) -> (i32, i32, i32) {
    %c0_i32 = arith.constant 0 : i32
    %c0_i32_0 = arith.constant 0 : i32
    %c0_i32_1 = arith.constant 0 : i32
    return %arg0, %c0_i32, %c0_i32_0 : i32, i32, i32
  }
}

module attributes {stable_mosaic.version = 11 : i64} {
  func.func @_fft_block_kernel(%arg0: i32, %arg1: memref<1x24x32xbf16, #tpu.memory_space<vmem>>, %arg2: memref<32x32xbf16, #tpu.memory_space<vmem>>, %arg3: memref<1x32xf32, #tpu.memory_space<vmem>>, %arg4: memref<32x32xbf16, #tpu.memory_space<vmem>>, %arg5: memref<1x32xf32, #tpu.memory_space<vmem>>, %arg6: memref<32x32xbf16, #tpu.memory_space<vmem>>, %arg7: memref<1x32xf32, #tpu.memory_space<vmem>>, %arg8: memref<32x32xbf16, #tpu.memory_space<vmem>>, %arg9: memref<1x32xf32, #tpu.memory_space<vmem>>, %arg10: memref<1x32xf32, #tpu.memory_space<vmem>>, %arg11: memref<1x32xf32, #tpu.memory_space<vmem>>, %arg12: memref<96x64xbf16, #tpu.memory_space<vmem>>, %arg13: memref<1x64xf32, #tpu.memory_space<vmem>>, %arg14: memref<192x32xbf16, #tpu.memory_space<vmem>>, %arg15: memref<1x32xf32, #tpu.memory_space<vmem>>, %arg16: memref<1x32xf32, #tpu.memory_space<vmem>>, %arg17: memref<1x32xf32, #tpu.memory_space<vmem>>, %arg18: memref<32x128xbf16, #tpu.memory_space<vmem>>, %arg19: memref<1x128xf32, #tpu.memory_space<vmem>>, %arg20: memref<1x24x128xf32, #tpu.memory_space<vmem>>, %arg21: memref<24x32xf32, #tpu.memory_space<vmem>>) attributes {dimension_semantics = [#tpu.dimension_semantics<parallel>], iteration_bounds = array<i64: 2>, scalar_prefetch = 0 : i64, scratch_operands = 1 : i64, tpu.core_type = #tpu.core_type<tc>, window_params = [{transform_indices = @transform_0, window_bounds = array<i64: 1, 24, 32>}, {pipeline_mode = #tpu.pipeline_mode<synchronous>, transform_indices = @transform_1, window_bounds = array<i64: 32, 32>}, {pipeline_mode = #tpu.pipeline_mode<synchronous>, transform_indices = @transform_2, window_bounds = array<i64: 1, 32>}, {pipeline_mode = #tpu.pipeline_mode<synchronous>, transform_indices = @transform_3, window_bounds = array<i64: 32, 32>}, {pipeline_mode = #tpu.pipeline_mode<synchronous>, transform_indices = @transform_4, window_bounds = array<i64: 1, 32>}, {pipeline_mode = #tpu.pipeline_mode<synchronous>, transform_indices = @transform_5, window_bounds = array<i64: 32, 32>}, {pipeline_mode = #tpu.pipeline_mode<synchronous>, transform_indices = @transform_6, window_bounds = array<i64: 1, 32>}, {pipeline_mode = #tpu.pipeline_mode<synchronous>, transform_indices = @transform_7, window_bounds = array<i64: 32, 32>}, {pipeline_mode = #tpu.pipeline_mode<synchronous>, transform_indices = @transform_8, window_bounds = array<i64: 1, 32>}, {pipeline_mode = #tpu.pipeline_mode<synchronous>, transform_indices = @transform_9, window_bounds = array<i64: 1, 32>}, {pipeline_mode = #tpu.pipeline_mode<synchronous>, transform_indices = @transform_10, window_bounds = array<i64: 1, 32>}, {pipeline_mode = #tpu.pipeline_mode<synchronous>, transform_indices = @transform_11, window_bounds = array<i64: 96, 64>}, {pipeline_mode = #tpu.pipeline_mode<synchronous>, transform_indices = @transform_12, window_bounds = array<i64: 1, 64>}, {pipeline_mode = #tpu.pipeline_mode<synchronous>, transform_indices = @transform_13, window_bounds = array<i64: 192, 32>}, {pipeline_mode = #tpu.pipeline_mode<synchronous>, transform_indices = @transform_14, window_bounds = array<i64: 1, 32>}, {pipeline_mode = #tpu.pipeline_mode<synchronous>, transform_indices = @transform_15, window_bounds = array<i64: 1, 32>}, {pipeline_mode = #tpu.pipeline_mode<synchronous>, transform_indices = @transform_16, window_bounds = array<i64: 1, 32>}, {pipeline_mode = #tpu.pipeline_mode<synchronous>, transform_indices = @transform_17, window_bounds = array<i64: 32, 128>}, {pipeline_mode = #tpu.pipeline_mode<synchronous>, transform_indices = @transform_18, window_bounds = array<i64: 1, 128>}, {transform_indices = @transform_19, window_bounds = array<i64: 1, 24, 128>}]} {
    %c0 = arith.constant 0 : index
    %c0_0 = arith.constant 0 : index
    %c0_1 = arith.constant 0 : index
    %0 = vector.load %arg1[%c0, %c0_0, %c0_1] : memref<1x24x32xbf16, #tpu.memory_space<vmem>>, vector<1x24x32xbf16>
    %1 = vector.shape_cast %0 : vector<1x24x32xbf16> to vector<24x32xbf16>
    %c0_2 = arith.constant 0 : index
    %c0_3 = arith.constant 0 : index
    %2 = vector.load %arg2[%c0_2, %c0_3] : memref<32x32xbf16, #tpu.memory_space<vmem>>, vector<32x32xbf16>
    %c0_4 = arith.constant 0 : index
    %c0_5 = arith.constant 0 : index
    %3 = vector.load %arg3[%c0_4, %c0_5] : memref<1x32xf32, #tpu.memory_space<vmem>>, vector<1x32xf32>
    %c0_6 = arith.constant 0 : index
    %c0_7 = arith.constant 0 : index
    %4 = vector.load %arg4[%c0_6, %c0_7] : memref<32x32xbf16, #tpu.memory_space<vmem>>, vector<32x32xbf16>
    %c0_8 = arith.constant 0 : index
    %c0_9 = arith.constant 0 : index
    %5 = vector.load %arg5[%c0_8, %c0_9] : memref<1x32xf32, #tpu.memory_space<vmem>>, vector<1x32xf32>
    %c0_10 = arith.constant 0 : index
    %c0_11 = arith.constant 0 : index
    %6 = vector.load %arg6[%c0_10, %c0_11] : memref<32x32xbf16, #tpu.memory_space<vmem>>, vector<32x32xbf16>
    %c0_12 = arith.constant 0 : index
    %c0_13 = arith.constant 0 : index
    %7 = vector.load %arg7[%c0_12, %c0_13] : memref<1x32xf32, #tpu.memory_space<vmem>>, vector<1x32xf32>
    %c0_14 = arith.constant 0 : index
    %c0_15 = arith.constant 0 : index
    %8 = vector.load %arg8[%c0_14, %c0_15] : memref<32x32xbf16, #tpu.memory_space<vmem>>, vector<32x32xbf16>
    %c0_16 = arith.constant 0 : index
    %c0_17 = arith.constant 0 : index
    %9 = vector.load %arg9[%c0_16, %c0_17] : memref<1x32xf32, #tpu.memory_space<vmem>>, vector<1x32xf32>
    %cst = arith.constant dense<0.000000e+00> : vector<24x32xf32>
    %10 = tpu.matmul %1, %2, %cst {dimension_numbers = #tpu.dot_dimension_numbers<[1], [0], [0], [1], [0, 0, 1, 1], [], []>} : vector<24x32xbf16>, vector<32x32xbf16>, vector<24x32xf32> -> vector<24x32xf32>
    %11 = vector.broadcast %3 : vector<1x32xf32> to vector<24x32xf32>
    %12 = arith.addf %10, %11 : vector<24x32xf32>
    %cst_18 = arith.constant dense<0.000000e+00> : vector<24x32xf32>
    %13 = tpu.matmul %1, %4, %cst_18 {dimension_numbers = #tpu.dot_dimension_numbers<[1], [0], [0], [1], [0, 0, 1, 1], [], []>} : vector<24x32xbf16>, vector<32x32xbf16>, vector<24x32xf32> -> vector<24x32xf32>
    %14 = vector.broadcast %5 : vector<1x32xf32> to vector<24x32xf32>
    %15 = arith.addf %13, %14 : vector<24x32xf32>
    %cst_19 = arith.constant dense<0.000000e+00> : vector<24x32xf32>
    %16 = tpu.matmul %1, %6, %cst_19 {dimension_numbers = #tpu.dot_dimension_numbers<[1], [0], [0], [1], [0, 0, 1, 1], [], []>} : vector<24x32xbf16>, vector<32x32xbf16>, vector<24x32xf32> -> vector<24x32xf32>
    %17 = vector.broadcast %7 : vector<1x32xf32> to vector<24x32xf32>
    %18 = arith.addf %16, %17 : vector<24x32xf32>
    %19 = arith.truncf %15 : vector<24x32xf32> to vector<24x32xbf16>
    %20 = arith.truncf %18 : vector<24x32xf32> to vector<24x32xbf16>
    %21 = vector.extract_strided_slice %12 {offsets = [0, 0], sizes = [24, 16], strides = [1, 1]} : vector<24x32xf32> to vector<24x16xf32>
    %22 = arith.truncf %21 : vector<24x16xf32> to vector<24x16xbf16>
    %23 = vector.extract_strided_slice %19 {offsets = [0, 0], sizes = [24, 16], strides = [1, 1]} : vector<24x32xbf16> to vector<24x16xbf16>
    "tpu.trace_start"() <{level = 10 : i32, message = "td,sd->ts"}> : () -> ()
    %cst_20 = arith.constant dense<0.000000e+00> : vector<24x24xf32>
    %24 = tpu.matmul %22, %23, %cst_20 {dimension_numbers = #tpu.dot_dimension_numbers<[1], [1], [0], [0], [0, 0, 1, 0], [], []>} : vector<24x16xbf16>, vector<24x16xbf16>, vector<24x24xf32> -> vector<24x24xf32>
    "tpu.trace_stop"() : () -> ()
    %cst_21 = arith.constant dense<0xFF800000> : vector<24xf32>
    %25 = vector.multi_reduction <maximumf>, %24, %cst_21 [1] : vector<24x24xf32> to vector<24xf32>
    %26 = vector.shape_cast %25 : vector<24xf32> to vector<24x1xf32>
    %27 = vector.broadcast %26 : vector<24x1xf32> to vector<24x24xf32>
    %28 = arith.subf %24, %27 : vector<24x24xf32>
    %29 = math.exp %28 : vector<24x24xf32>
    %cst_22 = arith.constant dense<0.000000e+00> : vector<24xf32>
    %30 = vector.multi_reduction <add>, %29, %cst_22 [1] : vector<24x24xf32> to vector<24xf32>
    %31 = vector.shape_cast %30 : vector<24xf32> to vector<24x1xf32>
    %32 = tpu.reciprocal %31 {approx = true} : vector<24x1xf32> -> vector<24x1xf32>
    %33 = arith.truncf %29 : vector<24x24xf32> to vector<24x24xbf16>
    %34 = vector.extract_strided_slice %20 {offsets = [0, 0], sizes = [24, 16], strides = [1, 1]} : vector<24x32xbf16> to vector<24x16xbf16>
    %cst_23 = arith.constant dense<0.000000e+00> : vector<24x16xf32>
    %35 = tpu.matmul %33, %34, %cst_23 {dimension_numbers = #tpu.dot_dimension_numbers<[1], [0], [0], [1], [0, 0, 1, 1], [], []>} : vector<24x24xbf16>, vector<24x16xbf16>, vector<24x16xf32> -> vector<24x16xf32>
    %36 = vector.broadcast %32 : vector<24x1xf32> to vector<24x16xf32>
    %37 = arith.mulf %35, %36 : vector<24x16xf32>
    %c0_24 = arith.constant 0 : index
    %c0_25 = arith.constant 0 : index
    %38 = vector.load %arg21[%c0_24, %c0_25] : memref<24x32xf32, #tpu.memory_space<vmem>>, vector<24x16xf32>
    tpu.vector_store %arg21[%c0_24, %c0_25], %37 {strides = array<i32>} : memref<24x32xf32, #tpu.memory_space<vmem>>, vector<24x16xf32>,
    %39 = vector.extract_strided_slice %12 {offsets = [0, 16], sizes = [24, 16], strides = [1, 1]} : vector<24x32xf32> to vector<24x16xf32>
    %40 = arith.truncf %39 : vector<24x16xf32> to vector<24x16xbf16>
    %41 = vector.extract_strided_slice %19 {offsets = [0, 16], sizes = [24, 16], strides = [1, 1]} : vector<24x32xbf16> to vector<24x16xbf16>
    "tpu.trace_start"() <{level = 10 : i32, message = "td,sd->ts"}> : () -> ()
    %cst_26 = arith.constant dense<0.000000e+00> : vector<24x24xf32>
    %42 = tpu.matmul %40, %41, %cst_26 {dimension_numbers = #tpu.dot_dimension_numbers<[1], [1], [0], [0], [0, 0, 1, 0], [], []>} : vector<24x16xbf16>, vector<24x16xbf16>, vector<24x24xf32> -> vector<24x24xf32>
    "tpu.trace_stop"() : () -> ()
    %cst_27 = arith.constant dense<0xFF800000> : vector<24xf32>
    %43 = vector.multi_reduction <maximumf>, %42, %cst_27 [1] : vector<24x24xf32> to vector<24xf32>
    %44 = vector.shape_cast %43 : vector<24xf32> to vector<24x1xf32>
    %45 = vector.broadcast %44 : vector<24x1xf32> to vector<24x24xf32>
    %46 = arith.subf %42, %45 : vector<24x24xf32>
    %47 = math.exp %46 : vector<24x24xf32>
    %cst_28 = arith.constant dense<0.000000e+00> : vector<24xf32>
    %48 = vector.multi_reduction <add>, %47, %cst_28 [1] : vector<24x24xf32> to vector<24xf32>
    %49 = vector.shape_cast %48 : vector<24xf32> to vector<24x1xf32>
    %50 = tpu.reciprocal %49 {approx = true} : vector<24x1xf32> -> vector<24x1xf32>
    %51 = arith.truncf %47 : vector<24x24xf32> to vector<24x24xbf16>
    %52 = vector.extract_strided_slice %20 {offsets = [0, 16], sizes = [24, 16], strides = [1, 1]} : vector<24x32xbf16> to vector<24x16xbf16>
    %cst_29 = arith.constant dense<0.000000e+00> : vector<24x16xf32>
    %53 = tpu.matmul %51, %52, %cst_29 {dimension_numbers = #tpu.dot_dimension_numbers<[1], [0], [0], [1], [0, 0, 1, 1], [], []>} : vector<24x24xbf16>, vector<24x16xbf16>, vector<24x16xf32> -> vector<24x16xf32>
    %54 = vector.broadcast %50 : vector<24x1xf32> to vector<24x16xf32>
    %55 = arith.mulf %53, %54 : vector<24x16xf32>
    %c0_30 = arith.constant 0 : index
    %c16 = arith.constant 16 : index
    %56 = vector.load %arg21[%c0_30, %c16] : memref<24x32xf32, #tpu.memory_space<vmem>>, vector<24x16xf32>
    tpu.vector_store %arg21[%c0_30, %c16], %55 {strides = array<i32>} : memref<24x32xf32, #tpu.memory_space<vmem>>, vector<24x16xf32>,
    %c0_31 = arith.constant 0 : index
    %c0_32 = arith.constant 0 : index
    %57 = vector.load %arg21[%c0_31, %c0_32] : memref<24x32xf32, #tpu.memory_space<vmem>>, vector<24x32xf32>
    %58 = arith.truncf %57 : vector<24x32xf32> to vector<24x32xbf16>
    %cst_33 = arith.constant dense<0.000000e+00> : vector<24x32xf32>
    %59 = tpu.matmul %58, %8, %cst_33 {dimension_numbers = #tpu.dot_dimension_numbers<[1], [0], [0], [1], [0, 0, 1, 1], [], []>} : vector<24x32xbf16>, vector<32x32xbf16>, vector<24x32xf32> -> vector<24x32xf32>
    %60 = vector.broadcast %9 : vector<1x32xf32> to vector<24x32xf32>
    %61 = arith.addf %59, %60 : vector<24x32xf32>
    %62 = arith.extf %1 : vector<24x32xbf16> to vector<24x32xf32>
    %c0_34 = arith.constant 0 : index
    %c0_35 = arith.constant 0 : index
    %63 = vector.load %arg10[%c0_34, %c0_35] : memref<1x32xf32, #tpu.memory_space<vmem>>, vector<1x32xf32>
    %c0_36 = arith.constant 0 : index
    %c0_37 = arith.constant 0 : index
    %64 = vector.load %arg11[%c0_36, %c0_37] : memref<1x32xf32, #tpu.memory_space<vmem>>, vector<1x32xf32>
    %65 = arith.addf %62, %61 : vector<24x32xf32>
    %cst_38 = arith.constant dense<0.000000e+00> : vector<24xf32>
    %66 = vector.multi_reduction <add>, %65, %cst_38 [1] : vector<24x32xf32> to vector<24xf32>
    %67 = vector.shape_cast %66 : vector<24xf32> to vector<24x1xf32>
    %cst_39 = arith.constant 3.200000e+01 : f32
    %68 = vector.broadcast %cst_39 : f32 to vector<24x1xf32>
    %69 = arith.divf %67, %68 : vector<24x1xf32>
    %70 = arith.mulf %65, %65 : vector<24x32xf32>
    %cst_40 = arith.constant dense<0.000000e+00> : vector<24xf32>
    %71 = vector.multi_reduction <add>, %70, %cst_40 [1] : vector<24x32xf32> to vector<24xf32>
    %72 = vector.shape_cast %71 : vector<24xf32> to vector<24x1xf32>
    %cst_41 = arith.constant 3.200000e+01 : f32
    %73 = vector.broadcast %cst_41 : f32 to vector<24x1xf32>
    %74 = arith.divf %72, %73 : vector<24x1xf32>
    %75 = arith.mulf %69, %69 : vector<24x1xf32>
    %76 = arith.subf %74, %75 : vector<24x1xf32>
    %77 = vector.broadcast %69 : vector<24x1xf32> to vector<24x32xf32>
    %78 = arith.subf %65, %77 : vector<24x32xf32>
    %cst_42 = arith.constant 9.99999974E-6 : f32
    %79 = vector.broadcast %cst_42 : f32 to vector<24x1xf32>
    %80 = arith.addf %76, %79 : vector<24x1xf32>
    %81 = math.rsqrt %80 : vector<24x1xf32>
    %82 = vector.broadcast %81 : vector<24x1xf32> to vector<24x32xf32>
    %83 = arith.mulf %78, %82 : vector<24x32xf32>
    %84 = vector.broadcast %63 : vector<1x32xf32> to vector<24x32xf32>
    %85 = arith.mulf %83, %84 : vector<24x32xf32>
    %86 = vector.broadcast %64 : vector<1x32xf32> to vector<24x32xf32>
    %87 = arith.addf %85, %86 : vector<24x32xf32>
    %88 = arith.truncf %87 : vector<24x32xf32> to vector<24x32xbf16>
    %c0_43 = arith.constant 0 : index
    %c0_44 = arith.constant 0 : index
    %89 = vector.load %arg12[%c0_43, %c0_44] : memref<96x64xbf16, #tpu.memory_space<vmem>>, vector<96x64xbf16>
    %c0_45 = arith.constant 0 : index
    %c0_46 = arith.constant 0 : index
    %90 = vector.load %arg13[%c0_45, %c0_46] : memref<1x64xf32, #tpu.memory_space<vmem>>, vector<1x64xf32>
    %cst_47 = arith.constant 0.000000e+00 : bf16
    %91 = vector.broadcast %cst_47 : bf16 to vector<1x32xbf16>
    %92 = vector.extract_strided_slice %88 {offsets = [0, 0], sizes = [23, 32], strides = [1, 1]} : vector<24x32xbf16> to vector<23x32xbf16>
    %93 = tpu.concatenate %91, %92 in 0 : vector<1x32xbf16>, vector<23x32xbf16> -> vector<24x32xbf16>
    %cst_48 = arith.constant 0.000000e+00 : bf16
    %94 = vector.broadcast %cst_48 : bf16 to vector<1x32xbf16>
    %95 = vector.extract_strided_slice %88 {offsets = [1, 0], sizes = [23, 32], strides = [1, 1]} : vector<24x32xbf16> to vector<23x32xbf16>
    %96 = tpu.concatenate %95, %94 in 0 : vector<23x32xbf16>, vector<1x32xbf16> -> vector<24x32xbf16>
    %97 = tpu.concatenate %93, %88, %96 in 1 : vector<24x32xbf16>, vector<24x32xbf16>, vector<24x32xbf16> -> vector<24x96xbf16>
    %cst_49 = arith.constant dense<0.000000e+00> : vector<24x64xf32>
    %98 = tpu.matmul %97, %89, %cst_49 {dimension_numbers = #tpu.dot_dimension_numbers<[1], [0], [0], [1], [0, 0, 1, 1], [], []>} : vector<24x96xbf16>, vector<96x64xbf16>, vector<24x64xf32> -> vector<24x64xf32>
    %99 = vector.broadcast %90 : vector<1x64xf32> to vector<24x64xf32>
    %100 = arith.addf %98, %99 : vector<24x64xf32>
    %cst_50 = arith.constant 0.000000e+00 : f32
    %101 = vector.broadcast %cst_50 : f32 to vector<24x64xf32>
    %102 = arith.maximumf %100, %101 : vector<24x64xf32>
    %103 = arith.truncf %102 : vector<24x64xf32> to vector<24x64xbf16>
    %c0_51 = arith.constant 0 : index
    %c0_52 = arith.constant 0 : index
    %104 = vector.load %arg14[%c0_51, %c0_52] : memref<192x32xbf16, #tpu.memory_space<vmem>>, vector<192x32xbf16>
    %c0_53 = arith.constant 0 : index
    %c0_54 = arith.constant 0 : index
    %105 = vector.load %arg15[%c0_53, %c0_54] : memref<1x32xf32, #tpu.memory_space<vmem>>, vector<1x32xf32>
    %cst_55 = arith.constant 0.000000e+00 : bf16
    %106 = vector.broadcast %cst_55 : bf16 to vector<1x64xbf16>
    %107 = vector.extract_strided_slice %103 {offsets = [0, 0], sizes = [23, 64], strides = [1, 1]} : vector<24x64xbf16> to vector<23x64xbf16>
    %108 = tpu.concatenate %106, %107 in 0 : vector<1x64xbf16>, vector<23x64xbf16> -> vector<24x64xbf16>
    %cst_56 = arith.constant 0.000000e+00 : bf16
    %109 = vector.broadcast %cst_56 : bf16 to vector<1x64xbf16>
    %110 = vector.extract_strided_slice %103 {offsets = [1, 0], sizes = [23, 64], strides = [1, 1]} : vector<24x64xbf16> to vector<23x64xbf16>
    %111 = tpu.concatenate %110, %109 in 0 : vector<23x64xbf16>, vector<1x64xbf16> -> vector<24x64xbf16>
    %112 = tpu.concatenate %108, %103, %111 in 1 : vector<24x64xbf16>, vector<24x64xbf16>, vector<24x64xbf16> -> vector<24x192xbf16>
    %cst_57 = arith.constant dense<0.000000e+00> : vector<24x32xf32>
    %113 = tpu.matmul %112, %104, %cst_57 {dimension_numbers = #tpu.dot_dimension_numbers<[1], [0], [0], [1], [0, 0, 1, 1], [], []>} : vector<24x192xbf16>, vector<192x32xbf16>, vector<24x32xf32> -> vector<24x32xf32>
    %114 = vector.broadcast %105 : vector<1x32xf32> to vector<24x32xf32>
    %115 = arith.addf %113, %114 : vector<24x32xf32>
    %c0_58 = arith.constant 0 : index
    %c0_59 = arith.constant 0 : index
    %116 = vector.load %arg16[%c0_58, %c0_59] : memref<1x32xf32, #tpu.memory_space<vmem>>, vector<1x32xf32>
    %c0_60 = arith.constant 0 : index
    %c0_61 = arith.constant 0 : index
    %117 = vector.load %arg17[%c0_60, %c0_61] : memref<1x32xf32, #tpu.memory_space<vmem>>, vector<1x32xf32>
    %118 = arith.addf %87, %115 : vector<24x32xf32>
    %cst_62 = arith.constant dense<0.000000e+00> : vector<24xf32>
    %119 = vector.multi_reduction <add>, %118, %cst_62 [1] : vector<24x32xf32> to vector<24xf32>
    %120 = vector.shape_cast %119 : vector<24xf32> to vector<24x1xf32>
    %cst_63 = arith.constant 3.200000e+01 : f32
    %121 = vector.broadcast %cst_63 : f32 to vector<24x1xf32>
    %122 = arith.divf %120, %121 : vector<24x1xf32>
    %123 = arith.mulf %118, %118 : vector<24x32xf32>
    %cst_64 = arith.constant dense<0.000000e+00> : vector<24xf32>
    %124 = vector.multi_reduction <add>, %123, %cst_64 [1] : vector<24x32xf32> to vector<24xf32>
    %125 = vector.shape_cast %124 : vector<24xf32> to vector<24x1xf32>
    %cst_65 = arith.constant 3.200000e+01 : f32
    %126 = vector.broadcast %cst_65 : f32 to vector<24x1xf32>
    %127 = arith.divf %125, %126 : vector<24x1xf32>
    %128 = arith.mulf %122, %122 : vector<24x1xf32>
    %129 = arith.subf %127, %128 : vector<24x1xf32>
    %130 = vector.broadcast %122 : vector<24x1xf32> to vector<24x32xf32>
    %131 = arith.subf %118, %130 : vector<24x32xf32>
    %cst_66 = arith.constant 9.99999974E-6 : f32
    %132 = vector.broadcast %cst_66 : f32 to vector<24x1xf32>
    %133 = arith.addf %129, %132 : vector<24x1xf32>
    %134 = math.rsqrt %133 : vector<24x1xf32>
    %135 = vector.broadcast %134 : vector<24x1xf32> to vector<24x32xf32>
    %136 = arith.mulf %131, %135 : vector<24x32xf32>
    %137 = vector.broadcast %116 : vector<1x32xf32> to vector<24x32xf32>
    %138 = arith.mulf %136, %137 : vector<24x32xf32>
    %139 = vector.broadcast %117 : vector<1x32xf32> to vector<24x32xf32>
    %140 = arith.addf %138, %139 : vector<24x32xf32>
    %141 = arith.truncf %140 : vector<24x32xf32> to vector<24x32xbf16>
    %c0_67 = arith.constant 0 : index
    %c0_68 = arith.constant 0 : index
    %142 = vector.load %arg18[%c0_67, %c0_68] : memref<32x128xbf16, #tpu.memory_space<vmem>>, vector<32x128xbf16>
    %cst_69 = arith.constant dense<0.000000e+00> : vector<24x128xf32>
    %143 = tpu.matmul %141, %142, %cst_69 {dimension_numbers = #tpu.dot_dimension_numbers<[1], [0], [0], [1], [0, 0, 1, 1], [], []>} : vector<24x32xbf16>, vector<32x128xbf16>, vector<24x128xf32> -> vector<24x128xf32>
    %c0_70 = arith.constant 0 : index
    %c0_71 = arith.constant 0 : index
    %144 = vector.load %arg19[%c0_70, %c0_71] : memref<1x128xf32, #tpu.memory_space<vmem>>, vector<1x128xf32>
    %145 = vector.broadcast %144 : vector<1x128xf32> to vector<24x128xf32>
    %146 = arith.addf %143, %145 : vector<24x128xf32>
    %c0_72 = arith.constant 0 : index
    %c0_73 = arith.constant 0 : index
    %c0_74 = arith.constant 0 : index
    %147 = vector.load %arg20[%c0_72, %c0_73, %c0_74] : memref<1x24x128xf32, #tpu.memory_space<vmem>>, vector<1x24x128xf32>
    %148 = vector.shape_cast %147 : vector<1x24x128xf32> to vector<24x128xf32>
    %149 = vector.shape_cast %146 : vector<24x128xf32> to vector<1x24x128xf32>
    tpu.vector_store %arg20[%c0_72, %c0_73, %c0_74], %149 {strides = array<i32>} : memref<1x24x128xf32, #tpu.memory_space<vmem>>, vector<1x24x128xf32>,
    return
  }
  func.func @transform_0(%arg0: i32) -> (i32, i32, i32) {
    %c0_i32 = arith.constant 0 : i32
    %c0_i32_0 = arith.constant 0 : i32
    %c0_i32_1 = arith.constant 0 : i32
    return %arg0, %c0_i32, %c0_i32_0 : i32, i32, i32
  }
  func.func @transform_1(%arg0: i32) -> (i32, i32) {
    %c0_i32 = arith.constant 0 : i32
    %c0_i32_0 = arith.constant 0 : i32
    %c0_i32_1 = arith.constant 0 : i32
    return %c0_i32, %c0_i32_0 : i32, i32
  }
  func.func @transform_2(%arg0: i32) -> (i32, i32) {
    %c0_i32 = arith.constant 0 : i32
    %c0_i32_0 = arith.constant 0 : i32
    %c0_i32_1 = arith.constant 0 : i32
    return %c0_i32, %c0_i32_0 : i32, i32
  }
  func.func @transform_3(%arg0: i32) -> (i32, i32) {
    %c0_i32 = arith.constant 0 : i32
    %c0_i32_0 = arith.constant 0 : i32
    %c0_i32_1 = arith.constant 0 : i32
    return %c0_i32, %c0_i32_0 : i32, i32
  }
  func.func @transform_4(%arg0: i32) -> (i32, i32) {
    %c0_i32 = arith.constant 0 : i32
    %c0_i32_0 = arith.constant 0 : i32
    %c0_i32_1 = arith.constant 0 : i32
    return %c0_i32, %c0_i32_0 : i32, i32
  }
  func.func @transform_5(%arg0: i32) -> (i32, i32) {
    %c0_i32 = arith.constant 0 : i32
    %c0_i32_0 = arith.constant 0 : i32
    %c0_i32_1 = arith.constant 0 : i32
    return %c0_i32, %c0_i32_0 : i32, i32
  }
  func.func @transform_6(%arg0: i32) -> (i32, i32) {
    %c0_i32 = arith.constant 0 : i32
    %c0_i32_0 = arith.constant 0 : i32
    %c0_i32_1 = arith.constant 0 : i32
    return %c0_i32, %c0_i32_0 : i32, i32
  }
  func.func @transform_7(%arg0: i32) -> (i32, i32) {
    %c0_i32 = arith.constant 0 : i32
    %c0_i32_0 = arith.constant 0 : i32
    %c0_i32_1 = arith.constant 0 : i32
    return %c0_i32, %c0_i32_0 : i32, i32
  }
  func.func @transform_8(%arg0: i32) -> (i32, i32) {
    %c0_i32 = arith.constant 0 : i32
    %c0_i32_0 = arith.constant 0 : i32
    %c0_i32_1 = arith.constant 0 : i32
    return %c0_i32, %c0_i32_0 : i32, i32
  }
  func.func @transform_9(%arg0: i32) -> (i32, i32) {
    %c0_i32 = arith.constant 0 : i32
    %c0_i32_0 = arith.constant 0 : i32
    %c0_i32_1 = arith.constant 0 : i32
    return %c0_i32, %c0_i32_0 : i32, i32
  }
  func.func @transform_10(%arg0: i32) -> (i32, i32) {
    %c0_i32 = arith.constant 0 : i32
    %c0_i32_0 = arith.constant 0 : i32
    %c0_i32_1 = arith.constant 0 : i32
    return %c0_i32, %c0_i32_0 : i32, i32
  }
  func.func @transform_11(%arg0: i32) -> (i32, i32) {
    %c0_i32 = arith.constant 0 : i32
    %c0_i32_0 = arith.constant 0 : i32
    %c0_i32_1 = arith.constant 0 : i32
    return %c0_i32, %c0_i32_0 : i32, i32
  }
  func.func @transform_12(%arg0: i32) -> (i32, i32) {
    %c0_i32 = arith.constant 0 : i32
    %c0_i32_0 = arith.constant 0 : i32
    %c0_i32_1 = arith.constant 0 : i32
    return %c0_i32, %c0_i32_0 : i32, i32
  }
  func.func @transform_13(%arg0: i32) -> (i32, i32) {
    %c0_i32 = arith.constant 0 : i32
    %c0_i32_0 = arith.constant 0 : i32
    %c0_i32_1 = arith.constant 0 : i32
    return %c0_i32, %c0_i32_0 : i32, i32
  }
  func.func @transform_14(%arg0: i32) -> (i32, i32) {
    %c0_i32 = arith.constant 0 : i32
    %c0_i32_0 = arith.constant 0 : i32
    %c0_i32_1 = arith.constant 0 : i32
    return %c0_i32, %c0_i32_0 : i32, i32
  }
  func.func @transform_15(%arg0: i32) -> (i32, i32) {
    %c0_i32 = arith.constant 0 : i32
    %c0_i32_0 = arith.constant 0 : i32
    %c0_i32_1 = arith.constant 0 : i32
    return %c0_i32, %c0_i32_0 : i32, i32
  }
  func.func @transform_16(%arg0: i32) -> (i32, i32) {
    %c0_i32 = arith.constant 0 : i32
    %c0_i32_0 = arith.constant 0 : i32
    %c0_i32_1 = arith.constant 0 : i32
    return %c0_i32, %c0_i32_0 : i32, i32
  }
  func.func @transform_17(%arg0: i32) -> (i32, i32) {
    %c0_i32 = arith.constant 0 : i32
    %c0_i32_0 = arith.constant 0 : i32
    %c0_i32_1 = arith.constant 0 : i32
    return %c0_i32, %c0_i32_0 : i32, i32
  }
  func.func @transform_18(%arg0: i32) -> (i32, i32) {
    %c0_i32 = arith.constant 0 : i32
    %c0_i32_0 = arith.constant 0 : i32
    %c0_i32_1 = arith.constant 0 : i32
    return %c0_i32, %c0_i32_0 : i32, i32
  }
  func.func @transform_19(%arg0: i32) -> (i32, i32, i32) {
    %c0_i32 = arith.constant 0 : i32
    %c0_i32_0 = arith.constant 0 : i32
    %c0_i32_1 = arith.constant 0 : i32
    return %arg0, %c0_i32, %c0_i32_0 : i32, i32, i32
  }
}

module attributes {stable_mosaic.version = 11 : i64} {
  func.func @_duration_kernel(%arg0: i32, %arg1: memref<1x8x32xbf16, #tpu.memory_space<vmem>>, %arg2: memref<96x32xbf16, #tpu.memory_space<vmem>>, %arg3: memref<1x32xf32, #tpu.memory_space<vmem>>, %arg4: memref<1x32xf32, #tpu.memory_space<vmem>>, %arg5: memref<1x32xf32, #tpu.memory_space<vmem>>, %arg6: memref<96x32xbf16, #tpu.memory_space<vmem>>, %arg7: memref<1x32xf32, #tpu.memory_space<vmem>>, %arg8: memref<1x32xf32, #tpu.memory_space<vmem>>, %arg9: memref<1x32xf32, #tpu.memory_space<vmem>>, %arg10: memref<32x128xbf16, #tpu.memory_space<vmem>>, %arg11: memref<1x128xf32, #tpu.memory_space<vmem>>, %arg12: memref<1x8x128xf32, #tpu.memory_space<vmem>>) attributes {dimension_semantics = [#tpu.dimension_semantics<parallel>], iteration_bounds = array<i64: 2>, scalar_prefetch = 0 : i64, scratch_operands = 0 : i64, tpu.core_type = #tpu.core_type<tc>, window_params = [{transform_indices = @transform_0, window_bounds = array<i64: 1, 8, 32>}, {pipeline_mode = #tpu.pipeline_mode<synchronous>, transform_indices = @transform_1, window_bounds = array<i64: 96, 32>}, {pipeline_mode = #tpu.pipeline_mode<synchronous>, transform_indices = @transform_2, window_bounds = array<i64: 1, 32>}, {pipeline_mode = #tpu.pipeline_mode<synchronous>, transform_indices = @transform_3, window_bounds = array<i64: 1, 32>}, {pipeline_mode = #tpu.pipeline_mode<synchronous>, transform_indices = @transform_4, window_bounds = array<i64: 1, 32>}, {pipeline_mode = #tpu.pipeline_mode<synchronous>, transform_indices = @transform_5, window_bounds = array<i64: 96, 32>}, {pipeline_mode = #tpu.pipeline_mode<synchronous>, transform_indices = @transform_6, window_bounds = array<i64: 1, 32>}, {pipeline_mode = #tpu.pipeline_mode<synchronous>, transform_indices = @transform_7, window_bounds = array<i64: 1, 32>}, {pipeline_mode = #tpu.pipeline_mode<synchronous>, transform_indices = @transform_8, window_bounds = array<i64: 1, 32>}, {pipeline_mode = #tpu.pipeline_mode<synchronous>, transform_indices = @transform_9, window_bounds = array<i64: 32, 128>}, {pipeline_mode = #tpu.pipeline_mode<synchronous>, transform_indices = @transform_10, window_bounds = array<i64: 1, 128>}, {transform_indices = @transform_11, window_bounds = array<i64: 1, 8, 128>}]} {
    %c0 = arith.constant 0 : index
    %c0_0 = arith.constant 0 : index
    %c0_1 = arith.constant 0 : index
    %0 = vector.load %arg1[%c0, %c0_0, %c0_1] : memref<1x8x32xbf16, #tpu.memory_space<vmem>>, vector<1x8x32xbf16>
    %1 = vector.shape_cast %0 : vector<1x8x32xbf16> to vector<8x32xbf16>
    %c0_2 = arith.constant 0 : index
    %c0_3 = arith.constant 0 : index
    %2 = vector.load %arg2[%c0_2, %c0_3] : memref<96x32xbf16, #tpu.memory_space<vmem>>, vector<96x32xbf16>
    %c0_4 = arith.constant 0 : index
    %c0_5 = arith.constant 0 : index
    %3 = vector.load %arg3[%c0_4, %c0_5] : memref<1x32xf32, #tpu.memory_space<vmem>>, vector<1x32xf32>
    %cst = arith.constant 0.000000e+00 : bf16
    %4 = vector.broadcast %cst : bf16 to vector<1x32xbf16>
    %5 = vector.extract_strided_slice %1 {offsets = [0, 0], sizes = [7, 32], strides = [1, 1]} : vector<8x32xbf16> to vector<7x32xbf16>
    %6 = tpu.concatenate %4, %5 in 0 : vector<1x32xbf16>, vector<7x32xbf16> -> vector<8x32xbf16>
    %cst_6 = arith.constant 0.000000e+00 : bf16
    %7 = vector.broadcast %cst_6 : bf16 to vector<1x32xbf16>
    %8 = vector.extract_strided_slice %1 {offsets = [1, 0], sizes = [7, 32], strides = [1, 1]} : vector<8x32xbf16> to vector<7x32xbf16>
    %9 = tpu.concatenate %8, %7 in 0 : vector<7x32xbf16>, vector<1x32xbf16> -> vector<8x32xbf16>
    %10 = tpu.concatenate %6, %1, %9 in 1 : vector<8x32xbf16>, vector<8x32xbf16>, vector<8x32xbf16> -> vector<8x96xbf16>
    %cst_7 = arith.constant dense<0.000000e+00> : vector<8x32xf32>
    %11 = tpu.matmul %10, %2, %cst_7 {dimension_numbers = #tpu.dot_dimension_numbers<[1], [0], [0], [1], [0, 0, 1, 1], [], []>} : vector<8x96xbf16>, vector<96x32xbf16>, vector<8x32xf32> -> vector<8x32xf32>
    %12 = vector.broadcast %3 : vector<1x32xf32> to vector<8x32xf32>
    %13 = arith.addf %11, %12 : vector<8x32xf32>
    %cst_8 = arith.constant 0.000000e+00 : f32
    %14 = vector.broadcast %cst_8 : f32 to vector<8x32xf32>
    %15 = arith.maximumf %13, %14 : vector<8x32xf32>
    %c0_9 = arith.constant 0 : index
    %c0_10 = arith.constant 0 : index
    %16 = vector.load %arg4[%c0_9, %c0_10] : memref<1x32xf32, #tpu.memory_space<vmem>>, vector<1x32xf32>
    %c0_11 = arith.constant 0 : index
    %c0_12 = arith.constant 0 : index
    %17 = vector.load %arg5[%c0_11, %c0_12] : memref<1x32xf32, #tpu.memory_space<vmem>>, vector<1x32xf32>
    %cst_13 = arith.constant dense<0.000000e+00> : vector<8xf32>
    %18 = vector.multi_reduction <add>, %15, %cst_13 [1] : vector<8x32xf32> to vector<8xf32>
    %19 = vector.shape_cast %18 : vector<8xf32> to vector<8x1xf32>
    %cst_14 = arith.constant 3.200000e+01 : f32
    %20 = vector.broadcast %cst_14 : f32 to vector<8x1xf32>
    %21 = arith.divf %19, %20 : vector<8x1xf32>
    %22 = arith.mulf %15, %15 : vector<8x32xf32>
    %cst_15 = arith.constant dense<0.000000e+00> : vector<8xf32>
    %23 = vector.multi_reduction <add>, %22, %cst_15 [1] : vector<8x32xf32> to vector<8xf32>
    %24 = vector.shape_cast %23 : vector<8xf32> to vector<8x1xf32>
    %cst_16 = arith.constant 3.200000e+01 : f32
    %25 = vector.broadcast %cst_16 : f32 to vector<8x1xf32>
    %26 = arith.divf %24, %25 : vector<8x1xf32>
    %27 = arith.mulf %21, %21 : vector<8x1xf32>
    %28 = arith.subf %26, %27 : vector<8x1xf32>
    %29 = vector.broadcast %21 : vector<8x1xf32> to vector<8x32xf32>
    %30 = arith.subf %15, %29 : vector<8x32xf32>
    %cst_17 = arith.constant 9.99999974E-6 : f32
    %31 = vector.broadcast %cst_17 : f32 to vector<8x1xf32>
    %32 = arith.addf %28, %31 : vector<8x1xf32>
    %33 = math.rsqrt %32 : vector<8x1xf32>
    %34 = vector.broadcast %33 : vector<8x1xf32> to vector<8x32xf32>
    %35 = arith.mulf %30, %34 : vector<8x32xf32>
    %36 = vector.broadcast %16 : vector<1x32xf32> to vector<8x32xf32>
    %37 = arith.mulf %35, %36 : vector<8x32xf32>
    %38 = vector.broadcast %17 : vector<1x32xf32> to vector<8x32xf32>
    %39 = arith.addf %37, %38 : vector<8x32xf32>
    %40 = arith.truncf %39 : vector<8x32xf32> to vector<8x32xbf16>
    %c0_18 = arith.constant 0 : index
    %c0_19 = arith.constant 0 : index
    %41 = vector.load %arg6[%c0_18, %c0_19] : memref<96x32xbf16, #tpu.memory_space<vmem>>, vector<96x32xbf16>
    %c0_20 = arith.constant 0 : index
    %c0_21 = arith.constant 0 : index
    %42 = vector.load %arg7[%c0_20, %c0_21] : memref<1x32xf32, #tpu.memory_space<vmem>>, vector<1x32xf32>
    %cst_22 = arith.constant 0.000000e+00 : bf16
    %43 = vector.broadcast %cst_22 : bf16 to vector<1x32xbf16>
    %44 = vector.extract_strided_slice %40 {offsets = [0, 0], sizes = [7, 32], strides = [1, 1]} : vector<8x32xbf16> to vector<7x32xbf16>
    %45 = tpu.concatenate %43, %44 in 0 : vector<1x32xbf16>, vector<7x32xbf16> -> vector<8x32xbf16>
    %cst_23 = arith.constant 0.000000e+00 : bf16
    %46 = vector.broadcast %cst_23 : bf16 to vector<1x32xbf16>
    %47 = vector.extract_strided_slice %40 {offsets = [1, 0], sizes = [7, 32], strides = [1, 1]} : vector<8x32xbf16> to vector<7x32xbf16>
    %48 = tpu.concatenate %47, %46 in 0 : vector<7x32xbf16>, vector<1x32xbf16> -> vector<8x32xbf16>
    %49 = tpu.concatenate %45, %40, %48 in 1 : vector<8x32xbf16>, vector<8x32xbf16>, vector<8x32xbf16> -> vector<8x96xbf16>
    %cst_24 = arith.constant dense<0.000000e+00> : vector<8x32xf32>
    %50 = tpu.matmul %49, %41, %cst_24 {dimension_numbers = #tpu.dot_dimension_numbers<[1], [0], [0], [1], [0, 0, 1, 1], [], []>} : vector<8x96xbf16>, vector<96x32xbf16>, vector<8x32xf32> -> vector<8x32xf32>
    %51 = vector.broadcast %42 : vector<1x32xf32> to vector<8x32xf32>
    %52 = arith.addf %50, %51 : vector<8x32xf32>
    %cst_25 = arith.constant 0.000000e+00 : f32
    %53 = vector.broadcast %cst_25 : f32 to vector<8x32xf32>
    %54 = arith.maximumf %52, %53 : vector<8x32xf32>
    %c0_26 = arith.constant 0 : index
    %c0_27 = arith.constant 0 : index
    %55 = vector.load %arg8[%c0_26, %c0_27] : memref<1x32xf32, #tpu.memory_space<vmem>>, vector<1x32xf32>
    %c0_28 = arith.constant 0 : index
    %c0_29 = arith.constant 0 : index
    %56 = vector.load %arg9[%c0_28, %c0_29] : memref<1x32xf32, #tpu.memory_space<vmem>>, vector<1x32xf32>
    %cst_30 = arith.constant dense<0.000000e+00> : vector<8xf32>
    %57 = vector.multi_reduction <add>, %54, %cst_30 [1] : vector<8x32xf32> to vector<8xf32>
    %58 = vector.shape_cast %57 : vector<8xf32> to vector<8x1xf32>
    %cst_31 = arith.constant 3.200000e+01 : f32
    %59 = vector.broadcast %cst_31 : f32 to vector<8x1xf32>
    %60 = arith.divf %58, %59 : vector<8x1xf32>
    %61 = arith.mulf %54, %54 : vector<8x32xf32>
    %cst_32 = arith.constant dense<0.000000e+00> : vector<8xf32>
    %62 = vector.multi_reduction <add>, %61, %cst_32 [1] : vector<8x32xf32> to vector<8xf32>
    %63 = vector.shape_cast %62 : vector<8xf32> to vector<8x1xf32>
    %cst_33 = arith.constant 3.200000e+01 : f32
    %64 = vector.broadcast %cst_33 : f32 to vector<8x1xf32>
    %65 = arith.divf %63, %64 : vector<8x1xf32>
    %66 = arith.mulf %60, %60 : vector<8x1xf32>
    %67 = arith.subf %65, %66 : vector<8x1xf32>
    %68 = vector.broadcast %60 : vector<8x1xf32> to vector<8x32xf32>
    %69 = arith.subf %54, %68 : vector<8x32xf32>
    %cst_34 = arith.constant 9.99999974E-6 : f32
    %70 = vector.broadcast %cst_34 : f32 to vector<8x1xf32>
    %71 = arith.addf %67, %70 : vector<8x1xf32>
    %72 = math.rsqrt %71 : vector<8x1xf32>
    %73 = vector.broadcast %72 : vector<8x1xf32> to vector<8x32xf32>
    %74 = arith.mulf %69, %73 : vector<8x32xf32>
    %75 = vector.broadcast %55 : vector<1x32xf32> to vector<8x32xf32>
    %76 = arith.mulf %74, %75 : vector<8x32xf32>
    %77 = vector.broadcast %56 : vector<1x32xf32> to vector<8x32xf32>
    %78 = arith.addf %76, %77 : vector<8x32xf32>
    %79 = arith.truncf %78 : vector<8x32xf32> to vector<8x32xbf16>
    %c0_35 = arith.constant 0 : index
    %c0_36 = arith.constant 0 : index
    %80 = vector.load %arg10[%c0_35, %c0_36] : memref<32x128xbf16, #tpu.memory_space<vmem>>, vector<32x128xbf16>
    %cst_37 = arith.constant dense<0.000000e+00> : vector<8x128xf32>
    %81 = tpu.matmul %79, %80, %cst_37 {dimension_numbers = #tpu.dot_dimension_numbers<[1], [0], [0], [1], [0, 0, 1, 1], [], []>} : vector<8x32xbf16>, vector<32x128xbf16>, vector<8x128xf32> -> vector<8x128xf32>
    %c0_38 = arith.constant 0 : index
    %c0_39 = arith.constant 0 : index
    %82 = vector.load %arg11[%c0_38, %c0_39] : memref<1x128xf32, #tpu.memory_space<vmem>>, vector<1x128xf32>
    %83 = vector.broadcast %82 : vector<1x128xf32> to vector<8x128xf32>
    %84 = arith.addf %81, %83 : vector<8x128xf32>
    %c0_40 = arith.constant 0 : index
    %c0_41 = arith.constant 0 : index
    %c0_42 = arith.constant 0 : index
    %85 = vector.load %arg12[%c0_40, %c0_41, %c0_42] : memref<1x8x128xf32, #tpu.memory_space<vmem>>, vector<1x8x128xf32>
    %86 = vector.shape_cast %85 : vector<1x8x128xf32> to vector<8x128xf32>
    %87 = vector.shape_cast %84 : vector<8x128xf32> to vector<1x8x128xf32>
    tpu.vector_store %arg12[%c0_40, %c0_41, %c0_42], %87 {strides = array<i32>} : memref<1x8x128xf32, #tpu.memory_space<vmem>>, vector<1x8x128xf32>,
    return
  }
  func.func @transform_0(%arg0: i32) -> (i32, i32, i32) {
    %c0_i32 = arith.constant 0 : i32
    %c0_i32_0 = arith.constant 0 : i32
    %c0_i32_1 = arith.constant 0 : i32
    return %arg0, %c0_i32, %c0_i32_0 : i32, i32, i32
  }
  func.func @transform_1(%arg0: i32) -> (i32, i32) {
    %c0_i32 = arith.constant 0 : i32
    %c0_i32_0 = arith.constant 0 : i32
    %c0_i32_1 = arith.constant 0 : i32
    return %c0_i32, %c0_i32_0 : i32, i32
  }
  func.func @transform_2(%arg0: i32) -> (i32, i32) {
    %c0_i32 = arith.constant 0 : i32
    %c0_i32_0 = arith.constant 0 : i32
    %c0_i32_1 = arith.constant 0 : i32
    return %c0_i32, %c0_i32_0 : i32, i32
  }
  func.func @transform_3(%arg0: i32) -> (i32, i32) {
    %c0_i32 = arith.constant 0 : i32
    %c0_i32_0 = arith.constant 0 : i32
    %c0_i32_1 = arith.constant 0 : i32
    return %c0_i32, %c0_i32_0 : i32, i32
  }
  func.func @transform_4(%arg0: i32) -> (i32, i32) {
    %c0_i32 = arith.constant 0 : i32
    %c0_i32_0 = arith.constant 0 : i32
    %c0_i32_1 = arith.constant 0 : i32
    return %c0_i32, %c0_i32_0 : i32, i32
  }
  func.func @transform_5(%arg0: i32) -> (i32, i32) {
    %c0_i32 = arith.constant 0 : i32
    %c0_i32_0 = arith.constant 0 : i32
    %c0_i32_1 = arith.constant 0 : i32
    return %c0_i32, %c0_i32_0 : i32, i32
  }
  func.func @transform_6(%arg0: i32) -> (i32, i32) {
    %c0_i32 = arith.constant 0 : i32
    %c0_i32_0 = arith.constant 0 : i32
    %c0_i32_1 = arith.constant 0 : i32
    return %c0_i32, %c0_i32_0 : i32, i32
  }
  func.func @transform_7(%arg0: i32) -> (i32, i32) {
    %c0_i32 = arith.constant 0 : i32
    %c0_i32_0 = arith.constant 0 : i32
    %c0_i32_1 = arith.constant 0 : i32
    return %c0_i32, %c0_i32_0 : i32, i32
  }
  func.func @transform_8(%arg0: i32) -> (i32, i32) {
    %c0_i32 = arith.constant 0 : i32
    %c0_i32_0 = arith.constant 0 : i32
    %c0_i32_1 = arith.constant 0 : i32
    return %c0_i32, %c0_i32_0 : i32, i32
  }
  func.func @transform_9(%arg0: i32) -> (i32, i32) {
    %c0_i32 = arith.constant 0 : i32
    %c0_i32_0 = arith.constant 0 : i32
    %c0_i32_1 = arith.constant 0 : i32
    return %c0_i32, %c0_i32_0 : i32, i32
  }
  func.func @transform_10(%arg0: i32) -> (i32, i32) {
    %c0_i32 = arith.constant 0 : i32
    %c0_i32_0 = arith.constant 0 : i32
    %c0_i32_1 = arith.constant 0 : i32
    return %c0_i32, %c0_i32_0 : i32, i32
  }
  func.func @transform_11(%arg0: i32) -> (i32, i32, i32) {
    %c0_i32 = arith.constant 0 : i32
    %c0_i32_0 = arith.constant 0 : i32
    %c0_i32_1 = arith.constant 0 : i32
    return %arg0, %c0_i32, %c0_i32_0 : i32, i32, i32
  }
}

</mosaic_0001>

<llo_original>
// kernel: tpu_custom_call.1
$region0: #{tpu_custom_call.1}
  #allocation0 [shape = 'u32[]', space=smem, size = 0x4, offset = 0x4, fixed_abs, tag = 'smem constant byte address 0x4 - core index']
  #allocation1 [shape = 'u32[72,128]{1,0:T(1,128)}', space=vmem, size = 0x9000, scoped, tag = 'internal scratch']
  %s0 = inlined_call_operand.hbm [shape: f32[8,128], index: 0, kind: input, shape index: {}]
  %s1 = inlined_call_operand.hbm [shape: f32[8,128], index: 1, kind: input, shape index: {}]
  %s2 = inlined_call_operand.hbm [shape: f32[8,128], index: 2, kind: output, shape index: {}]
  %s3 = sld [smem:[#allocation0]]
  $region49: #{tpu_custom_call.1} parent=0
    _
  %s5 = ssub.s32 1, %s3
  %s6 = scalar_select 0, %s5, %s3
  $region1: #{tpu_custom_call.1} parent=0
    #allocation2 [shape = 'u8[4096]{0}', space=vmem, size = 0x1000, scoped, tag = 'input window, operand 0, single buffered']
    #allocation3 [shape = 's32[2]{0}', space=sflag, size = 0x8, scoped, tag = 'scoped memory for tpu_custom_call.1']
    #allocation4 [shape = 's32[2]{0}', space=sflag, size = 0x8, scoped, tag = 'scoped memory for tpu_custom_call.1']
    #allocation5 [shape = 'u8[4096]{0}', space=vmem, size = 0x1000, scoped, tag = 'input window, operand 1, single buffered']
    #allocation6 [shape = 's32[1]{0}', space=sflag, size = 0x4, scoped, tag = 'scoped memory for tpu_custom_call.1']
    #allocation7 [shape = 'u8[4096]{0}', space=vmem, size = 0x1000, scoped, tag = 'output window, operand 0, single buffered']
    %7 = vsyncpa [#allocation3], 0
    %8 = vsyncpa [#allocation6], 0
    %9 = vsyncpa [#allocation4], 0
    loop: start=0, step=1, limit=4
    $region2: #{tpu_custom_call.1} parent=1 // loop_pre_header
      _
    $region3: #{tpu_custom_call.1} parent=1 // loop_header
      %s11 = sphi 0, %s15
      %p12 = scmp.ge.s32.totalorder %s11, 4
      %s19 = sphi 0, %s19
      %s21 = sphi 0, %s19
      %s22 = sphi 0, %s21
      %s36 = sphi 0, %s22
      %s40 = sphi 0, %s40
      %s42 = sphi 0, %s40
      %s43 = sphi 0, %s42
      %s57 = sphi 0, %s43
      %s61 = sphi 0, %s61
      %s63 = sphi 0, %s61
      %s64 = sphi 0, %s63
      %s78 = sphi 0, %s64
    $region4: #{tpu_custom_call.1} parent=1 // loop_header_branch
      %14 = sbr.rel (%p12) target = $region8
    $region5: #{tpu_custom_call.1} parent=1 // loop_body
      %s16 = ssub.s32 %s11, 1
      %s17 = ssub.s32 %s11, 2
      %s18 = sadd.s32 %s11, 1
      %s20 = sadd.s32 %s19, 1
      %p23 = scmp.eq.s32.totalorder %s11, 1
      %p24 = scmp.ne.s32.totalorder %s19, %s21
      %p25 = scmp.eq.s32.totalorder %s11, 0
      %p26 = por %p24, %p25
      %p27 = scmp.ne.s32.totalorder %s19, %s21
      %p28 = scmp.eq.s32.totalorder %s16, 1
      %p29 = por %p27, %p28
      %p30 = scmp.ne.s32.totalorder %s21, %s22
      %p31 = scmp.eq.s32.totalorder %s16, 0
      %p32 = por %p30, %p31
      %p33 = scmp.ne.s32.totalorder %s21, %s22
      %p34 = scmp.eq.s32.totalorder %s17, 1
      %p35 = por %p33, %p34
      %p37 = scmp.ne.s32.totalorder %s22, %s36
      %p38 = scmp.eq.s32.totalorder %s17, 0
      %p39 = por %p37, %p38
      %s41 = sadd.s32 %s40, 1
      %p44 = scmp.eq.s32.totalorder %s11, 1
      %p45 = scmp.ne.s32.totalorder %s40, %s42
      %p46 = scmp.eq.s32.totalorder %s11, 0
      %p47 = por %p45, %p46
      %p48 = scmp.ne.s32.totalorder %s40, %s42
      %p49 = scmp.eq.s32.totalorder %s16, 1
      %p50 = por %p48, %p49
      %p51 = scmp.ne.s32.totalorder %s42, %s43
      %p52 = scmp.eq.s32.totalorder %s16, 0
      %p53 = por %p51, %p52
      %p54 = scmp.ne.s32.totalorder %s42, %s43
      %p55 = scmp.eq.s32.totalorder %s17, 1
      %p56 = por %p54, %p55
      %p58 = scmp.ne.s32.totalorder %s43, %s57
      %p59 = scmp.eq.s32.totalorder %s17, 0
      %p60 = por %p58, %p59
      %s62 = sadd.s32 %s61, 1
      %p65 = scmp.eq.s32.totalorder %s11, 1
      %p66 = scmp.ne.s32.totalorder %s61, %s63
      %p67 = scmp.eq.s32.totalorder %s11, 0
      %p68 = por %p66, %p67
      %p69 = scmp.ne.s32.totalorder %s61, %s63
      %p70 = scmp.eq.s32.totalorder %s16, 1
      %p71 = por %p69, %p70
      %p72 = scmp.ne.s32.totalorder %s63, %s64
      %p73 = scmp.eq.s32.totalorder %s16, 0
      %p74 = por %p72, %p73
      %p75 = scmp.ne.s32.totalorder %s63, %s64
      %p76 = scmp.eq.s32.totalorder %s17, 1
      %p77 = por %p75, %p76
      %p79 = scmp.ne.s32.totalorder %s64, %s78
      %p80 = scmp.eq.s32.totalorder %s17, 0
      %p81 = por %p79, %p80
      %p82 = scmp.le.s32.totalorder 1, %s11
      %p83 = scmp.lt.s32.totalorder %s11, 3
      %p84 = pnand %p82, %p83
      %p85 = pneg %p84
      // Predicated region
      $region9: #{tpu_custom_call.1} parent=5 // pred_check
        _
      $region10: #{tpu_custom_call.1} parent=5 // pred_check_branch
        %87 = sbr.rel (%p84) target = $region12
      $region11: #{tpu_custom_call.1} parent=5 // pred_region
        %s88 = ssub.s32 %s11, 1
        // Predicated region
        $region13: #{tpu_custom_call.1} parent=11 // pred_check
          %p89 = pneg %p32
        $region14: #{tpu_custom_call.1} parent=11 // pred_check_branch
          %91 = sbr.rel (%p89) target = $region16
        $region15: #{tpu_custom_call.1} parent=11 // pred_region
          %93 = vsyncadd [#allocation3], 0
          %s95 = sshll.u32 %s0, 4
          %s96 = int_to_ptr.hbm [resolvable:$true] %s95
          %s97 = sshll.u32 [#allocation2], 4
          %s98 = int_to_ptr.vmem [resolvable:$true] %s97
          %100 = dma.hbm_to_vmem [thread:$0]  %s96, 128, %s98, [#allocation3]
        $region16: #{tpu_custom_call.1} parent=11 // pred_fallthru
          _
        // Predicated region
        $region17: #{tpu_custom_call.1} parent=11 // pred_check
          %p101 = pneg %p53
        $region18: #{tpu_custom_call.1} parent=11 // pred_check_branch
          %103 = sbr.rel (%p101) target = $region20
        $region19: #{tpu_custom_call.1} parent=11 // pred_region
          %105 = vsyncadd [#allocation6], 0
          %s107 = sshll.u32 %s1, 4
          %s108 = int_to_ptr.hbm [resolvable:$true] %s107
          %s109 = sshll.u32 [#allocation5], 4
          %s110 = int_to_ptr.vmem [resolvable:$true] %s109
          %112 = dma.hbm_to_vmem [thread:$0]  %s108, 128, %s110, [#allocation6]
        $region20: #{tpu_custom_call.1} parent=11 // pred_fallthru
          _
      $region12: #{tpu_custom_call.1} parent=5 // pred_fallthru
        _
      %p113 = scmp.lt.s32.totalorder %s11, 2
      // Predicated region
      $region21: #{tpu_custom_call.1} parent=5 // pred_check
        %p114 = pneg %p113
      $region22: #{tpu_custom_call.1} parent=5 // pred_check_branch
        %116 = sbr.rel (%p114) target = $region24
      $region23: #{tpu_custom_call.1} parent=5 // pred_region
        _
      $region24: #{tpu_custom_call.1} parent=5 // pred_fallthru
        _
      %p117 = scmp.le.s32.totalorder 1, %s11
      %p118 = scmp.lt.s32.totalorder %s11, 3
      %p119 = pnand %p117, %p118
      %p120 = pneg %p119
      // Predicated region
      $region25: #{tpu_custom_call.1} parent=5 // pred_check
        _
      $region26: #{tpu_custom_call.1} parent=5 // pred_check_branch
        %122 = sbr.rel (%p119) target = $region28
      $region27: #{tpu_custom_call.1} parent=5 // pred_region
        %s123 = ssub.s32 %s11, 1
        // Predicated region
        $region29: #{tpu_custom_call.1} parent=27 // pred_check
          %p124 = pneg %p32
        $region30: #{tpu_custom_call.1} parent=27 // pred_check_branch
          %126 = sbr.rel (%p124) target = $region32
        $region31: #{tpu_custom_call.1} parent=27 // pred_region
          %128 = dma.done [#allocation3], 128
        $region32: #{tpu_custom_call.1} parent=27 // pred_fallthru
          _
        // Predicated region
        $region33: #{tpu_custom_call.1} parent=27 // pred_check
          %p129 = pneg %p53
        $region34: #{tpu_custom_call.1} parent=27 // pred_check_branch
          %131 = sbr.rel (%p129) target = $region36
        $region35: #{tpu_custom_call.1} parent=27 // pred_region
          %133 = dma.done [#allocation6], 128
        $region36: #{tpu_custom_call.1} parent=27 // pred_fallthru
          _
        %p134 = pneg %p32
        %p135 = pneg %p29
        %p136 = pneg %p53
        %p137 = pneg %p50
        %p138 = pneg %p74
        %p139 = pneg %p71
        %v140 = vld [vmem:[#allocation2] sm:$0xff]
        %v141 = vld [vmem:[#allocation5] sm:$0xff]
        %v142 = vadd.f32 %v140, %v141
        %143 = vst [vmem:[#allocation7] sm:$0xff] %v142
        // Predicated region
        $region37: #{tpu_custom_call.1} parent=27 // pred_check
          %p144 = pneg %p71
        $region38: #{tpu_custom_call.1} parent=27 // pred_check_branch
          %146 = sbr.rel (%p144) target = $region40
        $region39: #{tpu_custom_call.1} parent=27 // pred_region
          %148 = vsyncadd [#allocation4], 0
          %s150 = sshll.u32 [#allocation7], 4
          %s151 = int_to_ptr.vmem [resolvable:$true] %s150
          %s152 = sshll.u32 %s2, 4
          %s153 = int_to_ptr.hbm [resolvable:$true] %s152
          %155 = dma.vmem_to_hbm [thread:$0]  %s151, 128, %s153, [#allocation4]
        $region40: #{tpu_custom_call.1} parent=27 // pred_fallthru
          _
        // Predicated region
        $region41: #{tpu_custom_call.1} parent=27 // pred_check
          %p156 = pneg %p71
        $region42: #{tpu_custom_call.1} parent=27 // pred_check_branch
          %158 = sbr.rel (%p156) target = $region44
        $region43: #{tpu_custom_call.1} parent=27 // pred_region
          %160 = dma.done [#allocation4], 128
        $region44: #{tpu_custom_call.1} parent=27 // pred_fallthru
          _
      $region28: #{tpu_custom_call.1} parent=5 // pred_fallthru
        _
      %p161 = scmp.le.s32.totalorder 2, %s11
      // Predicated region
      $region45: #{tpu_custom_call.1} parent=5 // pred_check
        %p162 = pneg %p161
      $region46: #{tpu_custom_call.1} parent=5 // pred_check_branch
        %164 = sbr.rel (%p162) target = $region48
      $region47: #{tpu_custom_call.1} parent=5 // pred_region
        %s165 = ssub.s32 %s11, 2
      $region48: #{tpu_custom_call.1} parent=5 // pred_fallthru
        _
    $region6: #{tpu_custom_call.1} parent=1 // loop_footer
      %s15 = sadd.s32 1, %s11
    $region7: #{tpu_custom_call.1} parent=1 // loop_footer_branch
      %10 = sbr.rel target = $region3
    $region8: #{tpu_custom_call.1} parent=1 // loop_exit
      _
    %166 = vsyncpa [#allocation3], 1
    %s167 = scalar_lea.sflag [#allocation3], 1
    %168 = vsyncpa %s167, 1
    %169 = vsyncpa [#allocation6], 1
    %170 = vsyncpa [#allocation4], 1
    %s171 = scalar_lea.sflag [#allocation4], 1
    %172 = vsyncpa %s171, 1

// kernel: custom-call.4
$region0: #{custom-call.4}
  %s0 = inlined_call_operand.vmem [shape: u32[2,24], index: 0, kind: output, shape index: {}]

// kernel: squeeze.8
$region0: #{squeeze.8}
  %s0 = inlined_call_operand.vmem [shape: s32[48], index: 0, kind: input, shape index: {}]
  %s1 = inlined_call_operand.vmem [shape: s32[2,24], index: 1, kind: output, shape index: {}]
  $region1: #{squeeze.8} parent=0
    #allocation0 [shape = 'u8[4096]{0}', space=vmem, size = 0x1000, scoped, tag = 'scoped mem for output reshape']
    #allocation1 [shape = 'u8[4096]{0}', space=vmem, size = 0x1000, scoped, tag = 'scoped mem for input reshape']
    %s3 = ssub.s32 2, 1
    %v4 = vld [vmem:[%s0] sm:%s3]
    %5 = vst [vmem:[#allocation1] sm:%s3] %v4
    %v6 = vld [vmem:[#allocation1] sm:$0x1]
    %vm7 = vcmask 195584
    %8 = vst.msk [vmem:[#allocation0] sm:$0x1] %vm7, %v6
    %v9 = vld [vmem:[#allocation1] sm:$0x1]
    %10 = vrot.lane.b32.xlu0 %v9, 104
    %v11 = vpop.permute.xlu0 %10
    %vm12 = vcmask 195584
    %s13 = scalar_lea.vmem [#allocation0], 1
    %14 = vst.msk [vmem:[%s13] sm:$0x1] %vm12, %v11
    %s16 = ssub.s32 4, 1
    %v17 = vld [vmem:[#allocation0] sm:%s16]
    %s19 = ssub.s32 4, 1
    %20 = vst [vmem:[%s1] sm:%s19] %v17

// kernel: fastspeech_forward.3
$region0: #{fastspeech_forward.3}
  #allocation0 [shape = 'u32[]', space=smem, size = 0x4, offset = 0x4, fixed_abs, tag = 'smem constant byte address 0x4 - core index']
  #allocation1 [shape = 'u32[72,128]{1,0:T(1,128)}', space=vmem, size = 0x9000, scoped, tag = 'internal scratch']
  #allocation2 [shape = 'f32[8,32]{1,0:T(8,128)}', space=vmem, size = 0x1000, scoped, tag = 'scratch operand']
  %s0 = inlined_call_operand.vmem [shape: bf16[2,8,32], index: 0, kind: input, shape index: {}]
  %s1 = inlined_call_operand.vmem [shape: bf16[32,32], index: 1, kind: input, shape index: {}]
  %s2 = inlined_call_operand.vmem [shape: f32[1,32], index: 2, kind: input, shape index: {}]
  %s3 = inlined_call_operand.vmem [shape: bf16[32,32], index: 3, kind: input, shape index: {}]
  %s4 = inlined_call_operand.vmem [shape: f32[1,32], index: 4, kind: input, shape index: {}]
  %s5 = inlined_call_operand.vmem [shape: bf16[32,32], index: 5, kind: input, shape index: {}]
  %s6 = inlined_call_operand.vmem [shape: f32[1,32], index: 6, kind: input, shape index: {}]
  %s7 = inlined_call_operand.vmem [shape: bf16[32,32], index: 7, kind: input, shape index: {}]
  %s8 = inlined_call_operand.vmem [shape: f32[1,32], index: 8, kind: input, shape index: {}]
  %s9 = inlined_call_operand.vmem [shape: f32[1,32], index: 9, kind: input, shape index: {}]
  %s10 = inlined_call_operand.vmem [shape: f32[1,32], index: 10, kind: input, shape index: {}]
  %s11 = inlined_call_operand.vmem [shape: bf16[96,64], index: 11, kind: input, shape index: {}]
  %s12 = inlined_call_operand.vmem [shape: f32[1,64], index: 12, kind: input, shape index: {}]
  %s13 = inlined_call_operand.vmem [shape: bf16[192,32], index: 13, kind: input, shape index: {}]
  %s14 = inlined_call_operand.vmem [shape: f32[1,32], index: 14, kind: input, shape index: {}]
  %s15 = inlined_call_operand.vmem [shape: f32[1,32], index: 15, kind: input, shape index: {}]
  %s16 = inlined_call_operand.vmem [shape: f32[1,32], index: 16, kind: input, shape index: {}]
  %s17 = inlined_call_operand.vmem [shape: bf16[2,8,32], index: 17, kind: output, shape index: {}]
  %s18 = sld [smem:[#allocation0]]
  $region101: #{fastspeech_forward.3} parent=0
    _
  %s20 = ssub.s32 1, %s18
  %s21 = scalar_select 0, %s20, %s18
  loop: start=0, step=1, limit=4
  $region2: #{fastspeech_forward.3} parent=0 // loop_pre_header
    _
  $region3: #{fastspeech_forward.3} parent=0 // loop_header
    %s23 = sphi 0, %s27
    %p24 = scmp.ge.s32.totalorder %s23, 4
    %s33 = sphi 0, %s35
    %s36 = sphi 0, %s33
    %s37 = sphi 0, %s36
    %s53 = sphi 0, %s37
    %s57 = sphi 0, %s57
    %s59 = sphi 0, %s57
    %s60 = sphi 0, %s59
    %s74 = sphi 0, %s60
    %s78 = sphi 0, %s78
    %s80 = sphi 0, %s78
    %s81 = sphi 0, %s80
    %s95 = sphi 0, %s81
    %s99 = sphi 0, %s99
    %s101 = sphi 0, %s99
    %s102 = sphi 0, %s101
    %s116 = sphi 0, %s102
    %s120 = sphi 0, %s120
    %s122 = sphi 0, %s120
    %s123 = sphi 0, %s122
    %s137 = sphi 0, %s123
    %s141 = sphi 0, %s141
    %s143 = sphi 0, %s141
    %s144 = sphi 0, %s143
    %s158 = sphi 0, %s144
    %s162 = sphi 0, %s162
    %s164 = sphi 0, %s162
    %s165 = sphi 0, %s164
    %s179 = sphi 0, %s165
    %s183 = sphi 0, %s183
    %s185 = sphi 0, %s183
    %s186 = sphi 0, %s185
    %s200 = sphi 0, %s186
    %s204 = sphi 0, %s204
    %s206 = sphi 0, %s204
    %s207 = sphi 0, %s206
    %s221 = sphi 0, %s207
    %s225 = sphi 0, %s225
    %s227 = sphi 0, %s225
    %s228 = sphi 0, %s227
    %s242 = sphi 0, %s228
    %s246 = sphi 0, %s246
    %s248 = sphi 0, %s246
    %s249 = sphi 0, %s248
    %s263 = sphi 0, %s249
    %s267 = sphi 0, %s267
    %s269 = sphi 0, %s267
    %s270 = sphi 0, %s269
    %s284 = sphi 0, %s270
    %s288 = sphi 0, %s288
    %s290 = sphi 0, %s288
    %s291 = sphi 0, %s290
    %s305 = sphi 0, %s291
    %s309 = sphi 0, %s309
    %s311 = sphi 0, %s309
    %s312 = sphi 0, %s311
    %s326 = sphi 0, %s312
    %s330 = sphi 0, %s330
    %s332 = sphi 0, %s330
    %s333 = sphi 0, %s332
    %s347 = sphi 0, %s333
    %s351 = sphi 0, %s351
    %s353 = sphi 0, %s351
    %s354 = sphi 0, %s353
    %s368 = sphi 0, %s354
    %s372 = sphi 0, %s372
    %s374 = sphi 0, %s372
    %s375 = sphi 0, %s374
    %s389 = sphi 0, %s375
    %s395 = sphi 0, %s397
    %s398 = sphi 0, %s395
    %s399 = sphi 0, %s398
    %s415 = sphi 0, %s399
  $region4: #{fastspeech_forward.3} parent=0 // loop_header_branch
    %26 = sbr.rel (%p24) target = $region8
  $region5: #{fastspeech_forward.3} parent=0 // loop_body
    %s28 = ssub.s32 %s23, 1
    %s29 = ssub.s32 %s23, 2
    %s30 = sadd.s32 %s23, 1
    %s31 = ssub.s32 %s23, %s30
    %p32 = scmp.eq.s32.totalorder %s31, 0
    %s34 = sadd.s32 %s33, 1
    %s35 = scalar_select %p32, %s33, %s34
    %p38 = pneg %p32
    %p39 = scmp.eq.s32.totalorder %s23, 1
    %p40 = por %p38, %p39
    %p41 = scmp.ne.s32.totalorder %s33, %s36
    %p42 = scmp.eq.s32.totalorder %s23, 0
    %p43 = por %p41, %p42
    %p44 = scmp.ne.s32.totalorder %s33, %s36
    %p45 = scmp.eq.s32.totalorder %s28, 1
    %p46 = por %p44, %p45
    %p47 = scmp.ne.s32.totalorder %s36, %s37
    %p48 = scmp.eq.s32.totalorder %s28, 0
    %p49 = por %p47, %p48
    %p50 = scmp.ne.s32.totalorder %s36, %s37
    %p51 = scmp.eq.s32.totalorder %s29, 1
    %p52 = por %p50, %p51
    %p54 = scmp.ne.s32.totalorder %s37, %s53
    %p55 = scmp.eq.s32.totalorder %s29, 0
    %p56 = por %p54, %p55
    %s58 = sadd.s32 %s57, 1
    %p61 = scmp.eq.s32.totalorder %s23, 1
    %p62 = scmp.ne.s32.totalorder %s57, %s59
    %p63 = scmp.eq.s32.totalorder %s23, 0
    %p64 = por %p62, %p63
    %p65 = scmp.ne.s32.totalorder %s57, %s59
    %p66 = scmp.eq.s32.totalorder %s28, 1
    %p67 = por %p65, %p66
    %p68 = scmp.ne.s32.totalorder %s59, %s60
    %p69 = scmp.eq.s32.totalorder %s28, 0
    %p70 = por %p68, %p69
    %p71 = scmp.ne.s32.totalorder %s59, %s60
    %p72 = scmp.eq.s32.totalorder %s29, 1
    %p73 = por %p71, %p72
    %p75 = scmp.ne.s32.totalorder %s60, %s74
    %p76 = scmp.eq.s32.totalorder %s29, 0
    %p77 = por %p75, %p76
    %s79 = sadd.s32 %s78, 1
    %p82 = scmp.eq.s32.totalorder %s23, 1
    %p83 = scmp.ne.s32.totalorder %s78, %s80
    %p84 = scmp.eq.s32.totalorder %s23, 0
    %p85 = por %p83, %p84
    %p86 = scmp.ne.s32.totalorder %s78, %s80
    %p87 = scmp.eq.s32.totalorder %s28, 1
    %p88 = por %p86, %p87
    %p89 = scmp.ne.s32.totalorder %s80, %s81
    %p90 = scmp.eq.s32.totalorder %s28, 0
    %p91 = por %p89, %p90
    %p92 = scmp.ne.s32.totalorder %s80, %s81
    %p93 = scmp.eq.s32.totalorder %s29, 1
    %p94 = por %p92, %p93
    %p96 = scmp.ne.s32.totalorder %s81, %s95
    %p97 = scmp.eq.s32.totalorder %s29, 0
    %p98 = por %p96, %p97
    %s100 = sadd.s32 %s99, 1
    %p103 = scmp.eq.s32.totalorder %s23, 1
    %p104 = scmp.ne.s32.totalorder %s99, %s101
    %p105 = scmp.eq.s32.totalorder %s23, 0
    %p106 = por %p104, %p105
    %p107 = scmp.ne.s32.totalorder %s99, %s101
    %p108 = scmp.eq.s32.totalorder %s28, 1
    %p109 = por %p107, %p108
    %p110 = scmp.ne.s32.totalorder %s101, %s102
    %p111 = scmp.eq.s32.totalorder %s28, 0
    %p112 = por %p110, %p111
    %p113 = scmp.ne.s32.totalorder %s101, %s102
    %p114 = scmp.eq.s32.totalorder %s29, 1
    %p115 = por %p113, %p114
    %p117 = scmp.ne.s32.totalorder %s102, %s116
    %p118 = scmp.eq.s32.totalorder %s29, 0
    %p119 = por %p117, %p118
    %s121 = sadd.s32 %s120, 1
    %p124 = scmp.eq.s32.totalorder %s23, 1
    %p125 = scmp.ne.s32.totalorder %s120, %s122
    %p126 = scmp.eq.s32.totalorder %s23, 0
    %p127 = por %p125, %p126
    %p128 = scmp.ne.s32.totalorder %s120, %s122
    %p129 = scmp.eq.s32.totalorder %s28, 1
    %p130 = por %p128, %p129
    %p131 = scmp.ne.s32.totalorder %s122, %s123
    %p132 = scmp.eq.s32.totalorder %s28, 0
    %p133 = por %p131, %p132
    %p134 = scmp.ne.s32.totalorder %s122, %s123
    %p135 = scmp.eq.s32.totalorder %s29, 1
    %p136 = por %p134, %p135
    %p138 = scmp.ne.s32.totalorder %s123, %s137
    %p139 = scmp.eq.s32.totalorder %s29, 0
    %p140 = por %p138, %p139
    %s142 = sadd.s32 %s141, 1
    %p145 = scmp.eq.s32.totalorder %s23, 1
    %p146 = scmp.ne.s32.totalorder %s141, %s143
    %p147 = scmp.eq.s32.totalorder %s23, 0
    %p148 = por %p146, %p147
    %p149 = scmp.ne.s32.totalorder %s141, %s143
    %p150 = scmp.eq.s32.totalorder %s28, 1
    %p151 = por %p149, %p150
    %p152 = scmp.ne.s32.totalorder %s143, %s144
    %p153 = scmp.eq.s32.totalorder %s28, 0
    %p154 = por %p152, %p153
    %p155 = scmp.ne.s32.totalorder %s143, %s144
    %p156 = scmp.eq.s32.totalorder %s29, 1
    %p157 = por %p155, %p156
    %p159 = scmp.ne.s32.totalorder %s144, %s158
    %p160 = scmp.eq.s32.totalorder %s29, 0
    %p161 = por %p159, %p160
    %s163 = sadd.s32 %s162, 1
    %p166 = scmp.eq.s32.totalorder %s23, 1
    %p167 = scmp.ne.s32.totalorder %s162, %s164
    %p168 = scmp.eq.s32.totalorder %s23, 0
    %p169 = por %p167, %p168
    %p170 = scmp.ne.s32.totalorder %s162, %s164
    %p171 = scmp.eq.s32.totalorder %s28, 1
    %p172 = por %p170, %p171
    %p173 = scmp.ne.s32.totalorder %s164, %s165
    %p174 = scmp.eq.s32.totalorder %s28, 0
    %p175 = por %p173, %p174
    %p176 = scmp.ne.s32.totalorder %s164, %s165
    %p177 = scmp.eq.s32.totalorder %s29, 1
    %p178 = por %p176, %p177
    %p180 = scmp.ne.s32.totalorder %s165, %s179
    %p181 = scmp.eq.s32.totalorder %s29, 0
    %p182 = por %p180, %p181
    %s184 = sadd.s32 %s183, 1
    %p187 = scmp.eq.s32.totalorder %s23, 1
    %p188 = scmp.ne.s32.totalorder %s183, %s185
    %p189 = scmp.eq.s32.totalorder %s23, 0
    %p190 = por %p188, %p189
    %p191 = scmp.ne.s32.totalorder %s183, %s185
    %p192 = scmp.eq.s32.totalorder %s28, 1
    %p193 = por %p191, %p192
    %p194 = scmp.ne.s32.totalorder %s185, %s186
    %p195 = scmp.eq.s32.totalorder %s28, 0
    %p196 = por %p194, %p195
    %p197 = scmp.ne.s32.totalorder %s185, %s186
    %p198 = scmp.eq.s32.totalorder %s29, 1
    %p199 = por %p197, %p198
    %p201 = scmp.ne.s32.totalorder %s186, %s200
    %p202 = scmp.eq.s32.totalorder %s29, 0
    %p203 = por %p201, %p202
    %s205 = sadd.s32 %s204, 1
    %p208 = scmp.eq.s32.totalorder %s23, 1
    %p209 = scmp.ne.s32.totalorder %s204, %s206
    %p210 = scmp.eq.s32.totalorder %s23, 0
    %p211 = por %p209, %p210
    %p212 = scmp.ne.s32.totalorder %s204, %s206
    %p213 = scmp.eq.s32.totalorder %s28, 1
    %p214 = por %p212, %p213
    %p215 = scmp.ne.s32.totalorder %s206, %s207
    %p216 = scmp.eq.s32.totalorder %s28, 0
    %p217 = por %p215, %p216
    %p218 = scmp.ne.s32.totalorder %s206, %s207
    %p219 = scmp.eq.s32.totalorder %s29, 1
    %p220 = por %p218, %p219
    %p222 = scmp.ne.s32.totalorder %s207, %s221
    %p223 = scmp.eq.s32.totalorder %s29, 0
    %p224 = por %p222, %p223
    %s226 = sadd.s32 %s225, 1
    %p229 = scmp.eq.s32.totalorder %s23, 1
    %p230 = scmp.ne.s32.totalorder %s225, %s227
    %p231 = scmp.eq.s32.totalorder %s23, 0
    %p232 = por %p230, %p231
    %p233 = scmp.ne.s32.totalorder %s225, %s227
    %p234 = scmp.eq.s32.totalorder %s28, 1
    %p235 = por %p233, %p234
    %p236 = scmp.ne.s32.totalorder %s227, %s228
    %p237 = scmp.eq.s32.totalorder %s28, 0
    %p238 = por %p236, %p237
    %p239 = scmp.ne.s32.totalorder %s227, %s228
    %p240 = scmp.eq.s32.totalorder %s29, 1
    %p241 = por %p239, %p240
    %p243 = scmp.ne.s32.totalorder %s228, %s242
    %p244 = scmp.eq.s32.totalorder %s29, 0
    %p245 = por %p243, %p244
    %s247 = sadd.s32 %s246, 1
    %p250 = scmp.eq.s32.totalorder %s23, 1
    %p251 = scmp.ne.s32.totalorder %s246, %s248
    %p252 = scmp.eq.s32.totalorder %s23, 0
    %p253 = por %p251, %p252
    %p254 = scmp.ne.s32.totalorder %s246, %s248
    %p255 = scmp.eq.s32.totalorder %s28, 1
    %p256 = por %p254, %p255
    %p257 = scmp.ne.s32.totalorder %s248, %s249
    %p258 = scmp.eq.s32.totalorder %s28, 0
    %p259 = por %p257, %p258
    %p260 = scmp.ne.s32.totalorder %s248, %s249
    %p261 = scmp.eq.s32.totalorder %s29, 1
    %p262 = por %p260, %p261
    %p264 = scmp.ne.s32.totalorder %s249, %s263
    %p265 = scmp.eq.s32.totalorder %s29, 0
    %p266 = por %p264, %p265
    %s268 = sadd.s32 %s267, 1
    %p271 = scmp.eq.s32.totalorder %s23, 1
    %p272 = scmp.ne.s32.totalorder %s267, %s269
    %p273 = scmp.eq.s32.totalorder %s23, 0
    %p274 = por %p272, %p273
    %p275 = scmp.ne.s32.totalorder %s267, %s269
    %p276 = scmp.eq.s32.totalorder %s28, 1
    %p277 = por %p275, %p276
    %p278 = scmp.ne.s32.totalorder %s269, %s270
    %p279 = scmp.eq.s32.totalorder %s28, 0
    %p280 = por %p278, %p279
    %p281 = scmp.ne.s32.totalorder %s269, %s270
    %p282 = scmp.eq.s32.totalorder %s29, 1
    %p283 = por %p281, %p282
    %p285 = scmp.ne.s32.totalorder %s270, %s284
    %p286 = scmp.eq.s32.totalorder %s29, 0
    %p287 = por %p285, %p286
    %s289 = sadd.s32 %s288, 1
    %p292 = scmp.eq.s32.totalorder %s23, 1
    %p293 = scmp.ne.s32.totalorder %s288, %s290
    %p294 = scmp.eq.s32.totalorder %s23, 0
    %p295 = por %p293, %p294
    %p296 = scmp.ne.s32.totalorder %s288, %s290
    %p297 = scmp.eq.s32.totalorder %s28, 1
    %p298 = por %p296, %p297
    %p299 = scmp.ne.s32.totalorder %s290, %s291
    %p300 = scmp.eq.s32.totalorder %s28, 0
    %p301 = por %p299, %p300
    %p302 = scmp.ne.s32.totalorder %s290, %s291
    %p303 = scmp.eq.s32.totalorder %s29, 1
    %p304 = por %p302, %p303
    %p306 = scmp.ne.s32.totalorder %s291, %s305
    %p307 = scmp.eq.s32.totalorder %s29, 0
    %p308 = por %p306, %p307
    %s310 = sadd.s32 %s309, 1
    %p313 = scmp.eq.s32.totalorder %s23, 1
    %p314 = scmp.ne.s32.totalorder %s309, %s311
    %p315 = scmp.eq.s32.totalorder %s23, 0
    %p316 = por %p314, %p315
    %p317 = scmp.ne.s32.totalorder %s309, %s311
    %p318 = scmp.eq.s32.totalorder %s28, 1
    %p319 = por %p317, %p318
    %p320 = scmp.ne.s32.totalorder %s311, %s312
    %p321 = scmp.eq.s32.totalorder %s28, 0
    %p322 = por %p320, %p321
    %p323 = scmp.ne.s32.totalorder %s311, %s312
    %p324 = scmp.eq.s32.totalorder %s29, 1
    %p325 = por %p323, %p324
    %p327 = scmp.ne.s32.totalorder %s312, %s326
    %p328 = scmp.eq.s32.totalorder %s29, 0
    %p329 = por %p327, %p328
    %s331 = sadd.s32 %s330, 1
    %p334 = scmp.eq.s32.totalorder %s23, 1
    %p335 = scmp.ne.s32.totalorder %s330, %s332
    %p336 = scmp.eq.s32.totalorder %s23, 0
    %p337 = por %p335, %p336
    %p338 = scmp.ne.s32.totalorder %s330, %s332
    %p339 = scmp.eq.s32.totalorder %s28, 1
    %p340 = por %p338, %p339
    %p341 = scmp.ne.s32.totalorder %s332, %s333
    %p342 = scmp.eq.s32.totalorder %s28, 0
    %p343 = por %p341, %p342
    %p344 = scmp.ne.s32.totalorder %s332, %s333
    %p345 = scmp.eq.s32.totalorder %s29, 1
    %p346 = por %p344, %p345
    %p348 = scmp.ne.s32.totalorder %s333, %s347
    %p349 = scmp.eq.s32.totalorder %s29, 0
    %p350 = por %p348, %p349
    %s352 = sadd.s32 %s351, 1
    %p355 = scmp.eq.s32.totalorder %s23, 1
    %p356 = scmp.ne.s32.totalorder %s351, %s353
    %p357 = scmp.eq.s32.totalorder %s23, 0
    %p358 = por %p356, %p357
    %p359 = scmp.ne.s32.totalorder %s351, %s353
    %p360 = scmp.eq.s32.totalorder %s28, 1
    %p361 = por %p359, %p360
    %p362 = scmp.ne.s32.totalorder %s353, %s354
    %p363 = scmp.eq.s32.totalorder %s28, 0
    %p364 = por %p362, %p363
    %p365 = scmp.ne.s32.totalorder %s353, %s354
    %p366 = scmp.eq.s32.totalorder %s29, 1
    %p367 = por %p365, %p366
    %p369 = scmp.ne.s32.totalorder %s354, %s368
    %p370 = scmp.eq.s32.totalorder %s29, 0
    %p371 = por %p369, %p370
    %s373 = sadd.s32 %s372, 1
    %p376 = scmp.eq.s32.totalorder %s23, 1
    %p377 = scmp.ne.s32.totalorder %s372, %s374
    %p378 = scmp.eq.s32.totalorder %s23, 0
    %p379 = por %p377, %p378
    %p380 = scmp.ne.s32.totalorder %s372, %s374
    %p381 = scmp.eq.s32.totalorder %s28, 1
    %p382 = por %p380, %p381
    %p383 = scmp.ne.s32.totalorder %s374, %s375
    %p384 = scmp.eq.s32.totalorder %s28, 0
    %p385 = por %p383, %p384
    %p386 = scmp.ne.s32.totalorder %s374, %s375
    %p387 = scmp.eq.s32.totalorder %s29, 1
    %p388 = por %p386, %p387
    %p390 = scmp.ne.s32.totalorder %s375, %s389
    %p391 = scmp.eq.s32.totalorder %s29, 0
    %p392 = por %p390, %p391
    %s393 = ssub.s32 %s23, %s30
    %p394 = scmp.eq.s32.totalorder %s393, 0
    %s396 = sadd.s32 %s395, 1
    %s397 = scalar_select %p394, %s395, %s396
    %p400 = pneg %p394
    %p401 = scmp.eq.s32.totalorder %s23, 1
    %p402 = por %p400, %p401
    %p403 = scmp.ne.s32.totalorder %s395, %s398
    %p404 = scmp.eq.s32.totalorder %s23, 0
    %p405 = por %p403, %p404
    %p406 = scmp.ne.s32.totalorder %s395, %s398
    %p407 = scmp.eq.s32.totalorder %s28, 1
    %p408 = por %p406, %p407
    %p409 = scmp.ne.s32.totalorder %s398, %s399
    %p410 = scmp.eq.s32.totalorder %s28, 0
    %p411 = por %p409, %p410
    %p412 = scmp.ne.s32.totalorder %s398, %s399
    %p413 = scmp.eq.s32.totalorder %s29, 1
    %p414 = por %p412, %p413
    %p416 = scmp.ne.s32.totalorder %s399, %s415
    %p417 = scmp.eq.s32.totalorder %s29, 0
    %p418 = por %p416, %p417
    %p419 = scmp.le.s32.totalorder 1, %s23
    %p420 = scmp.lt.s32.totalorder %s23, 3
    %p421 = pnand %p419, %p420
    %p422 = pneg %p421
    // Predicated region
    $region9: #{fastspeech_forward.3} parent=5 // pred_check
      _
    $region10: #{fastspeech_forward.3} parent=5 // pred_check_branch
      %424 = sbr.rel (%p421) target = $region12
    $region11: #{fastspeech_forward.3} parent=5 // pred_region
      %s425 = ssub.s32 %s23, 1
      // Predicated region
      $region13: #{fastspeech_forward.3} parent=11 // pred_check
        %p426 = pneg %p70
      $region14: #{fastspeech_forward.3} parent=11 // pred_check_branch
        %428 = sbr.rel (%p426) target = $region16
      $region15: #{fastspeech_forward.3} parent=11 // pred_region
        _
      $region16: #{fastspeech_forward.3} parent=11 // pred_fallthru
        _
      // Predicated region
      $region17: #{fastspeech_forward.3} parent=11 // pred_check
        %p429 = pneg %p91
      $region18: #{fastspeech_forward.3} parent=11 // pred_check_branch
        %431 = sbr.rel (%p429) target = $region20
      $region19: #{fastspeech_forward.3} parent=11 // pred_region
        _
      $region20: #{fastspeech_forward.3} parent=11 // pred_fallthru
        _
      // Predicated region
      $region21: #{fastspeech_forward.3} parent=11 // pred_check
        %p432 = pneg %p112
      $region22: #{fastspeech_forward.3} parent=11 // pred_check_branch
        %434 = sbr.rel (%p432) target = $region24
      $region23: #{fastspeech_forward.3} parent=11 // pred_region
        _
      $region24: #{fastspeech_forward.3} parent=11 // pred_fallthru
        _
      // Predicated region
      $region25: #{fastspeech_forward.3} parent=11 // pred_check
        %p435 = pneg %p133
      $region26: #{fastspeech_forward.3} parent=11 // pred_check_branch
        %437 = sbr.rel (%p435) target = $region28
      $region27: #{fastspeech_forward.3} parent=11 // pred_region
        _
      $region28: #{fastspeech_forward.3} parent=11 // pred_fallthru
        _
      // Predicated region
      $region29: #{fastspeech_forward.3} parent=11 // pred_check
        %p438 = pneg %p154
      $region30: #{fastspeech_forward.3} parent=11 // pred_check_branch
        %440 = sbr.rel (%p438) target = $region32
      $region31: #{fastspeech_forward.3} parent=11 // pred_region
        _
      $region32: #{fastspeech_forward.3} parent=11 // pred_fallthru
        _
      // Predicated region
      $region33: #{fastspeech_forward.3} parent=11 // pred_check
        %p441 = pneg %p175
      $region34: #{fastspeech_forward.3} parent=11 // pred_check_branch
        %443 = sbr.rel (%p441) target = $region36
      $region35: #{fastspeech_forward.3} parent=11 // pred_region
        _
      $region36: #{fastspeech_forward.3} parent=11 // pred_fallthru
        _
      // Predicated region
      $region37: #{fastspeech_forward.3} parent=11 // pred_check
        %p444 = pneg %p196
      $region38: #{fastspeech_forward.3} parent=11 // pred_check_branch
        %446 = sbr.rel (%p444) target = $region40
      $region39: #{fastspeech_forward.3} parent=11 // pred_region
        _
      $region40: #{fastspeech_forward.3} parent=11 // pred_fallthru
        _
      // Predicated region
      $region41: #{fastspeech_forward.3} parent=11 // pred_check
        %p447 = pneg %p217
      $region42: #{fastspeech_forward.3} parent=11 // pred_check_branch
        %449 = sbr.rel (%p447) target = $region44
      $region43: #{fastspeech_forward.3} parent=11 // pred_region
        _
      $region44: #{fastspeech_forward.3} parent=11 // pred_fallthru
        _
      // Predicated region
      $region45: #{fastspeech_forward.3} parent=11 // pred_check
        %p450 = pneg %p238
      $region46: #{fastspeech_forward.3} parent=11 // pred_check_branch
        %452 = sbr.rel (%p450) target = $region48
      $region47: #{fastspeech_forward.3} parent=11 // pred_region
        _
      $region48: #{fastspeech_forward.3} parent=11 // pred_fallthru
        _
      // Predicated region
      $region49: #{fastspeech_forward.3} parent=11 // pred_check
        %p453 = pneg %p259
      $region50: #{fastspeech_forward.3} parent=11 // pred_check_branch
        %455 = sbr.rel (%p453) target = $region52
      $region51: #{fastspeech_forward.3} parent=11 // pred_region
        _
      $region52: #{fastspeech_forward.3} parent=11 // pred_fallthru
        _
      // Predicated region
      $region53: #{fastspeech_forward.3} parent=11 // pred_check
        %p456 = pneg %p280
      $region54: #{fastspeech_forward.3} parent=11 // pred_check_branch
        %458 = sbr.rel (%p456) target = $region56
      $region55: #{fastspeech_forward.3} parent=11 // pred_region
        _
      $region56: #{fastspeech_forward.3} parent=11 // pred_fallthru
        _
      // Predicated region
      $region57: #{fastspeech_forward.3} parent=11 // pred_check
        %p459 = pneg %p301
      $region58: #{fastspeech_forward.3} parent=11 // pred_check_branch
        %461 = sbr.rel (%p459) target = $region60
      $region59: #{fastspeech_forward.3} parent=11 // pred_region
        _
      $region60: #{fastspeech_forward.3} parent=11 // pred_fallthru
        _
      // Predicated region
      $region61: #{fastspeech_forward.3} parent=11 // pred_check
        %p462 = pneg %p322
      $region62: #{fastspeech_forward.3} parent=11 // pred_check_branch
        %464 = sbr.rel (%p462) target = $region64
      $region63: #{fastspeech_forward.3} parent=11 // pred_region
        _
      $region64: #{fastspeech_forward.3} parent=11 // pred_fallthru
        _
      // Predicated region
      $region65: #{fastspeech_forward.3} parent=11 // pred_check
        %p465 = pneg %p343
      $region66: #{fastspeech_forward.3} parent=11 // pred_check_branch
        %467 = sbr.rel (%p465) target = $region68
      $region67: #{fastspeech_forward.3} parent=11 // pred_region
        _
      $region68: #{fastspeech_forward.3} parent=11 // pred_fallthru
        _
      // Predicated region
      $region69: #{fastspeech_forward.3} parent=11 // pred_check
        %p468 = pneg %p364
      $region70: #{fastspeech_forward.3} parent=11 // pred_check_branch
        %470 = sbr.rel (%p468) target = $region72
      $region71: #{fastspeech_forward.3} parent=11 // pred_region
        _
      $region72: #{fastspeech_forward.3} parent=11 // pred_fallthru
        _
      // Predicated region
      $region73: #{fastspeech_forward.3} parent=11 // pred_check
        %p471 = pneg %p385
      $region74: #{fastspeech_forward.3} parent=11 // pred_check_branch
        %473 = sbr.rel (%p471) target = $region76
      $region75: #{fastspeech_forward.3} parent=11 // pred_region
        _
      $region76: #{fastspeech_forward.3} parent=11 // pred_fallthru
        _
    $region12: #{fastspeech_forward.3} parent=5 // pred_fallthru
      _
    %p474 = scmp.lt.s32.totalorder %s23, 2
    // Predicated region
    $region77: #{fastspeech_forward.3} parent=5 // pred_check
      %p475 = pneg %p474
    $region78: #{fastspeech_forward.3} parent=5 // pred_check_branch
      %477 = sbr.rel (%p475) target = $region80
    $region79: #{fastspeech_forward.3} parent=5 // pred_region
      // Predicated region
      $region81: #{fastspeech_forward.3} parent=79 // pred_check
        %p478 = pneg %p43
      $region82: #{fastspeech_forward.3} parent=79 // pred_check_branch
        %480 = sbr.rel (%p478) target = $region84
      $region83: #{fastspeech_forward.3} parent=79 // pred_region
        %p481 = scmp.lt.s32.totalorder %s23, 1
        %s482 = scalar_select %p481, %s23, 1
        %s483 = smul.addr %s482, 4
        %s484 = scalar_lea.vmem %s0, %s483
      $region84: #{fastspeech_forward.3} parent=79 // pred_fallthru
        _
    $region80: #{fastspeech_forward.3} parent=5 // pred_fallthru
      _
    %p485 = scmp.le.s32.totalorder 1, %s23
    %p486 = scmp.lt.s32.totalorder %s23, 3
    %p487 = pnand %p485, %p486
    %p488 = pneg %p487
    // Predicated region
    $region85: #{fastspeech_forward.3} parent=5 // pred_check
      _
    $region86: #{fastspeech_forward.3} parent=5 // pred_check_branch
      %490 = sbr.rel (%p487) target = $region88
    $region87: #{fastspeech_forward.3} parent=5 // pred_region
      %s491 = ssub.s32 %s23, 1
      %p492 = scmp.lt.s32.totalorder %s28, 1
      %s493 = scalar_select %p492, %s28, 1
      %s494 = smul.addr %s493, 4
      %s495 = scalar_lea.vmem %s0, %s494
      %p496 = pneg %p49
      %p497 = pneg %p46
      %p498 = pneg %p70
      %p499 = pneg %p67
      %p500 = pneg %p91
      %p501 = pneg %p88
      %p502 = pneg %p112
      %p503 = pneg %p109
      %p504 = pneg %p133
      %p505 = pneg %p130
      %p506 = pneg %p154
      %p507 = pneg %p151
      %p508 = pneg %p175
      %p509 = pneg %p172
      %p510 = pneg %p196
      %p511 = pneg %p193
      %p512 = pneg %p217
      %p513 = pneg %p214
      %p514 = pneg %p238
      %p515 = pneg %p235
      %p516 = pneg %p259
      %p517 = pneg %p256
      %p518 = pneg %p280
      %p519 = pneg %p277
      %p520 = pneg %p301
      %p521 = pneg %p298
      %p522 = pneg %p322
      %p523 = pneg %p319
      %p524 = pneg %p343
      %p525 = pneg %p340
      %p526 = pneg %p364
      %p527 = pneg %p361
      %p528 = pneg %p385
      %p529 = pneg %p382
      %p530 = pneg %p411
      %p531 = pneg %p408
      %p532 = scmp.lt.s32.totalorder %s28, 1
      %s533 = scalar_select %p532, %s28, 1
      %s534 = smul.addr %s533, 4
      %s535 = scalar_lea.vmem %s17, %s534
      %p536 = scmp.lt.s32.totalorder %s28, 1
      %s537 = scalar_select %p536, %s28, 1
      %s538 = smul.addr %s537, 4
      %s539 = scalar_lea.vmem %s0, %s538
      %p540 = scmp.lt.s32.totalorder %s28, 1
      %s541 = scalar_select %p540, %s28, 1
      %s542 = smul.addr %s541, 4
      %s543 = scalar_lea.vmem %s17, %s542
      %v545 = vld [vmem:[%s539] sm:$0xf]
      %v546 = vld [vmem:[%s1] sm:$0xf]
      %v547 = vld [vmem:[%s1 + $0x4] sm:$0xf]
      %v548 = vld [vmem:[%s1 + $0x8] sm:$0xf]
      %v549 = vld [vmem:[%s1 + $0xc] sm:$0xf]
      %v550 = vld [vmem:[%s2] sm:$0x1]
      %v551 = vld [vmem:[%s3] sm:$0xf]
      %v552 = vld [vmem:[%s3 + $0x4] sm:$0xf]
      %v553 = vld [vmem:[%s3 + $0x8] sm:$0xf]
      %v554 = vld [vmem:[%s3 + $0xc] sm:$0xf]
      %v555 = vld [vmem:[%s4] sm:$0x1]
      %v556 = vld [vmem:[%s5] sm:$0xf]
      %v557 = vld [vmem:[%s5 + $0x4] sm:$0xf]
      %v558 = vld [vmem:[%s5 + $0x8] sm:$0xf]
      %v559 = vld [vmem:[%s5 + $0xc] sm:$0xf]
      %v560 = vld [vmem:[%s6] sm:$0x1]
      %v561 = vld [vmem:[%s7] sm:$0xf]
      %v562 = vld [vmem:[%s7 + $0x4] sm:$0xf]
      %v563 = vld [vmem:[%s7 + $0x8] sm:$0xf]
      %v564 = vld [vmem:[%s7 + $0xc] sm:$0xf]
      %v565 = vld [vmem:[%s8] sm:$0x1]
      %v567 = vperm.slane %v550, 0
      %v573 = vunpack.c.l.b16 %v546
      %v574 = vunpack.c.l.b16 %v547
      %v575 = vunpack.c.l.b16 %v548
      %v576 = vunpack.c.l.b16 %v549
      %v577 = vpack.c.b16 %v574, %v573
      %v578 = vpack.c.b16 %v576, %v575
      %vm581 = vcmask 261120
      %v583 = vsel %vm581, %v545, 0
      %585 = vmatpush.bf16.msra.mxu0 0
      %586 = vmatpush.bf16.msra.mxu0 0
      %587 = vmatpush.bf16.msra.mxu0 0
      %588 = vmatpush.bf16.msra.mxu0 0
      %589 = vmatpush.bf16.msra.mxu0 0
      %590 = vmatpush.bf16.msra.mxu0 0
      %591 = vmatpush.bf16.msra.mxu0 %v578
      %592 = vmatpush.bf16.msra.mxu0 %v577
      %593 = vmatmul.bf16.gmra.mxu0 %v583
      %v594 = vpop.f32.mrf.mxu0
      %v595 = vadd.f32 %v567, %v594
      %v596 = vpop.f32.mrf.mxu0
      %597 = vdwg.mxu0
      %v599 = vperm.slane %v555, 0
      %v605 = vunpack.c.l.b16 %v551
      %v606 = vunpack.c.l.b16 %v552
      %v607 = vunpack.c.l.b16 %v553
      %v608 = vunpack.c.l.b16 %v554
      %v609 = vpack.c.b16 %v606, %v605
      %v610 = vpack.c.b16 %v608, %v607
      %613 = vmatpush.bf16.msra.mxu0 0
      %614 = vmatpush.bf16.msra.mxu0 0
      %615 = vmatpush.bf16.msra.mxu0 0
      %616 = vmatpush.bf16.msra.mxu0 0
      %617 = vmatpush.bf16.msra.mxu0 0
      %618 = vmatpush.bf16.msra.mxu0 0
      %619 = vmatpush.bf16.msra.mxu0 %v610
      %620 = vmatpush.bf16.msra.mxu0 %v609
      %621 = vmatmul.bf16.gmra.mxu0 %v583
      %v622 = vpop.f32.mrf.mxu0
      %v623 = vadd.f32 %v599, %v622
      %v624 = vpop.f32.mrf.mxu0
      %625 = vdwg.mxu0
      %v627 = vperm.slane %v560, 0
      %v633 = vunpack.c.l.b16 %v556
      %v634 = vunpack.c.l.b16 %v557
      %v635 = vunpack.c.l.b16 %v558
      %v636 = vunpack.c.l.b16 %v559
      %v637 = vpack.c.b16 %v634, %v633
      %v638 = vpack.c.b16 %v636, %v635
      %641 = vmatpush.bf16.msra.mxu0 0
      %642 = vmatpush.bf16.msra.mxu0 0
      %643 = vmatpush.bf16.msra.mxu0 0
      %644 = vmatpush.bf16.msra.mxu0 0
      %645 = vmatpush.bf16.msra.mxu0 0
      %646 = vmatpush.bf16.msra.mxu0 0
      %647 = vmatpush.bf16.msra.mxu0 %v638
      %648 = vmatpush.bf16.msra.mxu0 %v637
      %649 = vmatmul.bf16.gmra.mxu0 %v583
      %v650 = vpop.f32.mrf.mxu0
      %v651 = vadd.f32 %v627, %v650
      %v652 = vpop.f32.mrf.mxu0
      %653 = vdwg.mxu0
      %v654 = vpack.c.bf16 %v623, %v623
      %v655 = vpack.c.bf16 %v651, %v651
      %v656 = vpack.c.bf16 %v595, %v595
      %vm657 = vcmask 130048
      %v659 = vsel %vm657, %v656, 0
      %v662 = vsel %vm657, %v654, 0
      %664 = vmatpush.bf16.xpose.msra.mxu0 0
      %665 = vmatpush.bf16.xpose.msra.mxu0 0
      %666 = vmatpush.bf16.xpose.msra.mxu0 0
      %667 = vmatpush.bf16.xpose.msra.mxu0 0
      %668 = vmatpush.bf16.xpose.msra.mxu0 0
      %669 = vmatpush.bf16.xpose.msra.mxu0 0
      %670 = vmatpush.bf16.xpose.msra.mxu0 0
      %671 = vmatpush.bf16.xpose.msra.mxu0 %v662
      %672 = vmatmul.bf16.gmra.mxu0 %v659
      %v673 = vpop.f32.mrf.mxu0
      %v674 = vadd.f32 0.0, %v673
      %v675 = vpop.f32.mrf.mxu0
      %676 = vdwg.mxu0
      %vm677 = vcmask 64512
      %v678 = vsel %vm677, %v674, -inf
      %679 = vmax.xlane.f32.xlu0 %v678
      %v680 = vpop.xlane.xlu0 %679
      %v681 = vsub.f32 %v674, %v680
      %v682 = vmul.f32 %v681, 1.442695
      %v683 = vpow.pop %v682
      %v684 = vsel %vm677, %v683, 0.0
      %685 = vadd.xlane.f32.xlu0 %v684
      %v686 = vpop.xlane.xlu0 %685
      %v687 = vrcp.pop %v686
      %v688 = vpack.c.bf16 %v683, %v683
      %v690 = vsel %vm677, %v688, 0
      %vm692 = vcmask 1043456
      %v694 = vsel %vm692, %v655, 0
      %696 = vmatpush.bf16.msra.mxu0 0
      %697 = vmatpush.bf16.msra.mxu0 0
      %698 = vmatpush.bf16.msra.mxu0 0
      %699 = vmatpush.bf16.msra.mxu0 0
      %700 = vmatpush.bf16.msra.mxu0 0
      %701 = vmatpush.bf16.msra.mxu0 0
      %702 = vmatpush.bf16.msra.mxu0 0
      %703 = vmatpush.bf16.msra.mxu0 %v694
      %704 = vmatmul.bf16.gmra.mxu0 %v690
      %v705 = vpop.f32.mrf.mxu0
      %v706 = vadd.f32 0.0, %v705
      %v707 = vpop.f32.mrf.mxu0
      %708 = vdwg.mxu0
      %v709 = vmul.f32 %v706, %v687
      %710 = vst.msk [vmem:[#allocation2] sm:$0xff] %vm657, %v709
      %712 = vrot.lane.b32.xlu0 %v656, 112
      %v713 = vpop.permute.xlu0 %712
      %v715 = vunpack.c.l.b16 %v654
      %v716 = vpack.c.b16 %v715, %v715
      %717 = vrot.lane.b32.xlu0 %v716, 112
      %v718 = vpop.permute.xlu0 %717
      %v720 = vsel %vm657, %v713, 0
      %v723 = vsel %vm657, %v718, 0
      %725 = vmatpush.bf16.xpose.msra.mxu0 0
      %726 = vmatpush.bf16.xpose.msra.mxu0 0
      %727 = vmatpush.bf16.xpose.msra.mxu0 0
      %728 = vmatpush.bf16.xpose.msra.mxu0 0
      %729 = vmatpush.bf16.xpose.msra.mxu0 0
      %730 = vmatpush.bf16.xpose.msra.mxu0 0
      %731 = vmatpush.bf16.xpose.msra.mxu0 0
      %732 = vmatpush.bf16.xpose.msra.mxu0 %v723
      %733 = vmatmul.bf16.gmra.mxu0 %v720
      %v734 = vpop.f32.mrf.mxu0
      %v735 = vadd.f32 0.0, %v734
      %v736 = vpop.f32.mrf.mxu0
      %737 = vdwg.mxu0
      %v738 = vsel %vm677, %v735, -inf
      %739 = vmax.xlane.f32.xlu0 %v738
      %v740 = vpop.xlane.xlu0 %739
      %v741 = vsub.f32 %v735, %v740
      %v742 = vmul.f32 %v741, 1.442695
      %v743 = vpow.pop %v742
      %v744 = vsel %vm677, %v743, 0.0
      %745 = vadd.xlane.f32.xlu0 %v744
      %v746 = vpop.xlane.xlu0 %745
      %v747 = vrcp.pop %v746
      %v748 = vpack.c.bf16 %v743, %v743
      %v750 = vunpack.c.l.b16 %v655
      %v751 = vpack.c.b16 %v750, %v750
      %752 = vrot.lane.b32.xlu0 %v751, 112
      %v753 = vpop.permute.xlu0 %752
      %v755 = vsel %vm677, %v748, 0
      %v758 = vsel %vm692, %v753, 0
      %760 = vmatpush.bf16.msra.mxu0 0
      %761 = vmatpush.bf16.msra.mxu0 0
      %762 = vmatpush.bf16.msra.mxu0 0
      %763 = vmatpush.bf16.msra.mxu0 0
      %764 = vmatpush.bf16.msra.mxu0 0
      %765 = vmatpush.bf16.msra.mxu0 0
      %766 = vmatpush.bf16.msra.mxu0 0
      %767 = vmatpush.bf16.msra.mxu0 %v758
      %768 = vmatmul.bf16.gmra.mxu0 %v755
      %v769 = vpop.f32.mrf.mxu0
      %v770 = vadd.f32 0.0, %v769
      %v771 = vpop.f32.mrf.mxu0
      %772 = vdwg.mxu0
      %v773 = vmul.f32 %v770, %v747
      %775 = vrot.lane.b32.xlu0 %v773, 16
      %v776 = vpop.permute.xlu0 %775
      %vm778 = vcmask 261248
      %779 = vst.msk [vmem:[#allocation2] sm:$0xff] %vm778, %v776
      %v780 = vld [vmem:[#allocation2] sm:$0xff]
      %v781 = vpack.c.bf16 %v780, %v780
      %v783 = vperm.slane %v565, 0
      %v789 = vunpack.c.l.b16 %v561
      %v790 = vunpack.c.l.b16 %v562
      %v791 = vunpack.c.l.b16 %v563
      %v792 = vunpack.c.l.b16 %v564
      %v793 = vpack.c.b16 %v790, %v789
      %v794 = vpack.c.b16 %v792, %v791
      %v798 = vsel %vm581, %v781, 0
      %800 = vmatpush.bf16.msra.mxu0 0
      %801 = vmatpush.bf16.msra.mxu0 0
      %802 = vmatpush.bf16.msra.mxu0 0
      %803 = vmatpush.bf16.msra.mxu0 0
      %804 = vmatpush.bf16.msra.mxu0 0
      %805 = vmatpush.bf16.msra.mxu0 0
      %806 = vmatpush.bf16.msra.mxu0 %v794
      %807 = vmatpush.bf16.msra.mxu0 %v793
      %808 = vmatmul.bf16.gmra.mxu0 %v798
      %v809 = vpop.f32.mrf.mxu0
      %v810 = vadd.f32 %v783, %v809
      %v811 = vpop.f32.mrf.mxu0
      %812 = vdwg.mxu0
      %v813 = vunpack.c.l.bf16 %v545
      %v814 = vld [vmem:[%s9] sm:$0x1]
      %v815 = vld [vmem:[%s10] sm:$0x1]
      %v816 = vadd.f32 %v813, %v810
      %v817 = vsel %vm581, %v816, 0.0
      %818 = vadd.xlane.f32.xlu0 %v817
      %v819 = vpop.xlane.xlu0 %818
      %v820 = vrcp.pop 32.0
      %v821 = vmul.f32 32.0, %v820
      %v822 = vsub.f32 1.0, %v821
      %v823 = vmul.f32 %v820, %v822
      %v824 = vadd.f32 %v820, %v823
      %vm825 = vweird.f32 %v820
      %v826 = vsel %vm825, %v820, %v824
      %v827 = vmul.f32 %v819, %v826
      %v828 = vmul.f32 %v816, %v816
      %v829 = vsel %vm581, %v828, 0.0
      %830 = vadd.xlane.f32.xlu0 %v829
      %v831 = vpop.xlane.xlu0 %830
      %v832 = vmul.f32 %v831, %v826
      %v833 = vmul.f32 %v827, %v827
      %v834 = vsub.f32 %v832, %v833
      %v835 = vsub.f32 %v816, %v827
      %v836 = vadd.f32 %v834, 1e-05
      %v837 = vrsqrt.pop %v836
      %v838 = vmul.f32 %v837, %v836
      %v839 = vmul.f32 %v838, %v837
      %v840 = vmul.f32 0.5, %v839
      %v841 = vsub.f32 1.5, %v840
      %v842 = vmul.f32 %v837, %v841
      %vm843 = vweird.f32 %v836
      %vm844 = vweird.f32 %v837
      %vm845 = vmor %vm843, %vm844
      %v846 = vsel %vm845, %v837, %v842
      %v847 = vmul.f32 %v835, %v846
      %v849 = vperm.slane %v814, 0
      %v851 = vmul.f32 %v847, %v849
      %v853 = vperm.slane %v815, 0
      %v855 = vadd.f32 %v851, %v853
      %v856 = vpack.c.bf16 %v855, %v855
      %v857 = vld [vmem:[%s11] sm:$0xf]
      %v858 = vld [vmem:[%s11 + $0x4] sm:$0xf]
      %v859 = vld [vmem:[%s11 + $0x8] sm:$0xf]
      %v860 = vld [vmem:[%s11 + $0xc] sm:$0xf]
      %v861 = vld [vmem:[%s11 + $0x10] sm:$0xf]
      %v862 = vld [vmem:[%s11 + $0x14] sm:$0xf]
      %v863 = vld [vmem:[%s11 + $0x18] sm:$0xf]
      %v864 = vld [vmem:[%s11 + $0x1c] sm:$0xf]
      %v865 = vld [vmem:[%s11 + $0x20] sm:$0xf]
      %v866 = vld [vmem:[%s11 + $0x24] sm:$0xf]
      %v867 = vld [vmem:[%s11 + $0x28] sm:$0xf]
      %v868 = vld [vmem:[%s11 + $0x2c] sm:$0xf]
      %v869 = vld [vmem:[%s12] sm:$0x1]
      %v871 = vunpack.c.l.b16 %v856
      %v872 = vpack.c.b16 %v871, %v871
      %v874 = vshrl.u32 %v872, 16
      %v876 = vrot.slane %v874, 7
      %v877 = vshll.u32 %v872, 16
      %v879 = vor.u32 %v876, %v877
      %vm881 = vcmask 1040384
      %vm882 = vsmask.f32 256
      %vm883 = vmand %vm881, %vm882
      %v884 = vsel %vm883, 0, %v879
      %v885 = vrot.slane %v877, 1
      %v886 = vor.u32 %v874, %v885
      %vm888 = vcmask 1043456
      %vm889 = vsmask.f32 3328
      %vm890 = vmand %vm888, %vm889
      %v891 = vsel %vm890, %v886, 0
      %892 = vrot.lane.b32.xlu0 %v872, 32
      %v893 = vpop.permute.xlu0 %892
      %895 = vrot.lane.b32.xlu0 %v891, 64
      %v896 = vpop.permute.xlu0 %895
      %v899 = vsel %vm581, %v884, %v893
      %vm900 = vcmask 523264
      %v902 = vsel %vm900, %v899, %v896
      %v904 = vperm.slane %v869, 0
      %v918 = vunpack.c.l.b16 %v857
      %v919 = vunpack.c.l.b16 %v858
      %v920 = vunpack.c.l.b16 %v859
      %v921 = vunpack.c.l.b16 %v860
      %v922 = vunpack.c.l.b16 %v861
      %v923 = vunpack.c.l.b16 %v862
      %v924 = vunpack.c.l.b16 %v863
      %v925 = vunpack.c.l.b16 %v864
      %v926 = vunpack.c.l.b16 %v865
      %v927 = vunpack.c.l.b16 %v866
      %v928 = vunpack.c.l.b16 %v867
      %v929 = vunpack.c.l.b16 %v868
      %v930 = vpack.c.b16 %v919, %v918
      %v931 = vpack.c.b16 %v921, %v920
      %v932 = vpack.c.b16 %v923, %v922
      %v933 = vpack.c.b16 %v925, %v924
      %v934 = vpack.c.b16 %v927, %v926
      %v935 = vpack.c.b16 %v929, %v928
      %vm942 = vcmask 785408
      %v943 = vsel %vm942, %v902, 0
      %945 = vmatpush.bf16.msra.mxu0 0
      %946 = vmatpush.bf16.msra.mxu0 0
      %947 = vmatpush.bf16.msra.mxu0 %v935
      %948 = vmatpush.bf16.msra.mxu0 %v934
      %949 = vmatpush.bf16.msra.mxu0 %v933
      %950 = vmatpush.bf16.msra.mxu0 %v932
      %951 = vmatpush.bf16.msra.mxu0 %v931
      %952 = vmatpush.bf16.msra.mxu0 %v930
      %953 = vmatmul.bf16.gmra.mxu0 %v943
      %v954 = vpop.f32.mrf.mxu0
      %v955 = vadd.f32 %v904, %v954
      %v956 = vpop.f32.mrf.mxu0
      %957 = vdwg.mxu0
      %v958 = vmax.f32 %v955, 0.0
      %v959 = vpack.c.bf16 %v958, %v958
      %v960 = vld [vmem:[%s13] sm:$0xf]
      %v961 = vld [vmem:[%s13 + $0x4] sm:$0xf]
      %v962 = vld [vmem:[%s13 + $0x8] sm:$0xf]
      %v963 = vld [vmem:[%s13 + $0xc] sm:$0xf]
      %v964 = vld [vmem:[%s13 + $0x10] sm:$0xf]
      %v965 = vld [vmem:[%s13 + $0x14] sm:$0xf]
      %v966 = vld [vmem:[%s13 + $0x18] sm:$0xf]
      %v967 = vld [vmem:[%s13 + $0x1c] sm:$0xf]
      %v968 = vld [vmem:[%s13 + $0x20] sm:$0xf]
      %v969 = vld [vmem:[%s13 + $0x24] sm:$0xf]
      %v970 = vld [vmem:[%s13 + $0x28] sm:$0xf]
      %v971 = vld [vmem:[%s13 + $0x2c] sm:$0xf]
      %v972 = vld [vmem:[%s13 + $0x30] sm:$0xf]
      %v973 = vld [vmem:[%s13 + $0x34] sm:$0xf]
      %v974 = vld [vmem:[%s13 + $0x38] sm:$0xf]
      %v975 = vld [vmem:[%s13 + $0x3c] sm:$0xf]
      %v976 = vld [vmem:[%s13 + $0x40] sm:$0xf]
      %v977 = vld [vmem:[%s13 + $0x44] sm:$0xf]
      %v978 = vld [vmem:[%s13 + $0x48] sm:$0xf]
      %v979 = vld [vmem:[%s13 + $0x4c] sm:$0xf]
      %v980 = vld [vmem:[%s13 + $0x50] sm:$0xf]
      %v981 = vld [vmem:[%s13 + $0x54] sm:$0xf]
      %v982 = vld [vmem:[%s13 + $0x58] sm:$0xf]
      %v983 = vld [vmem:[%s13 + $0x5c] sm:$0xf]
      %v984 = vld [vmem:[%s14] sm:$0x1]
      %v986 = vunpack.c.l.b16 %v959
      %v987 = vpack.c.b16 %v986, %v986
      %v989 = vshrl.u32 %v987, 16
      %v991 = vrot.slane %v989, 7
      %v992 = vshll.u32 %v987, 16
      %v994 = vor.u32 %v991, %v992
      %v996 = vsel %vm883, 0, %v994
      %v997 = vrot.slane %v992, 1
      %v998 = vor.u32 %v989, %v997
      %v1000 = vsel %vm890, %v998, 0
      %1001 = vrot.lane.b32.xlu0 %v987, 64
      %v1002 = vpop.permute.xlu0 %1001
      %v1005 = vsel %vm900, %v996, %v1002
      %v1008 = vperm.slane %v984, 0
      %v1034 = vunpack.c.l.b16 %v960
      %v1035 = vunpack.c.l.b16 %v961
      %v1036 = vunpack.c.l.b16 %v962
      %v1037 = vunpack.c.l.b16 %v963
      %v1038 = vunpack.c.l.b16 %v964
      %v1039 = vunpack.c.l.b16 %v965
      %v1040 = vunpack.c.l.b16 %v966
      %v1041 = vunpack.c.l.b16 %v967
      %v1042 = vunpack.c.l.b16 %v968
      %v1043 = vunpack.c.l.b16 %v969
      %v1044 = vunpack.c.l.b16 %v970
      %v1045 = vunpack.c.l.b16 %v971
      %v1046 = vunpack.c.l.b16 %v972
      %v1047 = vunpack.c.l.b16 %v973
      %v1048 = vunpack.c.l.b16 %v974
      %v1049 = vunpack.c.l.b16 %v975
      %v1050 = vunpack.c.l.b16 %v976
      %v1051 = vunpack.c.l.b16 %v977
      %v1052 = vunpack.c.l.b16 %v978
      %v1053 = vunpack.c.l.b16 %v979
      %v1054 = vunpack.c.l.b16 %v980
      %v1055 = vunpack.c.l.b16 %v981
      %v1056 = vunpack.c.l.b16 %v982
      %v1057 = vunpack.c.l.b16 %v983
      %v1058 = vpack.c.b16 %v1035, %v1034
      %v1059 = vpack.c.b16 %v1037, %v1036
      %v1060 = vpack.c.b16 %v1039, %v1038
      %v1061 = vpack.c.b16 %v1041, %v1040
      %v1062 = vpack.c.b16 %v1043, %v1042
      %v1063 = vpack.c.b16 %v1045, %v1044
      %v1064 = vpack.c.b16 %v1047, %v1046
      %v1065 = vpack.c.b16 %v1049, %v1048
      %v1066 = vpack.c.b16 %v1051, %v1050
      %v1067 = vpack.c.b16 %v1053, %v1052
      %v1068 = vpack.c.b16 %v1055, %v1054
      %v1069 = vpack.c.b16 %v1057, %v1056
      %v1083 = vsel %vm900, %v1000, 0
      %1085 = vmatpush.bf16.msra.mxu0 %v1065
      %1086 = vmatpush.bf16.msra.mxu0 %v1064
      %1087 = vmatpush.bf16.msra.mxu0 %v1063
      %1088 = vmatpush.bf16.msra.mxu0 %v1062
      %1089 = vmatpush.bf16.msra.mxu0 %v1061
      %1090 = vmatpush.bf16.msra.mxu0 %v1060
      %1091 = vmatpush.bf16.msra.mxu0 %v1059
      %1092 = vmatpush.bf16.msra.mxu0 %v1058
      %1093 = vmatmul.bf16.gmra.mxu0 %v1005
      %v1094 = vpop.f32.mrf.mxu0
      %v1095 = vadd.f32 %v1008, %v1094
      %v1096 = vpop.f32.mrf.mxu0
      %1097 = vdwg.mxu0
      %1098 = vmatpush.bf16.msra.mxu0 0
      %1099 = vmatpush.bf16.msra.mxu0 0
      %1100 = vmatpush.bf16.msra.mxu0 0
      %1101 = vmatpush.bf16.msra.mxu0 0
      %1102 = vmatpush.bf16.msra.mxu0 %v1069
      %1103 = vmatpush.bf16.msra.mxu0 %v1068
      %1104 = vmatpush.bf16.msra.mxu0 %v1067
      %1105 = vmatpush.bf16.msra.mxu0 %v1066
      %1106 = vmatmul.bf16.gmra.mxu0 %v1083
      %v1107 = vpop.f32.mrf.mxu0
      %v1108 = vadd.f32 %v1095, %v1107
      %v1109 = vpop.f32.mrf.mxu0
      %1110 = vdwg.mxu0
      %v1111 = vld [vmem:[%s15] sm:$0x1]
      %v1112 = vld [vmem:[%s16] sm:$0x1]
      %v1113 = vadd.f32 %v855, %v1108
      %v1114 = vsel %vm581, %v1113, 0.0
      %1115 = vadd.xlane.f32.xlu0 %v1114
      %v1116 = vpop.xlane.xlu0 %1115
      %v1117 = vmul.f32 %v1116, %v826
      %v1118 = vmul.f32 %v1113, %v1113
      %v1119 = vsel %vm581, %v1118, 0.0
      %1120 = vadd.xlane.f32.xlu0 %v1119
      %v1121 = vpop.xlane.xlu0 %1120
      %v1122 = vmul.f32 %v1121, %v826
      %v1123 = vmul.f32 %v1117, %v1117
      %v1124 = vsub.f32 %v1122, %v1123
      %v1125 = vsub.f32 %v1113, %v1117
      %v1126 = vadd.f32 %v1124, 1e-05
      %v1127 = vrsqrt.pop %v1126
      %v1128 = vmul.f32 %v1127, %v1126
      %v1129 = vmul.f32 %v1128, %v1127
      %v1130 = vmul.f32 0.5, %v1129
      %v1131 = vsub.f32 1.5, %v1130
      %v1132 = vmul.f32 %v1127, %v1131
      %vm1133 = vweird.f32 %v1126
      %vm1134 = vweird.f32 %v1127
      %vm1135 = vmor %vm1133, %vm1134
      %v1136 = vsel %vm1135, %v1127, %v1132
      %v1137 = vmul.f32 %v1125, %v1136
      %v1139 = vperm.slane %v1111, 0
      %v1141 = vmul.f32 %v1137, %v1139
      %v1143 = vperm.slane %v1112, 0
      %v1145 = vadd.f32 %v1141, %v1143
      %v1146 = vpack.c.bf16 %v1145, %v1145
      %vm1147 = vcmask 257024
      %1148 = vst.msk [vmem:[%s543] sm:$0xf] %vm1147, %v1146
      %p1149 = scmp.lt.s32.totalorder %s28, 1
      %s1150 = scalar_select %p1149, %s28, 1
      %s1151 = smul.addr %s1150, 4
      %s1152 = scalar_lea.vmem %s17, %s1151
      // Predicated region
      $region89: #{fastspeech_forward.3} parent=87 // pred_check
        %p1153 = pneg %p408
      $region90: #{fastspeech_forward.3} parent=87 // pred_check_branch
        %1155 = sbr.rel (%p1153) target = $region92
      $region91: #{fastspeech_forward.3} parent=87 // pred_region
        _
      $region92: #{fastspeech_forward.3} parent=87 // pred_fallthru
        _
    $region88: #{fastspeech_forward.3} parent=5 // pred_fallthru
      _
    %p1156 = scmp.le.s32.totalorder 2, %s23
    // Predicated region
    $region93: #{fastspeech_forward.3} parent=5 // pred_check
      %p1157 = pneg %p1156
    $region94: #{fastspeech_forward.3} parent=5 // pred_check_branch
      %1159 = sbr.rel (%p1157) target = $region96
    $region95: #{fastspeech_forward.3} parent=5 // pred_region
      %s1160 = ssub.s32 %s23, 2
      // Predicated region
      $region97: #{fastspeech_forward.3} parent=95 // pred_check
        %p1161 = pneg %p414
      $region98: #{fastspeech_forward.3} parent=95 // pred_check_branch
        %1163 = sbr.rel (%p1161) target = $region100
      $region99: #{fastspeech_forward.3} parent=95 // pred_region
        %p1164 = scmp.lt.s32.totalorder %s29, 1
        %s1165 = scalar_select %p1164, %s29, 1
        %s1166 = smul.addr %s1165, 4
        %s1167 = scalar_lea.vmem %s17, %s1166
      $region100: #{fastspeech_forward.3} parent=95 // pred_fallthru
        _
    $region96: #{fastspeech_forward.3} parent=5 // pred_fallthru
      _
  $region6: #{fastspeech_forward.3} parent=0 // loop_footer
    %s27 = sadd.s32 1, %s23
  $region7: #{fastspeech_forward.3} parent=0 // loop_footer_branch
    %22 = sbr.rel target = $region3
  $region8: #{fastspeech_forward.3} parent=0 // loop_exit
    _

// kernel: fastspeech_forward.4
$region0: #{fastspeech_forward.4}
  #allocation0 [shape = 'u32[]', space=smem, size = 0x4, offset = 0x4, fixed_abs, tag = 'smem constant byte address 0x4 - core index']
  #allocation1 [shape = 'u32[72,128]{1,0:T(1,128)}', space=vmem, size = 0x9000, scoped, tag = 'internal scratch']
  %s0 = inlined_call_operand.vmem [shape: bf16[2,8,32], index: 0, kind: input, shape index: {}]
  %s1 = inlined_call_operand.vmem [shape: bf16[96,32], index: 1, kind: input, shape index: {}]
  %s2 = inlined_call_operand.vmem [shape: f32[1,32], index: 2, kind: input, shape index: {}]
  %s3 = inlined_call_operand.vmem [shape: f32[1,32], index: 3, kind: input, shape index: {}]
  %s4 = inlined_call_operand.vmem [shape: f32[1,32], index: 4, kind: input, shape index: {}]
  %s5 = inlined_call_operand.vmem [shape: bf16[96,32], index: 5, kind: input, shape index: {}]
  %s6 = inlined_call_operand.vmem [shape: f32[1,32], index: 6, kind: input, shape index: {}]
  %s7 = inlined_call_operand.vmem [shape: f32[1,32], index: 7, kind: input, shape index: {}]
  %s8 = inlined_call_operand.vmem [shape: f32[1,32], index: 8, kind: input, shape index: {}]
  %s9 = inlined_call_operand.vmem [shape: bf16[32,128], index: 9, kind: input, shape index: {}]
  %s10 = inlined_call_operand.vmem [shape: f32[1,128], index: 10, kind: input, shape index: {}]
  %s11 = inlined_call_operand.vmem [shape: f32[2,8,128], index: 11, kind: output, shape index: {}]
  %s12 = sld [smem:[#allocation0]]
  $region77: #{fastspeech_forward.4} parent=0
    _
  %s14 = ssub.s32 1, %s12
  %s15 = scalar_select 0, %s14, %s12
  loop: start=0, step=1, limit=4
  $region2: #{fastspeech_forward.4} parent=0 // loop_pre_header
    _
  $region3: #{fastspeech_forward.4} parent=0 // loop_header
    %s17 = sphi 0, %s21
    %p18 = scmp.ge.s32.totalorder %s17, 4
    %s27 = sphi 0, %s29
    %s30 = sphi 0, %s27
    %s31 = sphi 0, %s30
    %s47 = sphi 0, %s31
    %s51 = sphi 0, %s51
    %s53 = sphi 0, %s51
    %s54 = sphi 0, %s53
    %s68 = sphi 0, %s54
    %s72 = sphi 0, %s72
    %s74 = sphi 0, %s72
    %s75 = sphi 0, %s74
    %s89 = sphi 0, %s75
    %s93 = sphi 0, %s93
    %s95 = sphi 0, %s93
    %s96 = sphi 0, %s95
    %s110 = sphi 0, %s96
    %s114 = sphi 0, %s114
    %s116 = sphi 0, %s114
    %s117 = sphi 0, %s116
    %s131 = sphi 0, %s117
    %s135 = sphi 0, %s135
    %s137 = sphi 0, %s135
    %s138 = sphi 0, %s137
    %s152 = sphi 0, %s138
    %s156 = sphi 0, %s156
    %s158 = sphi 0, %s156
    %s159 = sphi 0, %s158
    %s173 = sphi 0, %s159
    %s177 = sphi 0, %s177
    %s179 = sphi 0, %s177
    %s180 = sphi 0, %s179
    %s194 = sphi 0, %s180
    %s198 = sphi 0, %s198
    %s200 = sphi 0, %s198
    %s201 = sphi 0, %s200
    %s215 = sphi 0, %s201
    %s219 = sphi 0, %s219
    %s221 = sphi 0, %s219
    %s222 = sphi 0, %s221
    %s236 = sphi 0, %s222
    %s240 = sphi 0, %s240
    %s242 = sphi 0, %s240
    %s243 = sphi 0, %s242
    %s257 = sphi 0, %s243
    %s263 = sphi 0, %s265
    %s266 = sphi 0, %s263
    %s267 = sphi 0, %s266
    %s283 = sphi 0, %s267
  $region4: #{fastspeech_forward.4} parent=0 // loop_header_branch
    %20 = sbr.rel (%p18) target = $region8
  $region5: #{fastspeech_forward.4} parent=0 // loop_body
    %s22 = ssub.s32 %s17, 1
    %s23 = ssub.s32 %s17, 2
    %s24 = sadd.s32 %s17, 1
    %s25 = ssub.s32 %s17, %s24
    %p26 = scmp.eq.s32.totalorder %s25, 0
    %s28 = sadd.s32 %s27, 1
    %s29 = scalar_select %p26, %s27, %s28
    %p32 = pneg %p26
    %p33 = scmp.eq.s32.totalorder %s17, 1
    %p34 = por %p32, %p33
    %p35 = scmp.ne.s32.totalorder %s27, %s30
    %p36 = scmp.eq.s32.totalorder %s17, 0
    %p37 = por %p35, %p36
    %p38 = scmp.ne.s32.totalorder %s27, %s30
    %p39 = scmp.eq.s32.totalorder %s22, 1
    %p40 = por %p38, %p39
    %p41 = scmp.ne.s32.totalorder %s30, %s31
    %p42 = scmp.eq.s32.totalorder %s22, 0
    %p43 = por %p41, %p42
    %p44 = scmp.ne.s32.totalorder %s30, %s31
    %p45 = scmp.eq.s32.totalorder %s23, 1
    %p46 = por %p44, %p45
    %p48 = scmp.ne.s32.totalorder %s31, %s47
    %p49 = scmp.eq.s32.totalorder %s23, 0
    %p50 = por %p48, %p49
    %s52 = sadd.s32 %s51, 1
    %p55 = scmp.eq.s32.totalorder %s17, 1
    %p56 = scmp.ne.s32.totalorder %s51, %s53
    %p57 = scmp.eq.s32.totalorder %s17, 0
    %p58 = por %p56, %p57
    %p59 = scmp.ne.s32.totalorder %s51, %s53
    %p60 = scmp.eq.s32.totalorder %s22, 1
    %p61 = por %p59, %p60
    %p62 = scmp.ne.s32.totalorder %s53, %s54
    %p63 = scmp.eq.s32.totalorder %s22, 0
    %p64 = por %p62, %p63
    %p65 = scmp.ne.s32.totalorder %s53, %s54
    %p66 = scmp.eq.s32.totalorder %s23, 1
    %p67 = por %p65, %p66
    %p69 = scmp.ne.s32.totalorder %s54, %s68
    %p70 = scmp.eq.s32.totalorder %s23, 0
    %p71 = por %p69, %p70
    %s73 = sadd.s32 %s72, 1
    %p76 = scmp.eq.s32.totalorder %s17, 1
    %p77 = scmp.ne.s32.totalorder %s72, %s74
    %p78 = scmp.eq.s32.totalorder %s17, 0
    %p79 = por %p77, %p78
    %p80 = scmp.ne.s32.totalorder %s72, %s74
    %p81 = scmp.eq.s32.totalorder %s22, 1
    %p82 = por %p80, %p81
    %p83 = scmp.ne.s32.totalorder %s74, %s75
    %p84 = scmp.eq.s32.totalorder %s22, 0
    %p85 = por %p83, %p84
    %p86 = scmp.ne.s32.totalorder %s74, %s75
    %p87 = scmp.eq.s32.totalorder %s23, 1
    %p88 = por %p86, %p87
    %p90 = scmp.ne.s32.totalorder %s75, %s89
    %p91 = scmp.eq.s32.totalorder %s23, 0
    %p92 = por %p90, %p91
    %s94 = sadd.s32 %s93, 1
    %p97 = scmp.eq.s32.totalorder %s17, 1
    %p98 = scmp.ne.s32.totalorder %s93, %s95
    %p99 = scmp.eq.s32.totalorder %s17, 0
    %p100 = por %p98, %p99
    %p101 = scmp.ne.s32.totalorder %s93, %s95
    %p102 = scmp.eq.s32.totalorder %s22, 1
    %p103 = por %p101, %p102
    %p104 = scmp.ne.s32.totalorder %s95, %s96
    %p105 = scmp.eq.s32.totalorder %s22, 0
    %p106 = por %p104, %p105
    %p107 = scmp.ne.s32.totalorder %s95, %s96
    %p108 = scmp.eq.s32.totalorder %s23, 1
    %p109 = por %p107, %p108
    %p111 = scmp.ne.s32.totalorder %s96, %s110
    %p112 = scmp.eq.s32.totalorder %s23, 0
    %p113 = por %p111, %p112
    %s115 = sadd.s32 %s114, 1
    %p118 = scmp.eq.s32.totalorder %s17, 1
    %p119 = scmp.ne.s32.totalorder %s114, %s116
    %p120 = scmp.eq.s32.totalorder %s17, 0
    %p121 = por %p119, %p120
    %p122 = scmp.ne.s32.totalorder %s114, %s116
    %p123 = scmp.eq.s32.totalorder %s22, 1
    %p124 = por %p122, %p123
    %p125 = scmp.ne.s32.totalorder %s116, %s117
    %p126 = scmp.eq.s32.totalorder %s22, 0
    %p127 = por %p125, %p126
    %p128 = scmp.ne.s32.totalorder %s116, %s117
    %p129 = scmp.eq.s32.totalorder %s23, 1
    %p130 = por %p128, %p129
    %p132 = scmp.ne.s32.totalorder %s117, %s131
    %p133 = scmp.eq.s32.totalorder %s23, 0
    %p134 = por %p132, %p133
    %s136 = sadd.s32 %s135, 1
    %p139 = scmp.eq.s32.totalorder %s17, 1
    %p140 = scmp.ne.s32.totalorder %s135, %s137
    %p141 = scmp.eq.s32.totalorder %s17, 0
    %p142 = por %p140, %p141
    %p143 = scmp.ne.s32.totalorder %s135, %s137
    %p144 = scmp.eq.s32.totalorder %s22, 1
    %p145 = por %p143, %p144
    %p146 = scmp.ne.s32.totalorder %s137, %s138
    %p147 = scmp.eq.s32.totalorder %s22, 0
    %p148 = por %p146, %p147
    %p149 = scmp.ne.s32.totalorder %s137, %s138
    %p150 = scmp.eq.s32.totalorder %s23, 1
    %p151 = por %p149, %p150
    %p153 = scmp.ne.s32.totalorder %s138, %s152
    %p154 = scmp.eq.s32.totalorder %s23, 0
    %p155 = por %p153, %p154
    %s157 = sadd.s32 %s156, 1
    %p160 = scmp.eq.s32.totalorder %s17, 1
    %p161 = scmp.ne.s32.totalorder %s156, %s158
    %p162 = scmp.eq.s32.totalorder %s17, 0
    %p163 = por %p161, %p162
    %p164 = scmp.ne.s32.totalorder %s156, %s158
    %p165 = scmp.eq.s32.totalorder %s22, 1
    %p166 = por %p164, %p165
    %p167 = scmp.ne.s32.totalorder %s158, %s159
    %p168 = scmp.eq.s32.totalorder %s22, 0
    %p169 = por %p167, %p168
    %p170 = scmp.ne.s32.totalorder %s158, %s159
    %p171 = scmp.eq.s32.totalorder %s23, 1
    %p172 = por %p170, %p171
    %p174 = scmp.ne.s32.totalorder %s159, %s173
    %p175 = scmp.eq.s32.totalorder %s23, 0
    %p176 = por %p174, %p175
    %s178 = sadd.s32 %s177, 1
    %p181 = scmp.eq.s32.totalorder %s17, 1
    %p182 = scmp.ne.s32.totalorder %s177, %s179
    %p183 = scmp.eq.s32.totalorder %s17, 0
    %p184 = por %p182, %p183
    %p185 = scmp.ne.s32.totalorder %s177, %s179
    %p186 = scmp.eq.s32.totalorder %s22, 1
    %p187 = por %p185, %p186
    %p188 = scmp.ne.s32.totalorder %s179, %s180
    %p189 = scmp.eq.s32.totalorder %s22, 0
    %p190 = por %p188, %p189
    %p191 = scmp.ne.s32.totalorder %s179, %s180
    %p192 = scmp.eq.s32.totalorder %s23, 1
    %p193 = por %p191, %p192
    %p195 = scmp.ne.s32.totalorder %s180, %s194
    %p196 = scmp.eq.s32.totalorder %s23, 0
    %p197 = por %p195, %p196
    %s199 = sadd.s32 %s198, 1
    %p202 = scmp.eq.s32.totalorder %s17, 1
    %p203 = scmp.ne.s32.totalorder %s198, %s200
    %p204 = scmp.eq.s32.totalorder %s17, 0
    %p205 = por %p203, %p204
    %p206 = scmp.ne.s32.totalorder %s198, %s200
    %p207 = scmp.eq.s32.totalorder %s22, 1
    %p208 = por %p206, %p207
    %p209 = scmp.ne.s32.totalorder %s200, %s201
    %p210 = scmp.eq.s32.totalorder %s22, 0
    %p211 = por %p209, %p210
    %p212 = scmp.ne.s32.totalorder %s200, %s201
    %p213 = scmp.eq.s32.totalorder %s23, 1
    %p214 = por %p212, %p213
    %p216 = scmp.ne.s32.totalorder %s201, %s215
    %p217 = scmp.eq.s32.totalorder %s23, 0
    %p218 = por %p216, %p217
    %s220 = sadd.s32 %s219, 1
    %p223 = scmp.eq.s32.totalorder %s17, 1
    %p224 = scmp.ne.s32.totalorder %s219, %s221
    %p225 = scmp.eq.s32.totalorder %s17, 0
    %p226 = por %p224, %p225
    %p227 = scmp.ne.s32.totalorder %s219, %s221
    %p228 = scmp.eq.s32.totalorder %s22, 1
    %p229 = por %p227, %p228
    %p230 = scmp.ne.s32.totalorder %s221, %s222
    %p231 = scmp.eq.s32.totalorder %s22, 0
    %p232 = por %p230, %p231
    %p233 = scmp.ne.s32.totalorder %s221, %s222
    %p234 = scmp.eq.s32.totalorder %s23, 1
    %p235 = por %p233, %p234
    %p237 = scmp.ne.s32.totalorder %s222, %s236
    %p238 = scmp.eq.s32.totalorder %s23, 0
    %p239 = por %p237, %p238
    %s241 = sadd.s32 %s240, 1
    %p244 = scmp.eq.s32.totalorder %s17, 1
    %p245 = scmp.ne.s32.totalorder %s240, %s242
    %p246 = scmp.eq.s32.totalorder %s17, 0
    %p247 = por %p245, %p246
    %p248 = scmp.ne.s32.totalorder %s240, %s242
    %p249 = scmp.eq.s32.totalorder %s22, 1
    %p250 = por %p248, %p249
    %p251 = scmp.ne.s32.totalorder %s242, %s243
    %p252 = scmp.eq.s32.totalorder %s22, 0
    %p253 = por %p251, %p252
    %p254 = scmp.ne.s32.totalorder %s242, %s243
    %p255 = scmp.eq.s32.totalorder %s23, 1
    %p256 = por %p254, %p255
    %p258 = scmp.ne.s32.totalorder %s243, %s257
    %p259 = scmp.eq.s32.totalorder %s23, 0
    %p260 = por %p258, %p259
    %s261 = ssub.s32 %s17, %s24
    %p262 = scmp.eq.s32.totalorder %s261, 0
    %s264 = sadd.s32 %s263, 1
    %s265 = scalar_select %p262, %s263, %s264
    %p268 = pneg %p262
    %p269 = scmp.eq.s32.totalorder %s17, 1
    %p270 = por %p268, %p269
    %p271 = scmp.ne.s32.totalorder %s263, %s266
    %p272 = scmp.eq.s32.totalorder %s17, 0
    %p273 = por %p271, %p272
    %p274 = scmp.ne.s32.totalorder %s263, %s266
    %p275 = scmp.eq.s32.totalorder %s22, 1
    %p276 = por %p274, %p275
    %p277 = scmp.ne.s32.totalorder %s266, %s267
    %p278 = scmp.eq.s32.totalorder %s22, 0
    %p279 = por %p277, %p278
    %p280 = scmp.ne.s32.totalorder %s266, %s267
    %p281 = scmp.eq.s32.totalorder %s23, 1
    %p282 = por %p280, %p281
    %p284 = scmp.ne.s32.totalorder %s267, %s283
    %p285 = scmp.eq.s32.totalorder %s23, 0
    %p286 = por %p284, %p285
    %p287 = scmp.le.s32.totalorder 1, %s17
    %p288 = scmp.lt.s32.totalorder %s17, 3
    %p289 = pnand %p287, %p288
    %p290 = pneg %p289
    // Predicated region
    $region9: #{fastspeech_forward.4} parent=5 // pred_check
      _
    $region10: #{fastspeech_forward.4} parent=5 // pred_check_branch
      %292 = sbr.rel (%p289) target = $region12
    $region11: #{fastspeech_forward.4} parent=5 // pred_region
      %s293 = ssub.s32 %s17, 1
      // Predicated region
      $region13: #{fastspeech_forward.4} parent=11 // pred_check
        %p294 = pneg %p64
      $region14: #{fastspeech_forward.4} parent=11 // pred_check_branch
        %296 = sbr.rel (%p294) target = $region16
      $region15: #{fastspeech_forward.4} parent=11 // pred_region
        _
      $region16: #{fastspeech_forward.4} parent=11 // pred_fallthru
        _
      // Predicated region
      $region17: #{fastspeech_forward.4} parent=11 // pred_check
        %p297 = pneg %p85
      $region18: #{fastspeech_forward.4} parent=11 // pred_check_branch
        %299 = sbr.rel (%p297) target = $region20
      $region19: #{fastspeech_forward.4} parent=11 // pred_region
        _
      $region20: #{fastspeech_forward.4} parent=11 // pred_fallthru
        _
      // Predicated region
      $region21: #{fastspeech_forward.4} parent=11 // pred_check
        %p300 = pneg %p106
      $region22: #{fastspeech_forward.4} parent=11 // pred_check_branch
        %302 = sbr.rel (%p300) target = $region24
      $region23: #{fastspeech_forward.4} parent=11 // pred_region
        _
      $region24: #{fastspeech_forward.4} parent=11 // pred_fallthru
        _
      // Predicated region
      $region25: #{fastspeech_forward.4} parent=11 // pred_check
        %p303 = pneg %p127
      $region26: #{fastspeech_forward.4} parent=11 // pred_check_branch
        %305 = sbr.rel (%p303) target = $region28
      $region27: #{fastspeech_forward.4} parent=11 // pred_region
        _
      $region28: #{fastspeech_forward.4} parent=11 // pred_fallthru
        _
      // Predicated region
      $region29: #{fastspeech_forward.4} parent=11 // pred_check
        %p306 = pneg %p148
      $region30: #{fastspeech_forward.4} parent=11 // pred_check_branch
        %308 = sbr.rel (%p306) target = $region32
      $region31: #{fastspeech_forward.4} parent=11 // pred_region
        _
      $region32: #{fastspeech_forward.4} parent=11 // pred_fallthru
        _
      // Predicated region
      $region33: #{fastspeech_forward.4} parent=11 // pred_check
        %p309 = pneg %p169
      $region34: #{fastspeech_forward.4} parent=11 // pred_check_branch
        %311 = sbr.rel (%p309) target = $region36
      $region35: #{fastspeech_forward.4} parent=11 // pred_region
        _
      $region36: #{fastspeech_forward.4} parent=11 // pred_fallthru
        _
      // Predicated region
      $region37: #{fastspeech_forward.4} parent=11 // pred_check
        %p312 = pneg %p190
      $region38: #{fastspeech_forward.4} parent=11 // pred_check_branch
        %314 = sbr.rel (%p312) target = $region40
      $region39: #{fastspeech_forward.4} parent=11 // pred_region
        _
      $region40: #{fastspeech_forward.4} parent=11 // pred_fallthru
        _
      // Predicated region
      $region41: #{fastspeech_forward.4} parent=11 // pred_check
        %p315 = pneg %p211
      $region42: #{fastspeech_forward.4} parent=11 // pred_check_branch
        %317 = sbr.rel (%p315) target = $region44
      $region43: #{fastspeech_forward.4} parent=11 // pred_region
        _
      $region44: #{fastspeech_forward.4} parent=11 // pred_fallthru
        _
      // Predicated region
      $region45: #{fastspeech_forward.4} parent=11 // pred_check
        %p318 = pneg %p232
      $region46: #{fastspeech_forward.4} parent=11 // pred_check_branch
        %320 = sbr.rel (%p318) target = $region48
      $region47: #{fastspeech_forward.4} parent=11 // pred_region
        _
      $region48: #{fastspeech_forward.4} parent=11 // pred_fallthru
        _
      // Predicated region
      $region49: #{fastspeech_forward.4} parent=11 // pred_check
        %p321 = pneg %p253
      $region50: #{fastspeech_forward.4} parent=11 // pred_check_branch
        %323 = sbr.rel (%p321) target = $region52
      $region51: #{fastspeech_forward.4} parent=11 // pred_region
        _
      $region52: #{fastspeech_forward.4} parent=11 // pred_fallthru
        _
    $region12: #{fastspeech_forward.4} parent=5 // pred_fallthru
      _
    %p324 = scmp.lt.s32.totalorder %s17, 2
    // Predicated region
    $region53: #{fastspeech_forward.4} parent=5 // pred_check
      %p325 = pneg %p324
    $region54: #{fastspeech_forward.4} parent=5 // pred_check_branch
      %327 = sbr.rel (%p325) target = $region56
    $region55: #{fastspeech_forward.4} parent=5 // pred_region
      // Predicated region
      $region57: #{fastspeech_forward.4} parent=55 // pred_check
        %p328 = pneg %p37
      $region58: #{fastspeech_forward.4} parent=55 // pred_check_branch
        %330 = sbr.rel (%p328) target = $region60
      $region59: #{fastspeech_forward.4} parent=55 // pred_region
        %p331 = scmp.lt.s32.totalorder %s17, 1
        %s332 = scalar_select %p331, %s17, 1
        %s333 = smul.addr %s332, 4
        %s334 = scalar_lea.vmem %s0, %s333
      $region60: #{fastspeech_forward.4} parent=55 // pred_fallthru
        _
    $region56: #{fastspeech_forward.4} parent=5 // pred_fallthru
      _
    %p335 = scmp.le.s32.totalorder 1, %s17
    %p336 = scmp.lt.s32.totalorder %s17, 3
    %p337 = pnand %p335, %p336
    %p338 = pneg %p337
    // Predicated region
    $region61: #{fastspeech_forward.4} parent=5 // pred_check
      _
    $region62: #{fastspeech_forward.4} parent=5 // pred_check_branch
      %340 = sbr.rel (%p337) target = $region64
    $region63: #{fastspeech_forward.4} parent=5 // pred_region
      %s341 = ssub.s32 %s17, 1
      %p342 = scmp.lt.s32.totalorder %s22, 1
      %s343 = scalar_select %p342, %s22, 1
      %s344 = smul.addr %s343, 4
      %s345 = scalar_lea.vmem %s0, %s344
      %p346 = pneg %p43
      %p347 = pneg %p40
      %p348 = pneg %p64
      %p349 = pneg %p61
      %p350 = pneg %p85
      %p351 = pneg %p82
      %p352 = pneg %p106
      %p353 = pneg %p103
      %p354 = pneg %p127
      %p355 = pneg %p124
      %p356 = pneg %p148
      %p357 = pneg %p145
      %p358 = pneg %p169
      %p359 = pneg %p166
      %p360 = pneg %p190
      %p361 = pneg %p187
      %p362 = pneg %p211
      %p363 = pneg %p208
      %p364 = pneg %p232
      %p365 = pneg %p229
      %p366 = pneg %p253
      %p367 = pneg %p250
      %p368 = pneg %p279
      %p369 = pneg %p276
      %p370 = scmp.lt.s32.totalorder %s22, 1
      %s371 = scalar_select %p370, %s22, 1
      %s372 = smul.addr %s371, 8
      %s373 = scalar_lea.vmem %s11, %s372
      %p374 = scmp.lt.s32.totalorder %s22, 1
      %s375 = scalar_select %p374, %s22, 1
      %s376 = smul.addr %s375, 4
      %s377 = scalar_lea.vmem %s0, %s376
      %p378 = scmp.lt.s32.totalorder %s22, 1
      %s379 = scalar_select %p378, %s22, 1
      %s380 = smul.addr %s379, 8
      %s381 = scalar_lea.vmem %s11, %s380
      %v383 = vld [vmem:[%s377] sm:$0xf]
      %v384 = vld [vmem:[%s1] sm:$0xf]
      %v385 = vld [vmem:[%s1 + $0x4] sm:$0xf]
      %v386 = vld [vmem:[%s1 + $0x8] sm:$0xf]
      %v387 = vld [vmem:[%s1 + $0xc] sm:$0xf]
      %v388 = vld [vmem:[%s1 + $0x10] sm:$0xf]
      %v389 = vld [vmem:[%s1 + $0x14] sm:$0xf]
      %v390 = vld [vmem:[%s1 + $0x18] sm:$0xf]
      %v391 = vld [vmem:[%s1 + $0x1c] sm:$0xf]
      %v392 = vld [vmem:[%s1 + $0x20] sm:$0xf]
      %v393 = vld [vmem:[%s1 + $0x24] sm:$0xf]
      %v394 = vld [vmem:[%s1 + $0x28] sm:$0xf]
      %v395 = vld [vmem:[%s1 + $0x2c] sm:$0xf]
      %v396 = vld [vmem:[%s2] sm:$0x1]
      %v398 = vunpack.c.l.b16 %v383
      %v399 = vpack.c.b16 %v398, %v398
      %v401 = vshrl.u32 %v399, 16
      %v403 = vrot.slane %v401, 7
      %v404 = vshll.u32 %v399, 16
      %v406 = vor.u32 %v403, %v404
      %vm408 = vcmask 1040384
      %vm409 = vsmask.f32 256
      %vm410 = vmand %vm408, %vm409
      %v411 = vsel %vm410, 0, %v406
      %v412 = vrot.slane %v404, 1
      %v413 = vor.u32 %v401, %v412
      %vm415 = vcmask 1043456
      %vm416 = vsmask.f32 3328
      %vm417 = vmand %vm415, %vm416
      %v418 = vsel %vm417, %v413, 0
      %419 = vrot.lane.b32.xlu0 %v399, 32
      %v420 = vpop.permute.xlu0 %419
      %422 = vrot.lane.b32.xlu0 %v418, 64
      %v423 = vpop.permute.xlu0 %422
      %vm424 = vcmask 261120
      %v427 = vsel %vm424, %v411, %v420
      %vm428 = vcmask 523264
      %v430 = vsel %vm428, %v427, %v423
      %v432 = vperm.slane %v396, 0
      %v446 = vunpack.c.l.b16 %v384
      %v447 = vunpack.c.l.b16 %v385
      %v448 = vunpack.c.l.b16 %v386
      %v449 = vunpack.c.l.b16 %v387
      %v450 = vunpack.c.l.b16 %v388
      %v451 = vunpack.c.l.b16 %v389
      %v452 = vunpack.c.l.b16 %v390
      %v453 = vunpack.c.l.b16 %v391
      %v454 = vunpack.c.l.b16 %v392
      %v455 = vunpack.c.l.b16 %v393
      %v456 = vunpack.c.l.b16 %v394
      %v457 = vunpack.c.l.b16 %v395
      %v458 = vpack.c.b16 %v447, %v446
      %v459 = vpack.c.b16 %v449, %v448
      %v460 = vpack.c.b16 %v451, %v450
      %v461 = vpack.c.b16 %v453, %v452
      %v462 = vpack.c.b16 %v455, %v454
      %v463 = vpack.c.b16 %v457, %v456
      %vm470 = vcmask 785408
      %v471 = vsel %vm470, %v430, 0
      %473 = vmatpush.bf16.msra.mxu0 0
      %474 = vmatpush.bf16.msra.mxu0 0
      %475 = vmatpush.bf16.msra.mxu0 %v463
      %476 = vmatpush.bf16.msra.mxu0 %v462
      %477 = vmatpush.bf16.msra.mxu0 %v461
      %478 = vmatpush.bf16.msra.mxu0 %v460
      %479 = vmatpush.bf16.msra.mxu0 %v459
      %480 = vmatpush.bf16.msra.mxu0 %v458
      %481 = vmatmul.bf16.gmra.mxu0 %v471
      %v482 = vpop.f32.mrf.mxu0
      %v483 = vadd.f32 %v432, %v482
      %v484 = vpop.f32.mrf.mxu0
      %485 = vdwg.mxu0
      %v486 = vmax.f32 %v483, 0.0
      %v487 = vld [vmem:[%s3] sm:$0x1]
      %v488 = vld [vmem:[%s4] sm:$0x1]
      %v489 = vsel %vm424, %v486, 0.0
      %490 = vadd.xlane.f32.xlu0 %v489
      %v491 = vpop.xlane.xlu0 %490
      %v492 = vrcp.pop 32.0
      %v493 = vmul.f32 32.0, %v492
      %v494 = vsub.f32 1.0, %v493
      %v495 = vmul.f32 %v492, %v494
      %v496 = vadd.f32 %v492, %v495
      %vm497 = vweird.f32 %v492
      %v498 = vsel %vm497, %v492, %v496
      %v499 = vmul.f32 %v491, %v498
      %v500 = vmul.f32 %v486, %v486
      %v501 = vsel %vm424, %v500, 0.0
      %502 = vadd.xlane.f32.xlu0 %v501
      %v503 = vpop.xlane.xlu0 %502
      %v504 = vmul.f32 %v503, %v498
      %v505 = vmul.f32 %v499, %v499
      %v506 = vsub.f32 %v504, %v505
      %v507 = vsub.f32 %v486, %v499
      %v508 = vadd.f32 %v506, 1e-05
      %v509 = vrsqrt.pop %v508
      %v510 = vmul.f32 %v509, %v508
      %v511 = vmul.f32 %v510, %v509
      %v512 = vmul.f32 0.5, %v511
      %v513 = vsub.f32 1.5, %v512
      %v514 = vmul.f32 %v509, %v513
      %vm515 = vweird.f32 %v508
      %vm516 = vweird.f32 %v509
      %vm517 = vmor %vm515, %vm516
      %v518 = vsel %vm517, %v509, %v514
      %v519 = vmul.f32 %v507, %v518
      %v521 = vperm.slane %v487, 0
      %v523 = vmul.f32 %v519, %v521
      %v525 = vperm.slane %v488, 0
      %v527 = vadd.f32 %v523, %v525
      %v528 = vpack.c.bf16 %v527, %v527
      %v529 = vld [vmem:[%s5] sm:$0xf]
      %v530 = vld [vmem:[%s5 + $0x4] sm:$0xf]
      %v531 = vld [vmem:[%s5 + $0x8] sm:$0xf]
      %v532 = vld [vmem:[%s5 + $0xc] sm:$0xf]
      %v533 = vld [vmem:[%s5 + $0x10] sm:$0xf]
      %v534 = vld [vmem:[%s5 + $0x14] sm:$0xf]
      %v535 = vld [vmem:[%s5 + $0x18] sm:$0xf]
      %v536 = vld [vmem:[%s5 + $0x1c] sm:$0xf]
      %v537 = vld [vmem:[%s5 + $0x20] sm:$0xf]
      %v538 = vld [vmem:[%s5 + $0x24] sm:$0xf]
      %v539 = vld [vmem:[%s5 + $0x28] sm:$0xf]
      %v540 = vld [vmem:[%s5 + $0x2c] sm:$0xf]
      %v541 = vld [vmem:[%s6] sm:$0x1]
      %v543 = vunpack.c.l.b16 %v528
      %v544 = vpack.c.b16 %v543, %v543
      %v546 = vshrl.u32 %v544, 16
      %v548 = vrot.slane %v546, 7
      %v549 = vshll.u32 %v544, 16
      %v551 = vor.u32 %v548, %v549
      %v553 = vsel %vm410, 0, %v551
      %v554 = vrot.slane %v549, 1
      %v555 = vor.u32 %v546, %v554
      %v557 = vsel %vm417, %v555, 0
      %558 = vrot.lane.b32.xlu0 %v544, 32
      %v559 = vpop.permute.xlu0 %558
      %561 = vrot.lane.b32.xlu0 %v557, 64
      %v562 = vpop.permute.xlu0 %561
      %v565 = vsel %vm424, %v553, %v559
      %v567 = vsel %vm428, %v565, %v562
      %v569 = vperm.slane %v541, 0
      %v583 = vunpack.c.l.b16 %v529
      %v584 = vunpack.c.l.b16 %v530
      %v585 = vunpack.c.l.b16 %v531
      %v586 = vunpack.c.l.b16 %v532
      %v587 = vunpack.c.l.b16 %v533
      %v588 = vunpack.c.l.b16 %v534
      %v589 = vunpack.c.l.b16 %v535
      %v590 = vunpack.c.l.b16 %v536
      %v591 = vunpack.c.l.b16 %v537
      %v592 = vunpack.c.l.b16 %v538
      %v593 = vunpack.c.l.b16 %v539
      %v594 = vunpack.c.l.b16 %v540
      %v595 = vpack.c.b16 %v584, %v583
      %v596 = vpack.c.b16 %v586, %v585
      %v597 = vpack.c.b16 %v588, %v587
      %v598 = vpack.c.b16 %v590, %v589
      %v599 = vpack.c.b16 %v592, %v591
      %v600 = vpack.c.b16 %v594, %v593
      %v607 = vsel %vm470, %v567, 0
      %609 = vmatpush.bf16.msra.mxu0 0
      %610 = vmatpush.bf16.msra.mxu0 0
      %611 = vmatpush.bf16.msra.mxu0 %v600
      %612 = vmatpush.bf16.msra.mxu0 %v599
      %613 = vmatpush.bf16.msra.mxu0 %v598
      %614 = vmatpush.bf16.msra.mxu0 %v597
      %615 = vmatpush.bf16.msra.mxu0 %v596
      %616 = vmatpush.bf16.msra.mxu0 %v595
      %617 = vmatmul.bf16.gmra.mxu0 %v607
      %v618 = vpop.f32.mrf.mxu0
      %v619 = vadd.f32 %v569, %v618
      %v620 = vpop.f32.mrf.mxu0
      %621 = vdwg.mxu0
      %v622 = vmax.f32 %v619, 0.0
      %v623 = vld [vmem:[%s7] sm:$0x1]
      %v624 = vld [vmem:[%s8] sm:$0x1]
      %v625 = vsel %vm424, %v622, 0.0
      %626 = vadd.xlane.f32.xlu0 %v625
      %v627 = vpop.xlane.xlu0 %626
      %v628 = vmul.f32 %v627, %v498
      %v629 = vmul.f32 %v622, %v622
      %v630 = vsel %vm424, %v629, 0.0
      %631 = vadd.xlane.f32.xlu0 %v630
      %v632 = vpop.xlane.xlu0 %631
      %v633 = vmul.f32 %v632, %v498
      %v634 = vmul.f32 %v628, %v628
      %v635 = vsub.f32 %v633, %v634
      %v636 = vsub.f32 %v622, %v628
      %v637 = vadd.f32 %v635, 1e-05
      %v638 = vrsqrt.pop %v637
      %v639 = vmul.f32 %v638, %v637
      %v640 = vmul.f32 %v639, %v638
      %v641 = vmul.f32 0.5, %v640
      %v642 = vsub.f32 1.5, %v641
      %v643 = vmul.f32 %v638, %v642
      %vm644 = vweird.f32 %v637
      %vm645 = vweird.f32 %v638
      %vm646 = vmor %vm644, %vm645
      %v647 = vsel %vm646, %v638, %v643
      %v648 = vmul.f32 %v636, %v647
      %v650 = vperm.slane %v623, 0
      %v652 = vmul.f32 %v648, %v650
      %v654 = vperm.slane %v624, 0
      %v656 = vadd.f32 %v652, %v654
      %v657 = vpack.c.bf16 %v656, %v656
      %v658 = vld [vmem:[%s9] sm:$0xf]
      %v659 = vld [vmem:[%s9 + $0x4] sm:$0xf]
      %v660 = vld [vmem:[%s9 + $0x8] sm:$0xf]
      %v661 = vld [vmem:[%s9 + $0xc] sm:$0xf]
      %v662 = vld [vmem:[%s10] sm:$0x1]
      %v664 = vperm.slane %v662, 0
      %v670 = vunpack.c.l.b16 %v658
      %v671 = vunpack.c.l.b16 %v659
      %v672 = vunpack.c.l.b16 %v660
      %v673 = vunpack.c.l.b16 %v661
      %v674 = vpack.c.b16 %v671, %v670
      %v675 = vpack.c.b16 %v673, %v672
      %v679 = vsel %vm424, %v657, 0
      %681 = vmatpush.bf16.msra.mxu0 0
      %682 = vmatpush.bf16.msra.mxu0 0
      %683 = vmatpush.bf16.msra.mxu0 0
      %684 = vmatpush.bf16.msra.mxu0 0
      %685 = vmatpush.bf16.msra.mxu0 0
      %686 = vmatpush.bf16.msra.mxu0 0
      %687 = vmatpush.bf16.msra.mxu0 %v675
      %688 = vmatpush.bf16.msra.mxu0 %v674
      %689 = vmatmul.bf16.gmra.mxu0 %v679
      %v690 = vpop.f32.mrf.mxu0
      %v691 = vadd.f32 %v664, %v690
      %v692 = vpop.f32.mrf.mxu0
      %693 = vdwg.mxu0
      %694 = vst [vmem:[%s381] sm:$0xff] %v691
      %p695 = scmp.lt.s32.totalorder %s22, 1
      %s696 = scalar_select %p695, %s22, 1
      %s697 = smul.addr %s696, 8
      %s698 = scalar_lea.vmem %s11, %s697
      // Predicated region
      $region65: #{fastspeech_forward.4} parent=63 // pred_check
        %p699 = pneg %p276
      $region66: #{fastspeech_forward.4} parent=63 // pred_check_branch
        %701 = sbr.rel (%p699) target = $region68
      $region67: #{fastspeech_forward.4} parent=63 // pred_region
        _
      $region68: #{fastspeech_forward.4} parent=63 // pred_fallthru
        _
    $region64: #{fastspeech_forward.4} parent=5 // pred_fallthru
      _
    %p702 = scmp.le.s32.totalorder 2, %s17
    // Predicated region
    $region69: #{fastspeech_forward.4} parent=5 // pred_check
      %p703 = pneg %p702
    $region70: #{fastspeech_forward.4} parent=5 // pred_check_branch
      %705 = sbr.rel (%p703) target = $region72
    $region71: #{fastspeech_forward.4} parent=5 // pred_region
      %s706 = ssub.s32 %s17, 2
      // Predicated region
      $region73: #{fastspeech_forward.4} parent=71 // pred_check
        %p707 = pneg %p282
      $region74: #{fastspeech_forward.4} parent=71 // pred_check_branch
        %709 = sbr.rel (%p707) target = $region76
      $region75: #{fastspeech_forward.4} parent=71 // pred_region
        %p710 = scmp.lt.s32.totalorder %s23, 1
        %s711 = scalar_select %p710, %s23, 1
        %s712 = smul.addr %s711, 8
        %s713 = scalar_lea.vmem %s11, %s712
      $region76: #{fastspeech_forward.4} parent=71 // pred_fallthru
        _
    $region72: #{fastspeech_forward.4} parent=5 // pred_fallthru
      _
  $region6: #{fastspeech_forward.4} parent=0 // loop_footer
    %s21 = sadd.s32 1, %s17
  $region7: #{fastspeech_forward.4} parent=0 // loop_footer_branch
    %16 = sbr.rel target = $region3
  $region8: #{fastspeech_forward.4} parent=0 // loop_exit
    _

// kernel: fastspeech_forward.5
$region0: #{fastspeech_forward.5}
  #allocation0 [shape = 'u32[]', space=smem, size = 0x4, offset = 0x4, fixed_abs, tag = 'smem constant byte address 0x4 - core index']
  #allocation1 [shape = 'u32[72,128]{1,0:T(1,128)}', space=vmem, size = 0x9000, scoped, tag = 'internal scratch']
  #allocation2 [shape = 'f32[24,32]{1,0:T(8,128)}', space=vmem, size = 0x3000, scoped, tag = 'scratch operand']
  %s0 = inlined_call_operand.vmem [shape: bf16[2,24,32], index: 0, kind: input, shape index: {}]
  %s1 = inlined_call_operand.vmem [shape: bf16[32,32], index: 1, kind: input, shape index: {}]
  %s2 = inlined_call_operand.vmem [shape: f32[1,32], index: 2, kind: input, shape index: {}]
  %s3 = inlined_call_operand.vmem [shape: bf16[32,32], index: 3, kind: input, shape index: {}]
  %s4 = inlined_call_operand.vmem [shape: f32[1,32], index: 4, kind: input, shape index: {}]
  %s5 = inlined_call_operand.vmem [shape: bf16[32,32], index: 5, kind: input, shape index: {}]
  %s6 = inlined_call_operand.vmem [shape: f32[1,32], index: 6, kind: input, shape index: {}]
  %s7 = inlined_call_operand.vmem [shape: bf16[32,32], index: 7, kind: input, shape index: {}]
  %s8 = inlined_call_operand.vmem [shape: f32[1,32], index: 8, kind: input, shape index: {}]
  %s9 = inlined_call_operand.vmem [shape: f32[1,32], index: 9, kind: input, shape index: {}]
  %s10 = inlined_call_operand.vmem [shape: f32[1,32], index: 10, kind: input, shape index: {}]
  %s11 = inlined_call_operand.vmem [shape: bf16[96,64], index: 11, kind: input, shape index: {}]
  %s12 = inlined_call_operand.vmem [shape: f32[1,64], index: 12, kind: input, shape index: {}]
  %s13 = inlined_call_operand.vmem [shape: bf16[192,32], index: 13, kind: input, shape index: {}]
  %s14 = inlined_call_operand.vmem [shape: f32[1,32], index: 14, kind: input, shape index: {}]
  %s15 = inlined_call_operand.vmem [shape: f32[1,32], index: 15, kind: input, shape index: {}]
  %s16 = inlined_call_operand.vmem [shape: f32[1,32], index: 16, kind: input, shape index: {}]
  %s17 = inlined_call_operand.vmem [shape: bf16[32,128], index: 17, kind: input, shape index: {}]
  %s18 = inlined_call_operand.vmem [shape: f32[1,128], index: 18, kind: input, shape index: {}]
  %s19 = inlined_call_operand.hbm [shape: f32[2,24,128], index: 19, kind: output, shape index: {}]
  %s20 = sld [smem:[#allocation0]]
  $region109: #{fastspeech_forward.5} parent=0
    _
  %s22 = ssub.s32 1, %s20
  %s23 = scalar_select 0, %s22, %s20
  $region1: #{fastspeech_forward.5} parent=0
    #allocation3 [shape = 'u8[24576]{0}', space=vmem, size = 0x6000, scoped, tag = 'output window, operand 0']
    #allocation4 [shape = 's32[2]{0}', space=sflag, size = 0x8, scoped, tag = 'scoped memory for fastspeech_forward.5']
    %24 = vsyncpa [#allocation4], 0
    %s25 = scalar_lea.sflag [#allocation4], 1
    %26 = vsyncpa %s25, 0
    loop: start=0, step=1, limit=4
    $region2: #{fastspeech_forward.5} parent=1 // loop_pre_header
      _
    $region3: #{fastspeech_forward.5} parent=1 // loop_header
      %s28 = sphi 0, %s32
      %p29 = scmp.ge.s32.totalorder %s28, 4
      %s38 = sphi 0, %s40
      %s41 = sphi 0, %s38
      %s42 = sphi 0, %s41
      %s58 = sphi 0, %s42
      %s62 = sphi 0, %s62
      %s64 = sphi 0, %s62
      %s65 = sphi 0, %s64
      %s79 = sphi 0, %s65
      %s83 = sphi 0, %s83
      %s85 = sphi 0, %s83
      %s86 = sphi 0, %s85
      %s100 = sphi 0, %s86
      %s104 = sphi 0, %s104
      %s106 = sphi 0, %s104
      %s107 = sphi 0, %s106
      %s121 = sphi 0, %s107
      %s125 = sphi 0, %s125
      %s127 = sphi 0, %s125
      %s128 = sphi 0, %s127
      %s142 = sphi 0, %s128
      %s146 = sphi 0, %s146
      %s148 = sphi 0, %s146
      %s149 = sphi 0, %s148
      %s163 = sphi 0, %s149
      %s167 = sphi 0, %s167
      %s169 = sphi 0, %s167
      %s170 = sphi 0, %s169
      %s184 = sphi 0, %s170
      %s188 = sphi 0, %s188
      %s190 = sphi 0, %s188
      %s191 = sphi 0, %s190
      %s205 = sphi 0, %s191
      %s209 = sphi 0, %s209
      %s211 = sphi 0, %s209
      %s212 = sphi 0, %s211
      %s226 = sphi 0, %s212
      %s230 = sphi 0, %s230
      %s232 = sphi 0, %s230
      %s233 = sphi 0, %s232
      %s247 = sphi 0, %s233
      %s251 = sphi 0, %s251
      %s253 = sphi 0, %s251
      %s254 = sphi 0, %s253
      %s268 = sphi 0, %s254
      %s272 = sphi 0, %s272
      %s274 = sphi 0, %s272
      %s275 = sphi 0, %s274
      %s289 = sphi 0, %s275
      %s293 = sphi 0, %s293
      %s295 = sphi 0, %s293
      %s296 = sphi 0, %s295
      %s310 = sphi 0, %s296
      %s314 = sphi 0, %s314
      %s316 = sphi 0, %s314
      %s317 = sphi 0, %s316
      %s331 = sphi 0, %s317
      %s335 = sphi 0, %s335
      %s337 = sphi 0, %s335
      %s338 = sphi 0, %s337
      %s352 = sphi 0, %s338
      %s356 = sphi 0, %s356
      %s358 = sphi 0, %s356
      %s359 = sphi 0, %s358
      %s373 = sphi 0, %s359
      %s377 = sphi 0, %s377
      %s379 = sphi 0, %s377
      %s380 = sphi 0, %s379
      %s394 = sphi 0, %s380
      %s398 = sphi 0, %s398
      %s400 = sphi 0, %s398
      %s401 = sphi 0, %s400
      %s415 = sphi 0, %s401
      %s419 = sphi 0, %s419
      %s421 = sphi 0, %s419
      %s422 = sphi 0, %s421
      %s436 = sphi 0, %s422
      %s442 = sphi 0, %s444
      %s445 = sphi 0, %s442
      %s446 = sphi 0, %s445
      %s462 = sphi 0, %s446
    $region4: #{fastspeech_forward.5} parent=1 // loop_header_branch
      %31 = sbr.rel (%p29) target = $region8
    $region5: #{fastspeech_forward.5} parent=1 // loop_body
      %s33 = ssub.s32 %s28, 1
      %s34 = ssub.s32 %s28, 2
      %s35 = sadd.s32 %s28, 1
      %s36 = ssub.s32 %s28, %s35
      %p37 = scmp.eq.s32.totalorder %s36, 0
      %s39 = sadd.s32 %s38, 1
      %s40 = scalar_select %p37, %s38, %s39
      %p43 = pneg %p37
      %p44 = scmp.eq.s32.totalorder %s28, 1
      %p45 = por %p43, %p44
      %p46 = scmp.ne.s32.totalorder %s38, %s41
      %p47 = scmp.eq.s32.totalorder %s28, 0
      %p48 = por %p46, %p47
      %p49 = scmp.ne.s32.totalorder %s38, %s41
      %p50 = scmp.eq.s32.totalorder %s33, 1
      %p51 = por %p49, %p50
      %p52 = scmp.ne.s32.totalorder %s41, %s42
      %p53 = scmp.eq.s32.totalorder %s33, 0
      %p54 = por %p52, %p53
      %p55 = scmp.ne.s32.totalorder %s41, %s42
      %p56 = scmp.eq.s32.totalorder %s34, 1
      %p57 = por %p55, %p56
      %p59 = scmp.ne.s32.totalorder %s42, %s58
      %p60 = scmp.eq.s32.totalorder %s34, 0
      %p61 = por %p59, %p60
      %s63 = sadd.s32 %s62, 1
      %p66 = scmp.eq.s32.totalorder %s28, 1
      %p67 = scmp.ne.s32.totalorder %s62, %s64
      %p68 = scmp.eq.s32.totalorder %s28, 0
      %p69 = por %p67, %p68
      %p70 = scmp.ne.s32.totalorder %s62, %s64
      %p71 = scmp.eq.s32.totalorder %s33, 1
      %p72 = por %p70, %p71
      %p73 = scmp.ne.s32.totalorder %s64, %s65
      %p74 = scmp.eq.s32.totalorder %s33, 0
      %p75 = por %p73, %p74
      %p76 = scmp.ne.s32.totalorder %s64, %s65
      %p77 = scmp.eq.s32.totalorder %s34, 1
      %p78 = por %p76, %p77
      %p80 = scmp.ne.s32.totalorder %s65, %s79
      %p81 = scmp.eq.s32.totalorder %s34, 0
      %p82 = por %p80, %p81
      %s84 = sadd.s32 %s83, 1
      %p87 = scmp.eq.s32.totalorder %s28, 1
      %p88 = scmp.ne.s32.totalorder %s83, %s85
      %p89 = scmp.eq.s32.totalorder %s28, 0
      %p90 = por %p88, %p89
      %p91 = scmp.ne.s32.totalorder %s83, %s85
      %p92 = scmp.eq.s32.totalorder %s33, 1
      %p93 = por %p91, %p92
      %p94 = scmp.ne.s32.totalorder %s85, %s86
      %p95 = scmp.eq.s32.totalorder %s33, 0
      %p96 = por %p94, %p95
      %p97 = scmp.ne.s32.totalorder %s85, %s86
      %p98 = scmp.eq.s32.totalorder %s34, 1
      %p99 = por %p97, %p98
      %p101 = scmp.ne.s32.totalorder %s86, %s100
      %p102 = scmp.eq.s32.totalorder %s34, 0
      %p103 = por %p101, %p102
      %s105 = sadd.s32 %s104, 1
      %p108 = scmp.eq.s32.totalorder %s28, 1
      %p109 = scmp.ne.s32.totalorder %s104, %s106
      %p110 = scmp.eq.s32.totalorder %s28, 0
      %p111 = por %p109, %p110
      %p112 = scmp.ne.s32.totalorder %s104, %s106
      %p113 = scmp.eq.s32.totalorder %s33, 1
      %p114 = por %p112, %p113
      %p115 = scmp.ne.s32.totalorder %s106, %s107
      %p116 = scmp.eq.s32.totalorder %s33, 0
      %p117 = por %p115, %p116
      %p118 = scmp.ne.s32.totalorder %s106, %s107
      %p119 = scmp.eq.s32.totalorder %s34, 1
      %p120 = por %p118, %p119
      %p122 = scmp.ne.s32.totalorder %s107, %s121
      %p123 = scmp.eq.s32.totalorder %s34, 0
      %p124 = por %p122, %p123
      %s126 = sadd.s32 %s125, 1
      %p129 = scmp.eq.s32.totalorder %s28, 1
      %p130 = scmp.ne.s32.totalorder %s125, %s127
      %p131 = scmp.eq.s32.totalorder %s28, 0
      %p132 = por %p130, %p131
      %p133 = scmp.ne.s32.totalorder %s125, %s127
      %p134 = scmp.eq.s32.totalorder %s33, 1
      %p135 = por %p133, %p134
      %p136 = scmp.ne.s32.totalorder %s127, %s128
      %p137 = scmp.eq.s32.totalorder %s33, 0
      %p138 = por %p136, %p137
      %p139 = scmp.ne.s32.totalorder %s127, %s128
      %p140 = scmp.eq.s32.totalorder %s34, 1
      %p141 = por %p139, %p140
      %p143 = scmp.ne.s32.totalorder %s128, %s142
      %p144 = scmp.eq.s32.totalorder %s34, 0
      %p145 = por %p143, %p144
      %s147 = sadd.s32 %s146, 1
      %p150 = scmp.eq.s32.totalorder %s28, 1
      %p151 = scmp.ne.s32.totalorder %s146, %s148
      %p152 = scmp.eq.s32.totalorder %s28, 0
      %p153 = por %p151, %p152
      %p154 = scmp.ne.s32.totalorder %s146, %s148
      %p155 = scmp.eq.s32.totalorder %s33, 1
      %p156 = por %p154, %p155
      %p157 = scmp.ne.s32.totalorder %s148, %s149
      %p158 = scmp.eq.s32.totalorder %s33, 0
      %p159 = por %p157, %p158
      %p160 = scmp.ne.s32.totalorder %s148, %s149
      %p161 = scmp.eq.s32.totalorder %s34, 1
      %p162 = por %p160, %p161
      %p164 = scmp.ne.s32.totalorder %s149, %s163
      %p165 = scmp.eq.s32.totalorder %s34, 0
      %p166 = por %p164, %p165
      %s168 = sadd.s32 %s167, 1
      %p171 = scmp.eq.s32.totalorder %s28, 1
      %p172 = scmp.ne.s32.totalorder %s167, %s169
      %p173 = scmp.eq.s32.totalorder %s28, 0
      %p174 = por %p172, %p173
      %p175 = scmp.ne.s32.totalorder %s167, %s169
      %p176 = scmp.eq.s32.totalorder %s33, 1
      %p177 = por %p175, %p176
      %p178 = scmp.ne.s32.totalorder %s169, %s170
      %p179 = scmp.eq.s32.totalorder %s33, 0
      %p180 = por %p178, %p179
      %p181 = scmp.ne.s32.totalorder %s169, %s170
      %p182 = scmp.eq.s32.totalorder %s34, 1
      %p183 = por %p181, %p182
      %p185 = scmp.ne.s32.totalorder %s170, %s184
      %p186 = scmp.eq.s32.totalorder %s34, 0
      %p187 = por %p185, %p186
      %s189 = sadd.s32 %s188, 1
      %p192 = scmp.eq.s32.totalorder %s28, 1
      %p193 = scmp.ne.s32.totalorder %s188, %s190
      %p194 = scmp.eq.s32.totalorder %s28, 0
      %p195 = por %p193, %p194
      %p196 = scmp.ne.s32.totalorder %s188, %s190
      %p197 = scmp.eq.s32.totalorder %s33, 1
      %p198 = por %p196, %p197
      %p199 = scmp.ne.s32.totalorder %s190, %s191
      %p200 = scmp.eq.s32.totalorder %s33, 0
      %p201 = por %p199, %p200
      %p202 = scmp.ne.s32.totalorder %s190, %s191
      %p203 = scmp.eq.s32.totalorder %s34, 1
      %p204 = por %p202, %p203
      %p206 = scmp.ne.s32.totalorder %s191, %s205
      %p207 = scmp.eq.s32.totalorder %s34, 0
      %p208 = por %p206, %p207
      %s210 = sadd.s32 %s209, 1
      %p213 = scmp.eq.s32.totalorder %s28, 1
      %p214 = scmp.ne.s32.totalorder %s209, %s211
      %p215 = scmp.eq.s32.totalorder %s28, 0
      %p216 = por %p214, %p215
      %p217 = scmp.ne.s32.totalorder %s209, %s211
      %p218 = scmp.eq.s32.totalorder %s33, 1
      %p219 = por %p217, %p218
      %p220 = scmp.ne.s32.totalorder %s211, %s212
      %p221 = scmp.eq.s32.totalorder %s33, 0
      %p222 = por %p220, %p221
      %p223 = scmp.ne.s32.totalorder %s211, %s212
      %p224 = scmp.eq.s32.totalorder %s34, 1
      %p225 = por %p223, %p224
      %p227 = scmp.ne.s32.totalorder %s212, %s226
      %p228 = scmp.eq.s32.totalorder %s34, 0
      %p229 = por %p227, %p228
      %s231 = sadd.s32 %s230, 1
      %p234 = scmp.eq.s32.totalorder %s28, 1
      %p235 = scmp.ne.s32.totalorder %s230, %s232
      %p236 = scmp.eq.s32.totalorder %s28, 0
      %p237 = por %p235, %p236
      %p238 = scmp.ne.s32.totalorder %s230, %s232
      %p239 = scmp.eq.s32.totalorder %s33, 1
      %p240 = por %p238, %p239
      %p241 = scmp.ne.s32.totalorder %s232, %s233
      %p242 = scmp.eq.s32.totalorder %s33, 0
      %p243 = por %p241, %p242
      %p244 = scmp.ne.s32.totalorder %s232, %s233
      %p245 = scmp.eq.s32.totalorder %s34, 1
      %p246 = por %p244, %p245
      %p248 = scmp.ne.s32.totalorder %s233, %s247
      %p249 = scmp.eq.s32.totalorder %s34, 0
      %p250 = por %p248, %p249
      %s252 = sadd.s32 %s251, 1
      %p255 = scmp.eq.s32.totalorder %s28, 1
      %p256 = scmp.ne.s32.totalorder %s251, %s253
      %p257 = scmp.eq.s32.totalorder %s28, 0
      %p258 = por %p256, %p257
      %p259 = scmp.ne.s32.totalorder %s251, %s253
      %p260 = scmp.eq.s32.totalorder %s33, 1
      %p261 = por %p259, %p260
      %p262 = scmp.ne.s32.totalorder %s253, %s254
      %p263 = scmp.eq.s32.totalorder %s33, 0
      %p264 = por %p262, %p263
      %p265 = scmp.ne.s32.totalorder %s253, %s254
      %p266 = scmp.eq.s32.totalorder %s34, 1
      %p267 = por %p265, %p266
      %p269 = scmp.ne.s32.totalorder %s254, %s268
      %p270 = scmp.eq.s32.totalorder %s34, 0
      %p271 = por %p269, %p270
      %s273 = sadd.s32 %s272, 1
      %p276 = scmp.eq.s32.totalorder %s28, 1
      %p277 = scmp.ne.s32.totalorder %s272, %s274
      %p278 = scmp.eq.s32.totalorder %s28, 0
      %p279 = por %p277, %p278
      %p280 = scmp.ne.s32.totalorder %s272, %s274
      %p281 = scmp.eq.s32.totalorder %s33, 1
      %p282 = por %p280, %p281
      %p283 = scmp.ne.s32.totalorder %s274, %s275
      %p284 = scmp.eq.s32.totalorder %s33, 0
      %p285 = por %p283, %p284
      %p286 = scmp.ne.s32.totalorder %s274, %s275
      %p287 = scmp.eq.s32.totalorder %s34, 1
      %p288 = por %p286, %p287
      %p290 = scmp.ne.s32.totalorder %s275, %s289
      %p291 = scmp.eq.s32.totalorder %s34, 0
      %p292 = por %p290, %p291
      %s294 = sadd.s32 %s293, 1
      %p297 = scmp.eq.s32.totalorder %s28, 1
      %p298 = scmp.ne.s32.totalorder %s293, %s295
      %p299 = scmp.eq.s32.totalorder %s28, 0
      %p300 = por %p298, %p299
      %p301 = scmp.ne.s32.totalorder %s293, %s295
      %p302 = scmp.eq.s32.totalorder %s33, 1
      %p303 = por %p301, %p302
      %p304 = scmp.ne.s32.totalorder %s295, %s296
      %p305 = scmp.eq.s32.totalorder %s33, 0
      %p306 = por %p304, %p305
      %p307 = scmp.ne.s32.totalorder %s295, %s296
      %p308 = scmp.eq.s32.totalorder %s34, 1
      %p309 = por %p307, %p308
      %p311 = scmp.ne.s32.totalorder %s296, %s310
      %p312 = scmp.eq.s32.totalorder %s34, 0
      %p313 = por %p311, %p312
      %s315 = sadd.s32 %s314, 1
      %p318 = scmp.eq.s32.totalorder %s28, 1
      %p319 = scmp.ne.s32.totalorder %s314, %s316
      %p320 = scmp.eq.s32.totalorder %s28, 0
      %p321 = por %p319, %p320
      %p322 = scmp.ne.s32.totalorder %s314, %s316
      %p323 = scmp.eq.s32.totalorder %s33, 1
      %p324 = por %p322, %p323
      %p325 = scmp.ne.s32.totalorder %s316, %s317
      %p326 = scmp.eq.s32.totalorder %s33, 0
      %p327 = por %p325, %p326
      %p328 = scmp.ne.s32.totalorder %s316, %s317
      %p329 = scmp.eq.s32.totalorder %s34, 1
      %p330 = por %p328, %p329
      %p332 = scmp.ne.s32.totalorder %s317, %s331
      %p333 = scmp.eq.s32.totalorder %s34, 0
      %p334 = por %p332, %p333
      %s336 = sadd.s32 %s335, 1
      %p339 = scmp.eq.s32.totalorder %s28, 1
      %p340 = scmp.ne.s32.totalorder %s335, %s337
      %p341 = scmp.eq.s32.totalorder %s28, 0
      %p342 = por %p340, %p341
      %p343 = scmp.ne.s32.totalorder %s335, %s337
      %p344 = scmp.eq.s32.totalorder %s33, 1
      %p345 = por %p343, %p344
      %p346 = scmp.ne.s32.totalorder %s337, %s338
      %p347 = scmp.eq.s32.totalorder %s33, 0
      %p348 = por %p346, %p347
      %p349 = scmp.ne.s32.totalorder %s337, %s338
      %p350 = scmp.eq.s32.totalorder %s34, 1
      %p351 = por %p349, %p350
      %p353 = scmp.ne.s32.totalorder %s338, %s352
      %p354 = scmp.eq.s32.totalorder %s34, 0
      %p355 = por %p353, %p354
      %s357 = sadd.s32 %s356, 1
      %p360 = scmp.eq.s32.totalorder %s28, 1
      %p361 = scmp.ne.s32.totalorder %s356, %s358
      %p362 = scmp.eq.s32.totalorder %s28, 0
      %p363 = por %p361, %p362
      %p364 = scmp.ne.s32.totalorder %s356, %s358
      %p365 = scmp.eq.s32.totalorder %s33, 1
      %p366 = por %p364, %p365
      %p367 = scmp.ne.s32.totalorder %s358, %s359
      %p368 = scmp.eq.s32.totalorder %s33, 0
      %p369 = por %p367, %p368
      %p370 = scmp.ne.s32.totalorder %s358, %s359
      %p371 = scmp.eq.s32.totalorder %s34, 1
      %p372 = por %p370, %p371
      %p374 = scmp.ne.s32.totalorder %s359, %s373
      %p375 = scmp.eq.s32.totalorder %s34, 0
      %p376 = por %p374, %p375
      %s378 = sadd.s32 %s377, 1
      %p381 = scmp.eq.s32.totalorder %s28, 1
      %p382 = scmp.ne.s32.totalorder %s377, %s379
      %p383 = scmp.eq.s32.totalorder %s28, 0
      %p384 = por %p382, %p383
      %p385 = scmp.ne.s32.totalorder %s377, %s379
      %p386 = scmp.eq.s32.totalorder %s33, 1
      %p387 = por %p385, %p386
      %p388 = scmp.ne.s32.totalorder %s379, %s380
      %p389 = scmp.eq.s32.totalorder %s33, 0
      %p390 = por %p388, %p389
      %p391 = scmp.ne.s32.totalorder %s379, %s380
      %p392 = scmp.eq.s32.totalorder %s34, 1
      %p393 = por %p391, %p392
      %p395 = scmp.ne.s32.totalorder %s380, %s394
      %p396 = scmp.eq.s32.totalorder %s34, 0
      %p397 = por %p395, %p396
      %s399 = sadd.s32 %s398, 1
      %p402 = scmp.eq.s32.totalorder %s28, 1
      %p403 = scmp.ne.s32.totalorder %s398, %s400
      %p404 = scmp.eq.s32.totalorder %s28, 0
      %p405 = por %p403, %p404
      %p406 = scmp.ne.s32.totalorder %s398, %s400
      %p407 = scmp.eq.s32.totalorder %s33, 1
      %p408 = por %p406, %p407
      %p409 = scmp.ne.s32.totalorder %s400, %s401
      %p410 = scmp.eq.s32.totalorder %s33, 0
      %p411 = por %p409, %p410
      %p412 = scmp.ne.s32.totalorder %s400, %s401
      %p413 = scmp.eq.s32.totalorder %s34, 1
      %p414 = por %p412, %p413
      %p416 = scmp.ne.s32.totalorder %s401, %s415
      %p417 = scmp.eq.s32.totalorder %s34, 0
      %p418 = por %p416, %p417
      %s420 = sadd.s32 %s419, 1
      %p423 = scmp.eq.s32.totalorder %s28, 1
      %p424 = scmp.ne.s32.totalorder %s419, %s421
      %p425 = scmp.eq.s32.totalorder %s28, 0
      %p426 = por %p424, %p425
      %p427 = scmp.ne.s32.totalorder %s419, %s421
      %p428 = scmp.eq.s32.totalorder %s33, 1
      %p429 = por %p427, %p428
      %p430 = scmp.ne.s32.totalorder %s421, %s422
      %p431 = scmp.eq.s32.totalorder %s33, 0
      %p432 = por %p430, %p431
      %p433 = scmp.ne.s32.totalorder %s421, %s422
      %p434 = scmp.eq.s32.totalorder %s34, 1
      %p435 = por %p433, %p434
      %p437 = scmp.ne.s32.totalorder %s422, %s436
      %p438 = scmp.eq.s32.totalorder %s34, 0
      %p439 = por %p437, %p438
      %s440 = ssub.s32 %s28, %s35
      %p441 = scmp.eq.s32.totalorder %s440, 0
      %s443 = sadd.s32 %s442, 1
      %s444 = scalar_select %p441, %s442, %s443
      %p447 = pneg %p441
      %p448 = scmp.eq.s32.totalorder %s28, 1
      %p449 = por %p447, %p448
      %p450 = scmp.ne.s32.totalorder %s442, %s445
      %p451 = scmp.eq.s32.totalorder %s28, 0
      %p452 = por %p450, %p451
      %p453 = scmp.ne.s32.totalorder %s442, %s445
      %p454 = scmp.eq.s32.totalorder %s33, 1
      %p455 = por %p453, %p454
      %p456 = scmp.ne.s32.totalorder %s445, %s446
      %p457 = scmp.eq.s32.totalorder %s33, 0
      %p458 = por %p456, %p457
      %p459 = scmp.ne.s32.totalorder %s445, %s446
      %p460 = scmp.eq.s32.totalorder %s34, 1
      %p461 = por %p459, %p460
      %p463 = scmp.ne.s32.totalorder %s446, %s462
      %p464 = scmp.eq.s32.totalorder %s34, 0
      %p465 = por %p463, %p464
      %p466 = scmp.le.s32.totalorder 1, %s28
      %p467 = scmp.lt.s32.totalorder %s28, 3
      %p468 = pnand %p466, %p467
      %p469 = pneg %p468
      // Predicated region
      $region9: #{fastspeech_forward.5} parent=5 // pred_check
        _
      $region10: #{fastspeech_forward.5} parent=5 // pred_check_branch
        %471 = sbr.rel (%p468) target = $region12
      $region11: #{fastspeech_forward.5} parent=5 // pred_region
        %s472 = ssub.s32 %s28, 1
        // Predicated region
        $region13: #{fastspeech_forward.5} parent=11 // pred_check
          %p473 = pneg %p75
        $region14: #{fastspeech_forward.5} parent=11 // pred_check_branch
          %475 = sbr.rel (%p473) target = $region16
        $region15: #{fastspeech_forward.5} parent=11 // pred_region
          _
        $region16: #{fastspeech_forward.5} parent=11 // pred_fallthru
          _
        // Predicated region
        $region17: #{fastspeech_forward.5} parent=11 // pred_check
          %p476 = pneg %p96
        $region18: #{fastspeech_forward.5} parent=11 // pred_check_branch
          %478 = sbr.rel (%p476) target = $region20
        $region19: #{fastspeech_forward.5} parent=11 // pred_region
          _
        $region20: #{fastspeech_forward.5} parent=11 // pred_fallthru
          _
        // Predicated region
        $region21: #{fastspeech_forward.5} parent=11 // pred_check
          %p479 = pneg %p117
        $region22: #{fastspeech_forward.5} parent=11 // pred_check_branch
          %481 = sbr.rel (%p479) target = $region24
        $region23: #{fastspeech_forward.5} parent=11 // pred_region
          _
        $region24: #{fastspeech_forward.5} parent=11 // pred_fallthru
          _
        // Predicated region
        $region25: #{fastspeech_forward.5} parent=11 // pred_check
          %p482 = pneg %p138
        $region26: #{fastspeech_forward.5} parent=11 // pred_check_branch
          %484 = sbr.rel (%p482) target = $region28
        $region27: #{fastspeech_forward.5} parent=11 // pred_region
          _
        $region28: #{fastspeech_forward.5} parent=11 // pred_fallthru
          _
        // Predicated region
        $region29: #{fastspeech_forward.5} parent=11 // pred_check
          %p485 = pneg %p159
        $region30: #{fastspeech_forward.5} parent=11 // pred_check_branch
          %487 = sbr.rel (%p485) target = $region32
        $region31: #{fastspeech_forward.5} parent=11 // pred_region
          _
        $region32: #{fastspeech_forward.5} parent=11 // pred_fallthru
          _
        // Predicated region
        $region33: #{fastspeech_forward.5} parent=11 // pred_check
          %p488 = pneg %p180
        $region34: #{fastspeech_forward.5} parent=11 // pred_check_branch
          %490 = sbr.rel (%p488) target = $region36
        $region35: #{fastspeech_forward.5} parent=11 // pred_region
          _
        $region36: #{fastspeech_forward.5} parent=11 // pred_fallthru
          _
        // Predicated region
        $region37: #{fastspeech_forward.5} parent=11 // pred_check
          %p491 = pneg %p201
        $region38: #{fastspeech_forward.5} parent=11 // pred_check_branch
          %493 = sbr.rel (%p491) target = $region40
        $region39: #{fastspeech_forward.5} parent=11 // pred_region
          _
        $region40: #{fastspeech_forward.5} parent=11 // pred_fallthru
          _
        // Predicated region
        $region41: #{fastspeech_forward.5} parent=11 // pred_check
          %p494 = pneg %p222
        $region42: #{fastspeech_forward.5} parent=11 // pred_check_branch
          %496 = sbr.rel (%p494) target = $region44
        $region43: #{fastspeech_forward.5} parent=11 // pred_region
          _
        $region44: #{fastspeech_forward.5} parent=11 // pred_fallthru
          _
        // Predicated region
        $region45: #{fastspeech_forward.5} parent=11 // pred_check
          %p497 = pneg %p243
        $region46: #{fastspeech_forward.5} parent=11 // pred_check_branch
          %499 = sbr.rel (%p497) target = $region48
        $region47: #{fastspeech_forward.5} parent=11 // pred_region
          _
        $region48: #{fastspeech_forward.5} parent=11 // pred_fallthru
          _
        // Predicated region
        $region49: #{fastspeech_forward.5} parent=11 // pred_check
          %p500 = pneg %p264
        $region50: #{fastspeech_forward.5} parent=11 // pred_check_branch
          %502 = sbr.rel (%p500) target = $region52
        $region51: #{fastspeech_forward.5} parent=11 // pred_region
          _
        $region52: #{fastspeech_forward.5} parent=11 // pred_fallthru
          _
        // Predicated region
        $region53: #{fastspeech_forward.5} parent=11 // pred_check
          %p503 = pneg %p285
        $region54: #{fastspeech_forward.5} parent=11 // pred_check_branch
          %505 = sbr.rel (%p503) target = $region56
        $region55: #{fastspeech_forward.5} parent=11 // pred_region
          _
        $region56: #{fastspeech_forward.5} parent=11 // pred_fallthru
          _
        // Predicated region
        $region57: #{fastspeech_forward.5} parent=11 // pred_check
          %p506 = pneg %p306
        $region58: #{fastspeech_forward.5} parent=11 // pred_check_branch
          %508 = sbr.rel (%p506) target = $region60
        $region59: #{fastspeech_forward.5} parent=11 // pred_region
          _
        $region60: #{fastspeech_forward.5} parent=11 // pred_fallthru
          _
        // Predicated region
        $region61: #{fastspeech_forward.5} parent=11 // pred_check
          %p509 = pneg %p327
        $region62: #{fastspeech_forward.5} parent=11 // pred_check_branch
          %511 = sbr.rel (%p509) target = $region64
        $region63: #{fastspeech_forward.5} parent=11 // pred_region
          _
        $region64: #{fastspeech_forward.5} parent=11 // pred_fallthru
          _
        // Predicated region
        $region65: #{fastspeech_forward.5} parent=11 // pred_check
          %p512 = pneg %p348
        $region66: #{fastspeech_forward.5} parent=11 // pred_check_branch
          %514 = sbr.rel (%p512) target = $region68
        $region67: #{fastspeech_forward.5} parent=11 // pred_region
          _
        $region68: #{fastspeech_forward.5} parent=11 // pred_fallthru
          _
        // Predicated region
        $region69: #{fastspeech_forward.5} parent=11 // pred_check
          %p515 = pneg %p369
        $region70: #{fastspeech_forward.5} parent=11 // pred_check_branch
          %517 = sbr.rel (%p515) target = $region72
        $region71: #{fastspeech_forward.5} parent=11 // pred_region
          _
        $region72: #{fastspeech_forward.5} parent=11 // pred_fallthru
          _
        // Predicated region
        $region73: #{fastspeech_forward.5} parent=11 // pred_check
          %p518 = pneg %p390
        $region74: #{fastspeech_forward.5} parent=11 // pred_check_branch
          %520 = sbr.rel (%p518) target = $region76
        $region75: #{fastspeech_forward.5} parent=11 // pred_region
          _
        $region76: #{fastspeech_forward.5} parent=11 // pred_fallthru
          _
        // Predicated region
        $region77: #{fastspeech_forward.5} parent=11 // pred_check
          %p521 = pneg %p411
        $region78: #{fastspeech_forward.5} parent=11 // pred_check_branch
          %523 = sbr.rel (%p521) target = $region80
        $region79: #{fastspeech_forward.5} parent=11 // pred_region
          _
        $region80: #{fastspeech_forward.5} parent=11 // pred_fallthru
          _
        // Predicated region
        $region81: #{fastspeech_forward.5} parent=11 // pred_check
          %p524 = pneg %p432
        $region82: #{fastspeech_forward.5} parent=11 // pred_check_branch
          %526 = sbr.rel (%p524) target = $region84
        $region83: #{fastspeech_forward.5} parent=11 // pred_region
          _
        $region84: #{fastspeech_forward.5} parent=11 // pred_fallthru
          _
      $region12: #{fastspeech_forward.5} parent=5 // pred_fallthru
        _
      %p527 = scmp.lt.s32.totalorder %s28, 2
      // Predicated region
      $region85: #{fastspeech_forward.5} parent=5 // pred_check
        %p528 = pneg %p527
      $region86: #{fastspeech_forward.5} parent=5 // pred_check_branch
        %530 = sbr.rel (%p528) target = $region88
      $region87: #{fastspeech_forward.5} parent=5 // pred_region
        // Predicated region
        $region89: #{fastspeech_forward.5} parent=87 // pred_check
          %p531 = pneg %p48
        $region90: #{fastspeech_forward.5} parent=87 // pred_check_branch
          %533 = sbr.rel (%p531) target = $region92
        $region91: #{fastspeech_forward.5} parent=87 // pred_region
          %p534 = scmp.lt.s32.totalorder %s28, 1
          %s535 = scalar_select %p534, %s28, 1
          %s536 = smul.addr %s535, 3
          %s537 = smul.addr %s536, 4
          %s538 = scalar_lea.vmem %s0, %s537
        $region92: #{fastspeech_forward.5} parent=87 // pred_fallthru
          _
      $region88: #{fastspeech_forward.5} parent=5 // pred_fallthru
        _
      %p539 = scmp.le.s32.totalorder 1, %s28
      %p540 = scmp.lt.s32.totalorder %s28, 3
      %p541 = pnand %p539, %p540
      %p542 = pneg %p541
      // Predicated region
      $region93: #{fastspeech_forward.5} parent=5 // pred_check
        _
      $region94: #{fastspeech_forward.5} parent=5 // pred_check_branch
        %544 = sbr.rel (%p541) target = $region96
      $region95: #{fastspeech_forward.5} parent=5 // pred_region
        %s545 = ssub.s32 %s28, 1
        %p546 = scmp.lt.s32.totalorder %s33, 1
        %s547 = scalar_select %p546, %s33, 1
        %s548 = smul.addr %s547, 3
        %s549 = smul.addr %s548, 4
        %s550 = scalar_lea.vmem %s0, %s549
        %p551 = pneg %p54
        %p552 = pneg %p51
        %p553 = pneg %p75
        %p554 = pneg %p72
        %p555 = pneg %p96
        %p556 = pneg %p93
        %p557 = pneg %p117
        %p558 = pneg %p114
        %p559 = pneg %p138
        %p560 = pneg %p135
        %p561 = pneg %p159
        %p562 = pneg %p156
        %p563 = pneg %p180
        %p564 = pneg %p177
        %p565 = pneg %p201
        %p566 = pneg %p198
        %p567 = pneg %p222
        %p568 = pneg %p219
        %p569 = pneg %p243
        %p570 = pneg %p240
        %p571 = pneg %p264
        %p572 = pneg %p261
        %p573 = pneg %p285
        %p574 = pneg %p282
        %p575 = pneg %p306
        %p576 = pneg %p303
        %p577 = pneg %p327
        %p578 = pneg %p324
        %p579 = pneg %p348
        %p580 = pneg %p345
        %p581 = pneg %p369
        %p582 = pneg %p366
        %p583 = pneg %p390
        %p584 = pneg %p387
        %p585 = pneg %p411
        %p586 = pneg %p408
        %p587 = pneg %p432
        %p588 = pneg %p429
        %p589 = pneg %p458
        %p590 = pneg %p455
        %s591 = sand.u32 %s445, 1
        %s592 = scalar_lea.sflag [#allocation4], %s591
        %s593 = sand.u32 %s445, 1
        %s594 = smul.addr %s593, 24
        %s595 = scalar_lea.vmem [#allocation3], %s594
        %p596 = scmp.lt.s32.totalorder %s33, 1
        %s597 = scalar_select %p596, %s33, 1
        %s598 = smul.addr %s597, 3
        %s599 = smul.addr %s598, 4
        %s600 = scalar_lea.vmem %s0, %s599
        %v602 = vld [vmem:[%s600] sm:$0xf]
        %v603 = vld [vmem:[%s600 + $0x4] sm:$0xf]
        %v604 = vld [vmem:[%s600 + $0x8] sm:$0xf]
        %v605 = vld [vmem:[%s1] sm:$0xf]
        %v606 = vld [vmem:[%s1 + $0x4] sm:$0xf]
        %v607 = vld [vmem:[%s1 + $0x8] sm:$0xf]
        %v608 = vld [vmem:[%s1 + $0xc] sm:$0xf]
        %v609 = vld [vmem:[%s2] sm:$0x1]
        %v610 = vld [vmem:[%s3] sm:$0xf]
        %v611 = vld [vmem:[%s3 + $0x4] sm:$0xf]
        %v612 = vld [vmem:[%s3 + $0x8] sm:$0xf]
        %v613 = vld [vmem:[%s3 + $0xc] sm:$0xf]
        %v614 = vld [vmem:[%s4] sm:$0x1]
        %v615 = vld [vmem:[%s5] sm:$0xf]
        %v616 = vld [vmem:[%s5 + $0x4] sm:$0xf]
        %v617 = vld [vmem:[%s5 + $0x8] sm:$0xf]
        %v618 = vld [vmem:[%s5 + $0xc] sm:$0xf]
        %v619 = vld [vmem:[%s6] sm:$0x1]
        %v620 = vld [vmem:[%s7] sm:$0xf]
        %v621 = vld [vmem:[%s7 + $0x4] sm:$0xf]
        %v622 = vld [vmem:[%s7 + $0x8] sm:$0xf]
        %v623 = vld [vmem:[%s7 + $0xc] sm:$0xf]
        %v624 = vld [vmem:[%s8] sm:$0x1]
        %v626 = vperm.slane %v609, 0
        %v631 = vunpack.c.l.b16 %v602
        %v632 = vunpack.c.l.b16 %v603
        %v633 = vunpack.c.l.b16 %v604
        %v634 = vpack.c.b16 %v632, %v631
        %v635 = vpack.c.b16 %v633, %v633
        %v640 = vunpack.c.l.b16 %v605
        %v641 = vunpack.c.l.b16 %v606
        %v642 = vunpack.c.l.b16 %v607
        %v643 = vunpack.c.l.b16 %v608
        %v644 = vpack.c.b16 %v641, %v640
        %v645 = vpack.c.b16 %v643, %v642
        %vm648 = vcmask 261120
        %v650 = vsel %vm648, %v634, 0
        %v653 = vsel %vm648, %v635, 0
        %655 = vmatpush.bf16.msra.mxu0 0
        %656 = vmatpush.bf16.msra.mxu0 0
        %657 = vmatpush.bf16.msra.mxu0 0
        %658 = vmatpush.bf16.msra.mxu0 0
        %659 = vmatpush.bf16.msra.mxu0 0
        %660 = vmatpush.bf16.msra.mxu0 0
        %661 = vmatpush.bf16.msra.mxu0 %v645
        %662 = vmatpush.bf16.msra.mxu0 %v644
        %663 = vmatmul.bf16.gmra.mxu0 %v650
        %v664 = vpop.f32.mrf.mxu0
        %v665 = vadd.f32 %v626, %v664
        %v666 = vpop.f32.mrf.mxu0
        %v667 = vadd.f32 %v626, %v666
        %668 = vmatmul.bf16.gmra.mxu0 %v653
        %v669 = vpop.f32.mrf.mxu0
        %v670 = vadd.f32 %v626, %v669
        %v671 = vpop.f32.mrf.mxu0
        %672 = vdwg.mxu0
        %v674 = vperm.slane %v614, 0
        %v680 = vunpack.c.l.b16 %v610
        %v681 = vunpack.c.l.b16 %v611
        %v682 = vunpack.c.l.b16 %v612
        %v683 = vunpack.c.l.b16 %v613
        %v684 = vpack.c.b16 %v681, %v680
        %v685 = vpack.c.b16 %v683, %v682
        %688 = vmatpush.bf16.msra.mxu0 0
        %689 = vmatpush.bf16.msra.mxu0 0
        %690 = vmatpush.bf16.msra.mxu0 0
        %691 = vmatpush.bf16.msra.mxu0 0
        %692 = vmatpush.bf16.msra.mxu0 0
        %693 = vmatpush.bf16.msra.mxu0 0
        %694 = vmatpush.bf16.msra.mxu0 %v685
        %695 = vmatpush.bf16.msra.mxu0 %v684
        %696 = vmatmul.bf16.gmra.mxu0 %v650
        %v697 = vpop.f32.mrf.mxu0
        %v698 = vadd.f32 %v674, %v697
        %v699 = vpop.f32.mrf.mxu0
        %v700 = vadd.f32 %v674, %v699
        %701 = vmatmul.bf16.gmra.mxu0 %v653
        %v702 = vpop.f32.mrf.mxu0
        %v703 = vadd.f32 %v674, %v702
        %v704 = vpop.f32.mrf.mxu0
        %705 = vdwg.mxu0
        %v707 = vperm.slane %v619, 0
        %v713 = vunpack.c.l.b16 %v615
        %v714 = vunpack.c.l.b16 %v616
        %v715 = vunpack.c.l.b16 %v617
        %v716 = vunpack.c.l.b16 %v618
        %v717 = vpack.c.b16 %v714, %v713
        %v718 = vpack.c.b16 %v716, %v715
        %721 = vmatpush.bf16.msra.mxu0 0
        %722 = vmatpush.bf16.msra.mxu0 0
        %723 = vmatpush.bf16.msra.mxu0 0
        %724 = vmatpush.bf16.msra.mxu0 0
        %725 = vmatpush.bf16.msra.mxu0 0
        %726 = vmatpush.bf16.msra.mxu0 0
        %727 = vmatpush.bf16.msra.mxu0 %v718
        %728 = vmatpush.bf16.msra.mxu0 %v717
        %729 = vmatmul.bf16.gmra.mxu0 %v650
        %v730 = vpop.f32.mrf.mxu0
        %v731 = vadd.f32 %v707, %v730
        %v732 = vpop.f32.mrf.mxu0
        %v733 = vadd.f32 %v707, %v732
        %734 = vmatmul.bf16.gmra.mxu0 %v653
        %v735 = vpop.f32.mrf.mxu0
        %v736 = vadd.f32 %v707, %v735
        %v737 = vpop.f32.mrf.mxu0
        %738 = vdwg.mxu0
        %v739 = vpack.c.bf16 %v698, %v698
        %v740 = vpack.c.bf16 %v700, %v700
        %v741 = vpack.c.bf16 %v703, %v703
        %v742 = vpack.c.bf16 %v731, %v731
        %v743 = vpack.c.bf16 %v733, %v733
        %v744 = vpack.c.bf16 %v736, %v736
        %v745 = vpack.c.bf16 %v667, %v665
        %v746 = vpack.c.bf16 %v670, %v670
        %v750 = vunpack.c.l.b16 %v739
        %v751 = vunpack.c.l.b16 %v740
        %v752 = vunpack.c.l.b16 %v741
        %v753 = vpack.c.b16 %v751, %v750
        %v754 = vpack.c.b16 %v752, %v752
        %vm755 = vcmask 130048
        %v757 = vsel %vm755, %v745, 0
        %v760 = vsel %vm755, %v746, 0
        %v763 = vsel %vm755, %v753, 0
        %v766 = vsel %vm755, %v754, 0
        %768 = vmatpush.bf16.xpose.msra.mxu0 0
        %769 = vmatpush.bf16.xpose.msra.mxu0 0
        %770 = vmatpush.bf16.xpose.msra.mxu0 0
        %771 = vmatpush.bf16.xpose.msra.mxu0 0
        %772 = vmatpush.bf16.xpose.msra.mxu0 0
        %773 = vmatpush.bf16.xpose.msra.mxu0 0
        %774 = vmatpush.bf16.xpose.msra.mxu0 %v766
        %775 = vmatpush.bf16.xpose.msra.mxu0 %v763
        %776 = vmatmul.bf16.gmra.mxu0 %v757
        %v777 = vpop.f32.mrf.mxu0
        %v778 = vadd.f32 0.0, %v777
        %v779 = vpop.f32.mrf.mxu0
        %v780 = vadd.f32 0.0, %v779
        %781 = vmatmul.bf16.gmra.mxu0 %v760
        %v782 = vpop.f32.mrf.mxu0
        %v783 = vadd.f32 0.0, %v782
        %v784 = vpop.f32.mrf.mxu0
        %785 = vdwg.mxu0
        %vm786 = vcmask 195584
        %v787 = vsel %vm786, %v778, -inf
        %788 = vmax.xlane.f32.xlu0 %v787
        %v789 = vpop.xlane.xlu0 %788
        %v790 = vsel %vm786, %v780, -inf
        %791 = vmax.xlane.f32.xlu0 %v790
        %v792 = vpop.xlane.xlu0 %791
        %v793 = vsel %vm786, %v783, -inf
        %794 = vmax.xlane.f32.xlu0 %v793
        %v795 = vpop.xlane.xlu0 %794
        %v796 = vsub.f32 %v778, %v789
        %v797 = vsub.f32 %v780, %v792
        %v798 = vsub.f32 %v783, %v795
        %v799 = vmul.f32 %v796, 1.442695
        %v800 = vpow.pop %v799
        %v801 = vmul.f32 %v797, 1.442695
        %v802 = vpow.pop %v801
        %v803 = vmul.f32 %v798, 1.442695
        %v804 = vpow.pop %v803
        %v805 = vsel %vm786, %v800, 0.0
        %806 = vadd.xlane.f32.xlu0 %v805
        %v807 = vpop.xlane.xlu0 %806
        %v808 = vsel %vm786, %v802, 0.0
        %809 = vadd.xlane.f32.xlu0 %v808
        %v810 = vpop.xlane.xlu0 %809
        %v811 = vsel %vm786, %v804, 0.0
        %812 = vadd.xlane.f32.xlu0 %v811
        %v813 = vpop.xlane.xlu0 %812
        %v814 = vrcp.pop %v807
        %v815 = vrcp.pop %v810
        %v816 = vrcp.pop %v813
        %v817 = vpack.c.bf16 %v802, %v800
        %v818 = vpack.c.bf16 %v804, %v804
        %v822 = vunpack.c.l.b16 %v742
        %v823 = vunpack.c.l.b16 %v743
        %v824 = vunpack.c.l.b16 %v744
        %v825 = vpack.c.b16 %v823, %v822
        %v826 = vpack.c.b16 %v824, %v824
        %v829 = vsel %vm786, %v817, 0
        %v832 = vsel %vm786, %v818, 0
        %vm834 = vcmask 1043456
        %v836 = vsel %vm834, %v826, 0
        %838 = vmatpush.bf16.msra.mxu0 0
        %839 = vmatpush.bf16.msra.mxu0 0
        %840 = vmatpush.bf16.msra.mxu0 0
        %841 = vmatpush.bf16.msra.mxu0 0
        %842 = vmatpush.bf16.msra.mxu0 0
        %843 = vmatpush.bf16.msra.mxu0 0
        %844 = vmatpush.bf16.msra.mxu0 %v836
        %845 = vmatpush.bf16.msra.mxu0 %v825
        %846 = vmatmul.bf16.gmra.mxu0 %v829
        %v847 = vpop.f32.mrf.mxu0
        %v848 = vadd.f32 0.0, %v847
        %v849 = vpop.f32.mrf.mxu0
        %v850 = vadd.f32 0.0, %v849
        %851 = vmatmul.bf16.gmra.mxu0 %v832
        %v852 = vpop.f32.mrf.mxu0
        %v853 = vadd.f32 0.0, %v852
        %v854 = vpop.f32.mrf.mxu0
        %855 = vdwg.mxu0
        %v856 = vmul.f32 %v848, %v814
        %v857 = vmul.f32 %v850, %v815
        %v858 = vmul.f32 %v853, %v816
        %859 = vst.msk [vmem:[#allocation2] sm:$0xff] %vm755, %v856
        %860 = vst.msk [vmem:[#allocation2 + $0x8] sm:$0xff] %vm755, %v857
        %861 = vst.msk [vmem:[#allocation2 + $0x10] sm:$0xff] %vm755, %v858
        %864 = vrot.lane.b32.xlu0 %v745, 112
        %v865 = vpop.permute.xlu0 %864
        %866 = vrot.lane.b32.xlu0 %v746, 112
        %v867 = vpop.permute.xlu0 %866
        %868 = vrot.lane.b32.xlu0 %v753, 112
        %v869 = vpop.permute.xlu0 %868
        %870 = vrot.lane.b32.xlu0 %v754, 112
        %v871 = vpop.permute.xlu0 %870
        %v873 = vsel %vm755, %v865, 0
        %v876 = vsel %vm755, %v867, 0
        %v879 = vsel %vm755, %v869, 0
        %v882 = vsel %vm755, %v871, 0
        %884 = vmatpush.bf16.xpose.msra.mxu0 0
        %885 = vmatpush.bf16.xpose.msra.mxu0 0
        %886 = vmatpush.bf16.xpose.msra.mxu0 0
        %887 = vmatpush.bf16.xpose.msra.mxu0 0
        %888 = vmatpush.bf16.xpose.msra.mxu0 0
        %889 = vmatpush.bf16.xpose.msra.mxu0 0
        %890 = vmatpush.bf16.xpose.msra.mxu0 %v882
        %891 = vmatpush.bf16.xpose.msra.mxu0 %v879
        %892 = vmatmul.bf16.gmra.mxu0 %v873
        %v893 = vpop.f32.mrf.mxu0
        %v894 = vadd.f32 0.0, %v893
        %v895 = vpop.f32.mrf.mxu0
        %v896 = vadd.f32 0.0, %v895
        %897 = vmatmul.bf16.gmra.mxu0 %v876
        %v898 = vpop.f32.mrf.mxu0
        %v899 = vadd.f32 0.0, %v898
        %v900 = vpop.f32.mrf.mxu0
        %901 = vdwg.mxu0
        %v902 = vsel %vm786, %v894, -inf
        %903 = vmax.xlane.f32.xlu0 %v902
        %v904 = vpop.xlane.xlu0 %903
        %v905 = vsel %vm786, %v896, -inf
        %906 = vmax.xlane.f32.xlu0 %v905
        %v907 = vpop.xlane.xlu0 %906
        %v908 = vsel %vm786, %v899, -inf
        %909 = vmax.xlane.f32.xlu0 %v908
        %v910 = vpop.xlane.xlu0 %909
        %v911 = vsub.f32 %v894, %v904
        %v912 = vsub.f32 %v896, %v907
        %v913 = vsub.f32 %v899, %v910
        %v914 = vmul.f32 %v911, 1.442695
        %v915 = vpow.pop %v914
        %v916 = vmul.f32 %v912, 1.442695
        %v917 = vpow.pop %v916
        %v918 = vmul.f32 %v913, 1.442695
        %v919 = vpow.pop %v918
        %v920 = vsel %vm786, %v915, 0.0
        %921 = vadd.xlane.f32.xlu0 %v920
        %v922 = vpop.xlane.xlu0 %921
        %v923 = vsel %vm786, %v917, 0.0
        %924 = vadd.xlane.f32.xlu0 %v923
        %v925 = vpop.xlane.xlu0 %924
        %v926 = vsel %vm786, %v919, 0.0
        %927 = vadd.xlane.f32.xlu0 %v926
        %v928 = vpop.xlane.xlu0 %927
        %v929 = vrcp.pop %v922
        %v930 = vrcp.pop %v925
        %v931 = vrcp.pop %v928
        %v932 = vpack.c.bf16 %v917, %v915
        %v933 = vpack.c.bf16 %v919, %v919
        %934 = vrot.lane.b32.xlu0 %v825, 112
        %v935 = vpop.permute.xlu0 %934
        %936 = vrot.lane.b32.xlu0 %v826, 112
        %v937 = vpop.permute.xlu0 %936
        %v940 = vsel %vm786, %v932, 0
        %v943 = vsel %vm786, %v933, 0
        %v946 = vsel %vm834, %v937, 0
        %948 = vmatpush.bf16.msra.mxu0 0
        %949 = vmatpush.bf16.msra.mxu0 0
        %950 = vmatpush.bf16.msra.mxu0 0
        %951 = vmatpush.bf16.msra.mxu0 0
        %952 = vmatpush.bf16.msra.mxu0 0
        %953 = vmatpush.bf16.msra.mxu0 0
        %954 = vmatpush.bf16.msra.mxu0 %v946
        %955 = vmatpush.bf16.msra.mxu0 %v935
        %956 = vmatmul.bf16.gmra.mxu0 %v940
        %v957 = vpop.f32.mrf.mxu0
        %v958 = vadd.f32 0.0, %v957
        %v959 = vpop.f32.mrf.mxu0
        %v960 = vadd.f32 0.0, %v959
        %961 = vmatmul.bf16.gmra.mxu0 %v943
        %v962 = vpop.f32.mrf.mxu0
        %v963 = vadd.f32 0.0, %v962
        %v964 = vpop.f32.mrf.mxu0
        %965 = vdwg.mxu0
        %v966 = vmul.f32 %v958, %v929
        %v967 = vmul.f32 %v960, %v930
        %v968 = vmul.f32 %v963, %v931
        %972 = vrot.lane.b32.xlu0 %v966, 16
        %v973 = vpop.permute.xlu0 %972
        %974 = vrot.lane.b32.xlu0 %v967, 16
        %v975 = vpop.permute.xlu0 %974
        %976 = vrot.lane.b32.xlu0 %v968, 16
        %v977 = vpop.permute.xlu0 %976
        %vm981 = vcmask 261248
        %982 = vst.msk [vmem:[#allocation2] sm:$0xff] %vm981, %v973
        %983 = vst.msk [vmem:[#allocation2 + $0x8] sm:$0xff] %vm981, %v975
        %984 = vst.msk [vmem:[#allocation2 + $0x10] sm:$0xff] %vm981, %v977
        %v985 = vld [vmem:[#allocation2] sm:$0xff]
        %v986 = vld [vmem:[#allocation2 + $0x8] sm:$0xff]
        %v987 = vld [vmem:[#allocation2 + $0x10] sm:$0xff]
        %v988 = vpack.c.bf16 %v986, %v985
        %v989 = vpack.c.bf16 %v987, %v987
        %v991 = vperm.slane %v624, 0
        %v997 = vunpack.c.l.b16 %v620
        %v998 = vunpack.c.l.b16 %v621
        %v999 = vunpack.c.l.b16 %v622
        %v1000 = vunpack.c.l.b16 %v623
        %v1001 = vpack.c.b16 %v998, %v997
        %v1002 = vpack.c.b16 %v1000, %v999
        %v1006 = vsel %vm648, %v988, 0
        %v1009 = vsel %vm648, %v989, 0
        %1011 = vmatpush.bf16.msra.mxu0 0
        %1012 = vmatpush.bf16.msra.mxu0 0
        %1013 = vmatpush.bf16.msra.mxu0 0
        %1014 = vmatpush.bf16.msra.mxu0 0
        %1015 = vmatpush.bf16.msra.mxu0 0
        %1016 = vmatpush.bf16.msra.mxu0 0
        %1017 = vmatpush.bf16.msra.mxu0 %v1002
        %1018 = vmatpush.bf16.msra.mxu0 %v1001
        %1019 = vmatmul.bf16.gmra.mxu0 %v1006
        %v1020 = vpop.f32.mrf.mxu0
        %v1021 = vadd.f32 %v991, %v1020
        %v1022 = vpop.f32.mrf.mxu0
        %v1023 = vadd.f32 %v991, %v1022
        %1024 = vmatmul.bf16.gmra.mxu0 %v1009
        %v1025 = vpop.f32.mrf.mxu0
        %v1026 = vadd.f32 %v991, %v1025
        %v1027 = vpop.f32.mrf.mxu0
        %1028 = vdwg.mxu0
        %v1029 = vunpack.c.l.bf16 %v602
        %v1030 = vunpack.c.l.bf16 %v603
        %v1031 = vunpack.c.l.bf16 %v604
        %v1032 = vld [vmem:[%s9] sm:$0x1]
        %v1033 = vld [vmem:[%s10] sm:$0x1]
        %v1034 = vadd.f32 %v1029, %v1021
        %v1035 = vadd.f32 %v1030, %v1023
        %v1036 = vadd.f32 %v1031, %v1026
        %v1037 = vsel %vm648, %v1034, 0.0
        %1038 = vadd.xlane.f32.xlu0 %v1037
        %v1039 = vpop.xlane.xlu0 %1038
        %v1040 = vsel %vm648, %v1035, 0.0
        %1041 = vadd.xlane.f32.xlu0 %v1040
        %v1042 = vpop.xlane.xlu0 %1041
        %v1043 = vsel %vm648, %v1036, 0.0
        %1044 = vadd.xlane.f32.xlu0 %v1043
        %v1045 = vpop.xlane.xlu0 %1044
        %v1046 = vrcp.pop 32.0
        %v1047 = vmul.f32 32.0, %v1046
        %v1048 = vsub.f32 1.0, %v1047
        %v1049 = vmul.f32 %v1046, %v1048
        %v1050 = vadd.f32 %v1046, %v1049
        %vm1051 = vweird.f32 %v1046
        %v1052 = vsel %vm1051, %v1046, %v1050
        %v1053 = vmul.f32 %v1039, %v1052
        %v1054 = vmul.f32 %v1042, %v1052
        %v1055 = vmul.f32 %v1045, %v1052
        %v1056 = vmul.f32 %v1034, %v1034
        %v1057 = vmul.f32 %v1035, %v1035
        %v1058 = vmul.f32 %v1036, %v1036
        %v1059 = vsel %vm648, %v1056, 0.0
        %1060 = vadd.xlane.f32.xlu0 %v1059
        %v1061 = vpop.xlane.xlu0 %1060
        %v1062 = vsel %vm648, %v1057, 0.0
        %1063 = vadd.xlane.f32.xlu0 %v1062
        %v1064 = vpop.xlane.xlu0 %1063
        %v1065 = vsel %vm648, %v1058, 0.0
        %1066 = vadd.xlane.f32.xlu0 %v1065
        %v1067 = vpop.xlane.xlu0 %1066
        %v1068 = vmul.f32 %v1061, %v1052
        %v1069 = vmul.f32 %v1064, %v1052
        %v1070 = vmul.f32 %v1067, %v1052
        %v1071 = vmul.f32 %v1053, %v1053
        %v1072 = vmul.f32 %v1054, %v1054
        %v1073 = vmul.f32 %v1055, %v1055
        %v1074 = vsub.f32 %v1068, %v1071
        %v1075 = vsub.f32 %v1069, %v1072
        %v1076 = vsub.f32 %v1070, %v1073
        %v1077 = vsub.f32 %v1034, %v1053
        %v1078 = vsub.f32 %v1035, %v1054
        %v1079 = vsub.f32 %v1036, %v1055
        %v1080 = vadd.f32 %v1074, 1e-05
        %v1081 = vadd.f32 %v1075, 1e-05
        %v1082 = vadd.f32 %v1076, 1e-05
        %v1083 = vrsqrt.pop %v1080
        %v1084 = vmul.f32 %v1083, %v1080
        %v1085 = vmul.f32 %v1084, %v1083
        %v1086 = vmul.f32 0.5, %v1085
        %v1087 = vsub.f32 1.5, %v1086
        %v1088 = vmul.f32 %v1083, %v1087
        %vm1089 = vweird.f32 %v1080
        %vm1090 = vweird.f32 %v1083
        %vm1091 = vmor %vm1089, %vm1090
        %v1092 = vsel %vm1091, %v1083, %v1088
        %v1093 = vrsqrt.pop %v1081
        %v1094 = vmul.f32 %v1093, %v1081
        %v1095 = vmul.f32 %v1094, %v1093
        %v1096 = vmul.f32 0.5, %v1095
        %v1097 = vsub.f32 1.5, %v1096
        %v1098 = vmul.f32 %v1093, %v1097
        %vm1099 = vweird.f32 %v1081
        %vm1100 = vweird.f32 %v1093
        %vm1101 = vmor %vm1099, %vm1100
        %v1102 = vsel %vm1101, %v1093, %v1098
        %v1103 = vrsqrt.pop %v1082
        %v1104 = vmul.f32 %v1103, %v1082
        %v1105 = vmul.f32 %v1104, %v1103
        %v1106 = vmul.f32 0.5, %v1105
        %v1107 = vsub.f32 1.5, %v1106
        %v1108 = vmul.f32 %v1103, %v1107
        %vm1109 = vweird.f32 %v1082
        %vm1110 = vweird.f32 %v1103
        %vm1111 = vmor %vm1109, %vm1110
        %v1112 = vsel %vm1111, %v1103, %v1108
        %v1113 = vmul.f32 %v1077, %v1092
        %v1114 = vmul.f32 %v1078, %v1102
        %v1115 = vmul.f32 %v1079, %v1112
        %v1117 = vperm.slane %v1032, 0
        %v1119 = vmul.f32 %v1113, %v1117
        %v1120 = vmul.f32 %v1114, %v1117
        %v1121 = vmul.f32 %v1115, %v1117
        %v1123 = vperm.slane %v1033, 0
        %v1125 = vadd.f32 %v1119, %v1123
        %v1126 = vadd.f32 %v1120, %v1123
        %v1127 = vadd.f32 %v1121, %v1123
        %v1128 = vpack.c.bf16 %v1125, %v1125
        %v1129 = vpack.c.bf16 %v1126, %v1126
        %v1130 = vpack.c.bf16 %v1127, %v1127
        %v1131 = vld [vmem:[%s11] sm:$0xf]
        %v1132 = vld [vmem:[%s11 + $0x4] sm:$0xf]
        %v1133 = vld [vmem:[%s11 + $0x8] sm:$0xf]
        %v1134 = vld [vmem:[%s11 + $0xc] sm:$0xf]
        %v1135 = vld [vmem:[%s11 + $0x10] sm:$0xf]
        %v1136 = vld [vmem:[%s11 + $0x14] sm:$0xf]
        %v1137 = vld [vmem:[%s11 + $0x18] sm:$0xf]
        %v1138 = vld [vmem:[%s11 + $0x1c] sm:$0xf]
        %v1139 = vld [vmem:[%s11 + $0x20] sm:$0xf]
        %v1140 = vld [vmem:[%s11 + $0x24] sm:$0xf]
        %v1141 = vld [vmem:[%s11 + $0x28] sm:$0xf]
        %v1142 = vld [vmem:[%s11 + $0x2c] sm:$0xf]
        %v1143 = vld [vmem:[%s12] sm:$0x1]
        %v1147 = vunpack.c.l.b16 %v1128
        %v1148 = vunpack.c.l.b16 %v1129
        %v1149 = vunpack.c.l.b16 %v1130
        %v1150 = vpack.c.b16 %v1148, %v1147
        %v1151 = vpack.c.b16 %v1149, %v1149
        %vm1152 = vsmask.f32 256
        %v1154 = vshrl.u32 %v1150, 16
        %v1156 = vrot.slane %v1154, 7
        %v1157 = vshll.u32 %v1150, 16
        %v1159 = vor.u32 %v1156, %v1157
        %v1161 = vshrl.u32 %v1151, 16
        %v1163 = vrot.slane %v1161, 7
        %v1164 = vshll.u32 %v1151, 16
        %v1166 = vor.u32 %v1163, %v1164
        %v1167 = vsel %vm1152, %v1156, %v1166
        %vm1169 = vcmask 1040384
        %vm1170 = vmand %vm1169, %vm1152
        %v1171 = vsel %vm1170, 0, %v1159
        %vm1172 = vsmask.f32 7424
        %v1173 = vrot.slane %v1157, 1
        %v1174 = vor.u32 %v1154, %v1173
        %v1175 = vrot.slane %v1164, 1
        %v1176 = vsel %vm1172, %v1174, %v1175
        %v1177 = vor.u32 %v1161, %v1175
        %vm1179 = vcmask 1043456
        %vm1180 = vsmask.f32 3328
        %vm1181 = vmand %vm1179, %vm1180
        %v1182 = vsel %vm1181, %v1177, 0
        %1183 = vrot.lane.b32.xlu0 %v1150, 32
        %v1184 = vpop.permute.xlu0 %1183
        %1185 = vrot.lane.b32.xlu0 %v1151, 32
        %v1186 = vpop.permute.xlu0 %1185
        %1188 = vrot.lane.b32.xlu0 %v1176, 64
        %v1189 = vpop.permute.xlu0 %1188
        %1190 = vrot.lane.b32.xlu0 %v1182, 64
        %v1191 = vpop.permute.xlu0 %1190
        %v1194 = vsel %vm648, %v1171, %v1184
        %v1197 = vsel %vm648, %v1167, %v1186
        %vm1198 = vcmask 523264
        %v1200 = vsel %vm1198, %v1194, %v1189
        %v1202 = vsel %vm1198, %v1197, %v1191
        %v1204 = vperm.slane %v1143, 0
        %v1218 = vunpack.c.l.b16 %v1131
        %v1219 = vunpack.c.l.b16 %v1132
        %v1220 = vunpack.c.l.b16 %v1133
        %v1221 = vunpack.c.l.b16 %v1134
        %v1222 = vunpack.c.l.b16 %v1135
        %v1223 = vunpack.c.l.b16 %v1136
        %v1224 = vunpack.c.l.b16 %v1137
        %v1225 = vunpack.c.l.b16 %v1138
        %v1226 = vunpack.c.l.b16 %v1139
        %v1227 = vunpack.c.l.b16 %v1140
        %v1228 = vunpack.c.l.b16 %v1141
        %v1229 = vunpack.c.l.b16 %v1142
        %v1230 = vpack.c.b16 %v1219, %v1218
        %v1231 = vpack.c.b16 %v1221, %v1220
        %v1232 = vpack.c.b16 %v1223, %v1222
        %v1233 = vpack.c.b16 %v1225, %v1224
        %v1234 = vpack.c.b16 %v1227, %v1226
        %v1235 = vpack.c.b16 %v1229, %v1228
        %vm1242 = vcmask 785408
        %v1243 = vsel %vm1242, %v1200, 0
        %v1245 = vsel %vm1242, %v1202, 0
        %1247 = vmatpush.bf16.msra.mxu0 0
        %1248 = vmatpush.bf16.msra.mxu0 0
        %1249 = vmatpush.bf16.msra.mxu0 %v1235
        %1250 = vmatpush.bf16.msra.mxu0 %v1234
        %1251 = vmatpush.bf16.msra.mxu0 %v1233
        %1252 = vmatpush.bf16.msra.mxu0 %v1232
        %1253 = vmatpush.bf16.msra.mxu0 %v1231
        %1254 = vmatpush.bf16.msra.mxu0 %v1230
        %1255 = vmatmul.bf16.gmra.mxu0 %v1243
        %v1256 = vpop.f32.mrf.mxu0
        %v1257 = vadd.f32 %v1204, %v1256
        %v1258 = vpop.f32.mrf.mxu0
        %v1259 = vadd.f32 %v1204, %v1258
        %1260 = vmatmul.bf16.gmra.mxu0 %v1245
        %v1261 = vpop.f32.mrf.mxu0
        %v1262 = vadd.f32 %v1204, %v1261
        %v1263 = vpop.f32.mrf.mxu0
        %1264 = vdwg.mxu0
        %v1265 = vmax.f32 %v1257, 0.0
        %v1266 = vmax.f32 %v1259, 0.0
        %v1267 = vmax.f32 %v1262, 0.0
        %v1268 = vpack.c.bf16 %v1265, %v1265
        %v1269 = vpack.c.bf16 %v1266, %v1266
        %v1270 = vpack.c.bf16 %v1267, %v1267
        %v1271 = vld [vmem:[%s13] sm:$0xf]
        %v1272 = vld [vmem:[%s13 + $0x4] sm:$0xf]
        %v1273 = vld [vmem:[%s13 + $0x8] sm:$0xf]
        %v1274 = vld [vmem:[%s13 + $0xc] sm:$0xf]
        %v1275 = vld [vmem:[%s13 + $0x10] sm:$0xf]
        %v1276 = vld [vmem:[%s13 + $0x14] sm:$0xf]
        %v1277 = vld [vmem:[%s13 + $0x18] sm:$0xf]
        %v1278 = vld [vmem:[%s13 + $0x1c] sm:$0xf]
        %v1279 = vld [vmem:[%s13 + $0x20] sm:$0xf]
        %v1280 = vld [vmem:[%s13 + $0x24] sm:$0xf]
        %v1281 = vld [vmem:[%s13 + $0x28] sm:$0xf]
        %v1282 = vld [vmem:[%s13 + $0x2c] sm:$0xf]
        %v1283 = vld [vmem:[%s13 + $0x30] sm:$0xf]
        %v1284 = vld [vmem:[%s13 + $0x34] sm:$0xf]
        %v1285 = vld [vmem:[%s13 + $0x38] sm:$0xf]
        %v1286 = vld [vmem:[%s13 + $0x3c] sm:$0xf]
        %v1287 = vld [vmem:[%s13 + $0x40] sm:$0xf]
        %v1288 = vld [vmem:[%s13 + $0x44] sm:$0xf]
        %v1289 = vld [vmem:[%s13 + $0x48] sm:$0xf]
        %v1290 = vld [vmem:[%s13 + $0x4c] sm:$0xf]
        %v1291 = vld [vmem:[%s13 + $0x50] sm:$0xf]
        %v1292 = vld [vmem:[%s13 + $0x54] sm:$0xf]
        %v1293 = vld [vmem:[%s13 + $0x58] sm:$0xf]
        %v1294 = vld [vmem:[%s13 + $0x5c] sm:$0xf]
        %v1295 = vld [vmem:[%s14] sm:$0x1]
        %v1299 = vunpack.c.l.b16 %v1268
        %v1300 = vunpack.c.l.b16 %v1269
        %v1301 = vunpack.c.l.b16 %v1270
        %v1302 = vpack.c.b16 %v1300, %v1299
        %v1303 = vpack.c.b16 %v1301, %v1301
        %v1305 = vshrl.u32 %v1302, 16
        %v1307 = vrot.slane %v1305, 7
        %v1308 = vshll.u32 %v1302, 16
        %v1310 = vor.u32 %v1307, %v1308
        %v1312 = vshrl.u32 %v1303, 16
        %v1314 = vrot.slane %v1312, 7
        %v1315 = vshll.u32 %v1303, 16
        %v1317 = vor.u32 %v1314, %v1315
        %v1318 = vsel %vm1152, %v1307, %v1317
        %v1320 = vsel %vm1170, 0, %v1310
        %v1321 = vrot.slane %v1308, 1
        %v1322 = vor.u32 %v1305, %v1321
        %v1323 = vrot.slane %v1315, 1
        %v1324 = vsel %vm1172, %v1322, %v1323
        %v1325 = vor.u32 %v1312, %v1323
        %v1327 = vsel %vm1181, %v1325, 0
        %1328 = vrot.lane.b32.xlu0 %v1302, 64
        %v1329 = vpop.permute.xlu0 %1328
        %1330 = vrot.lane.b32.xlu0 %v1303, 64
        %v1331 = vpop.permute.xlu0 %1330
        %v1334 = vsel %vm1198, %v1320, %v1329
        %v1338 = vsel %vm1198, %v1318, %v1331
        %v1341 = vperm.slane %v1295, 0
        %v1367 = vunpack.c.l.b16 %v1271
        %v1368 = vunpack.c.l.b16 %v1272
        %v1369 = vunpack.c.l.b16 %v1273
        %v1370 = vunpack.c.l.b16 %v1274
        %v1371 = vunpack.c.l.b16 %v1275
        %v1372 = vunpack.c.l.b16 %v1276
        %v1373 = vunpack.c.l.b16 %v1277
        %v1374 = vunpack.c.l.b16 %v1278
        %v1375 = vunpack.c.l.b16 %v1279
        %v1376 = vunpack.c.l.b16 %v1280
        %v1377 = vunpack.c.l.b16 %v1281
        %v1378 = vunpack.c.l.b16 %v1282
        %v1379 = vunpack.c.l.b16 %v1283
        %v1380 = vunpack.c.l.b16 %v1284
        %v1381 = vunpack.c.l.b16 %v1285
        %v1382 = vunpack.c.l.b16 %v1286
        %v1383 = vunpack.c.l.b16 %v1287
        %v1384 = vunpack.c.l.b16 %v1288
        %v1385 = vunpack.c.l.b16 %v1289
        %v1386 = vunpack.c.l.b16 %v1290
        %v1387 = vunpack.c.l.b16 %v1291
        %v1388 = vunpack.c.l.b16 %v1292
        %v1389 = vunpack.c.l.b16 %v1293
        %v1390 = vunpack.c.l.b16 %v1294
        %v1391 = vpack.c.b16 %v1368, %v1367
        %v1392 = vpack.c.b16 %v1370, %v1369
        %v1393 = vpack.c.b16 %v1372, %v1371
        %v1394 = vpack.c.b16 %v1374, %v1373
        %v1395 = vpack.c.b16 %v1376, %v1375
        %v1396 = vpack.c.b16 %v1378, %v1377
        %v1397 = vpack.c.b16 %v1380, %v1379
        %v1398 = vpack.c.b16 %v1382, %v1381
        %v1399 = vpack.c.b16 %v1384, %v1383
        %v1400 = vpack.c.b16 %v1386, %v1385
        %v1401 = vpack.c.b16 %v1388, %v1387
        %v1402 = vpack.c.b16 %v1390, %v1389
        %v1416 = vsel %vm1198, %v1324, 0
        %v1419 = vsel %vm1198, %v1327, 0
        %1421 = vmatpush.bf16.msra.mxu0 %v1398
        %1422 = vmatpush.bf16.msra.mxu0 %v1397
        %1423 = vmatpush.bf16.msra.mxu0 %v1396
        %1424 = vmatpush.bf16.msra.mxu0 %v1395
        %1425 = vmatpush.bf16.msra.mxu0 %v1394
        %1426 = vmatpush.bf16.msra.mxu0 %v1393
        %1427 = vmatpush.bf16.msra.mxu0 %v1392
        %1428 = vmatpush.bf16.msra.mxu0 %v1391
        %1429 = vmatmul.bf16.gmra.mxu0 %v1334
        %v1430 = vpop.f32.mrf.mxu0
        %v1431 = vadd.f32 %v1341, %v1430
        %v1432 = vpop.f32.mrf.mxu0
        %v1433 = vadd.f32 %v1341, %v1432
        %1434 = vmatmul.bf16.gmra.mxu0 %v1338
        %v1435 = vpop.f32.mrf.mxu0
        %v1436 = vadd.f32 %v1341, %v1435
        %v1437 = vpop.f32.mrf.mxu0
        %1438 = vdwg.mxu0
        %1439 = vmatpush.bf16.msra.mxu0 0
        %1440 = vmatpush.bf16.msra.mxu0 0
        %1441 = vmatpush.bf16.msra.mxu0 0
        %1442 = vmatpush.bf16.msra.mxu0 0
        %1443 = vmatpush.bf16.msra.mxu0 %v1402
        %1444 = vmatpush.bf16.msra.mxu0 %v1401
        %1445 = vmatpush.bf16.msra.mxu0 %v1400
        %1446 = vmatpush.bf16.msra.mxu0 %v1399
        %1447 = vmatmul.bf16.gmra.mxu0 %v1416
        %v1448 = vpop.f32.mrf.mxu0
        %v1449 = vadd.f32 %v1431, %v1448
        %v1450 = vpop.f32.mrf.mxu0
        %v1451 = vadd.f32 %v1433, %v1450
        %1452 = vmatmul.bf16.gmra.mxu0 %v1419
        %v1453 = vpop.f32.mrf.mxu0
        %v1454 = vadd.f32 %v1436, %v1453
        %v1455 = vpop.f32.mrf.mxu0
        %1456 = vdwg.mxu0
        %v1457 = vld [vmem:[%s15] sm:$0x1]
        %v1458 = vld [vmem:[%s16] sm:$0x1]
        %v1459 = vadd.f32 %v1125, %v1449
        %v1460 = vadd.f32 %v1126, %v1451
        %v1461 = vadd.f32 %v1127, %v1454
        %v1462 = vsel %vm648, %v1459, 0.0
        %1463 = vadd.xlane.f32.xlu0 %v1462
        %v1464 = vpop.xlane.xlu0 %1463
        %v1465 = vsel %vm648, %v1460, 0.0
        %1466 = vadd.xlane.f32.xlu0 %v1465
        %v1467 = vpop.xlane.xlu0 %1466
        %v1468 = vsel %vm648, %v1461, 0.0
        %1469 = vadd.xlane.f32.xlu0 %v1468
        %v1470 = vpop.xlane.xlu0 %1469
        %v1471 = vmul.f32 %v1464, %v1052
        %v1472 = vmul.f32 %v1467, %v1052
        %v1473 = vmul.f32 %v1470, %v1052
        %v1474 = vmul.f32 %v1459, %v1459
        %v1475 = vmul.f32 %v1460, %v1460
        %v1476 = vmul.f32 %v1461, %v1461
        %v1477 = vsel %vm648, %v1474, 0.0
        %1478 = vadd.xlane.f32.xlu0 %v1477
        %v1479 = vpop.xlane.xlu0 %1478
        %v1480 = vsel %vm648, %v1475, 0.0
        %1481 = vadd.xlane.f32.xlu0 %v1480
        %v1482 = vpop.xlane.xlu0 %1481
        %v1483 = vsel %vm648, %v1476, 0.0
        %1484 = vadd.xlane.f32.xlu0 %v1483
        %v1485 = vpop.xlane.xlu0 %1484
        %v1486 = vmul.f32 %v1479, %v1052
        %v1487 = vmul.f32 %v1482, %v1052
        %v1488 = vmul.f32 %v1485, %v1052
        %v1489 = vmul.f32 %v1471, %v1471
        %v1490 = vmul.f32 %v1472, %v1472
        %v1491 = vmul.f32 %v1473, %v1473
        %v1492 = vsub.f32 %v1486, %v1489
        %v1493 = vsub.f32 %v1487, %v1490
        %v1494 = vsub.f32 %v1488, %v1491
        %v1495 = vsub.f32 %v1459, %v1471
        %v1496 = vsub.f32 %v1460, %v1472
        %v1497 = vsub.f32 %v1461, %v1473
        %v1498 = vadd.f32 %v1492, 1e-05
        %v1499 = vadd.f32 %v1493, 1e-05
        %v1500 = vadd.f32 %v1494, 1e-05
        %v1501 = vrsqrt.pop %v1498
        %v1502 = vmul.f32 %v1501, %v1498
        %v1503 = vmul.f32 %v1502, %v1501
        %v1504 = vmul.f32 0.5, %v1503
        %v1505 = vsub.f32 1.5, %v1504
        %v1506 = vmul.f32 %v1501, %v1505
        %vm1507 = vweird.f32 %v1498
        %vm1508 = vweird.f32 %v1501
        %vm1509 = vmor %vm1507, %vm1508
        %v1510 = vsel %vm1509, %v1501, %v1506
        %v1511 = vrsqrt.pop %v1499
        %v1512 = vmul.f32 %v1511, %v1499
        %v1513 = vmul.f32 %v1512, %v1511
        %v1514 = vmul.f32 0.5, %v1513
        %v1515 = vsub.f32 1.5, %v1514
        %v1516 = vmul.f32 %v1511, %v1515
        %vm1517 = vweird.f32 %v1499
        %vm1518 = vweird.f32 %v1511
        %vm1519 = vmor %vm1517, %vm1518
        %v1520 = vsel %vm1519, %v1511, %v1516
        %v1521 = vrsqrt.pop %v1500
        %v1522 = vmul.f32 %v1521, %v1500
        %v1523 = vmul.f32 %v1522, %v1521
        %v1524 = vmul.f32 0.5, %v1523
        %v1525 = vsub.f32 1.5, %v1524
        %v1526 = vmul.f32 %v1521, %v1525
        %vm1527 = vweird.f32 %v1500
        %vm1528 = vweird.f32 %v1521
        %vm1529 = vmor %vm1527, %vm1528
        %v1530 = vsel %vm1529, %v1521, %v1526
        %v1531 = vmul.f32 %v1495, %v1510
        %v1532 = vmul.f32 %v1496, %v1520
        %v1533 = vmul.f32 %v1497, %v1530
        %v1535 = vperm.slane %v1457, 0
        %v1537 = vmul.f32 %v1531, %v1535
        %v1538 = vmul.f32 %v1532, %v1535
        %v1539 = vmul.f32 %v1533, %v1535
        %v1541 = vperm.slane %v1458, 0
        %v1543 = vadd.f32 %v1537, %v1541
        %v1544 = vadd.f32 %v1538, %v1541
        %v1545 = vadd.f32 %v1539, %v1541
        %v1546 = vpack.c.bf16 %v1544, %v1543
        %v1547 = vpack.c.bf16 %v1545, %v1545
        %v1548 = vld [vmem:[%s17] sm:$0xf]
        %v1549 = vld [vmem:[%s17 + $0x4] sm:$0xf]
        %v1550 = vld [vmem:[%s17 + $0x8] sm:$0xf]
        %v1551 = vld [vmem:[%s17 + $0xc] sm:$0xf]
        %v1552 = vld [vmem:[%s18] sm:$0x1]
        %v1554 = vperm.slane %v1552, 0
        %v1560 = vunpack.c.l.b16 %v1548
        %v1561 = vunpack.c.l.b16 %v1549
        %v1562 = vunpack.c.l.b16 %v1550
        %v1563 = vunpack.c.l.b16 %v1551
        %v1564 = vpack.c.b16 %v1561, %v1560
        %v1565 = vpack.c.b16 %v1563, %v1562
        %v1569 = vsel %vm648, %v1546, 0
        %v1572 = vsel %vm648, %v1547, 0
        %1574 = vmatpush.bf16.msra.mxu0 0
        %1575 = vmatpush.bf16.msra.mxu0 0
        %1576 = vmatpush.bf16.msra.mxu0 0
        %1577 = vmatpush.bf16.msra.mxu0 0
        %1578 = vmatpush.bf16.msra.mxu0 0
        %1579 = vmatpush.bf16.msra.mxu0 0
        %1580 = vmatpush.bf16.msra.mxu0 %v1565
        %1581 = vmatpush.bf16.msra.mxu0 %v1564
        %1582 = vmatmul.bf16.gmra.mxu0 %v1569
        %v1583 = vpop.f32.mrf.mxu0
        %v1584 = vadd.f32 %v1554, %v1583
        %v1585 = vpop.f32.mrf.mxu0
        %v1586 = vadd.f32 %v1554, %v1585
        %1587 = vmatmul.bf16.gmra.mxu0 %v1572
        %v1588 = vpop.f32.mrf.mxu0
        %v1589 = vadd.f32 %v1554, %v1588
        %v1590 = vpop.f32.mrf.mxu0
        %1591 = vdwg.mxu0
        %1592 = vst [vmem:[%s595] sm:$0xff] %v1584
        %1593 = vst [vmem:[%s595 + $0x8] sm:$0xff] %v1586
        %1594 = vst [vmem:[%s595 + $0x10] sm:$0xff] %v1589
        %s1595 = sand.u32 %s445, 1
        %s1596 = scalar_lea.sflag [#allocation4], %s1595
        %s1597 = sand.u32 %s445, 1
        %s1598 = smul.addr %s1597, 24
        %s1599 = scalar_lea.vmem [#allocation3], %s1598
        // Predicated region
        $region97: #{fastspeech_forward.5} parent=95 // pred_check
          %p1600 = pneg %p455
        $region98: #{fastspeech_forward.5} parent=95 // pred_check_branch
          %1602 = sbr.rel (%p1600) target = $region100
        $region99: #{fastspeech_forward.5} parent=95 // pred_region
          %1604 = vsyncadd %s1596, 0
          %s1605 = smul.addr %s33, 3
          %s1606 = smul.addr %s1605, 8
          %s1607 = scalar_lea.hbm %s19, %s1606
          %s1608 = sshll.u32 %s1599, 4
          %s1609 = int_to_ptr.vmem [resolvable:$true] %s1608
          %s1610 = sshll.u32 %s1607, 4
          %s1611 = int_to_ptr.hbm [resolvable:$true] %s1610
          %1616 = dma.vmem_to_hbm [thread:$0]  %s1609, 384, %s1611, %s1596, 128, 128, 8
        $region100: #{fastspeech_forward.5} parent=95 // pred_fallthru
          _
      $region96: #{fastspeech_forward.5} parent=5 // pred_fallthru
        _
      %p1617 = scmp.le.s32.totalorder 2, %s28
      // Predicated region
      $region101: #{fastspeech_forward.5} parent=5 // pred_check
        %p1618 = pneg %p1617
      $region102: #{fastspeech_forward.5} parent=5 // pred_check_branch
        %1620 = sbr.rel (%p1618) target = $region104
      $region103: #{fastspeech_forward.5} parent=5 // pred_region
        %s1621 = ssub.s32 %s28, 2
        // Predicated region
        $region105: #{fastspeech_forward.5} parent=103 // pred_check
          %p1622 = pneg %p461
        $region106: #{fastspeech_forward.5} parent=103 // pred_check_branch
          %1624 = sbr.rel (%p1622) target = $region108
        $region107: #{fastspeech_forward.5} parent=103 // pred_region
          %s1625 = sand.u32 %s446, 1
          %s1626 = scalar_lea.sflag [#allocation4], %s1625
          %s1627 = sand.u32 %s446, 1
          %s1628 = smul.addr %s1627, 24
          %s1629 = scalar_lea.vmem [#allocation3], %s1628
          %1631 = dma.done %s1626, 384
        $region108: #{fastspeech_forward.5} parent=103 // pred_fallthru
          _
      $region104: #{fastspeech_forward.5} parent=5 // pred_fallthru
        _
    $region6: #{fastspeech_forward.5} parent=1 // loop_footer
      %s32 = sadd.s32 1, %s28
    $region7: #{fastspeech_forward.5} parent=1 // loop_footer_branch
      %27 = sbr.rel target = $region3
    $region8: #{fastspeech_forward.5} parent=1 // loop_exit
      _
    %1632 = vsyncpa [#allocation4], 1
    %s1633 = scalar_lea.sflag [#allocation4], 1
    %1634 = vsyncpa %s1633, 1

</llo_original>
